<compile_context>
chip_gen: v7x
topology: tpu7x:2x2x1
jax: 0.10.0
libtpu: 0.0.40
codegen_flags: <defaults>
</compile_context>

<pallas_src>
import jax
import jax.numpy as jnp
from jax import lax
from jax.experimental import pallas as pl
from jax.experimental.pallas import tpu as pltpu


def _round_up(x, m):
    return ((x + m - 1) // m) * m


def _relationship_kernel(idx_ref, lstm_ref, w1m_ref, w1c_ref, b1_ref,
                         w2_ref, b2_ref, w3t_ref, b3_ref, out_ref):
    bt, S, D = lstm_ref.shape

    attr_idx = idx_ref[0].astype(jnp.float32)          # (bt, S)
    sent_idx = idx_ref[1].astype(jnp.float32)          # (bt, S)

    # Fused contraction over S (S is small & static -> unrolled at trace time):
    # each lstm slab is read from VMEM once and consumed by two VPU FMAs; no
    # (bt, S, D) f32 temporaries are materialized.
    attr_x = jnp.zeros((bt, D), jnp.float32)
    sent_x = jnp.zeros((bt, D), jnp.float32)
    for s in range(S):
        slab = lstm_ref[:, s, :].astype(jnp.float32)   # (bt, D)
        attr_x = attr_x + attr_idx[:, s:s + 1] * slab
        sent_x = sent_x + sent_idx[:, s:s + 1] * slab

    # cosine similarity, PyTorch semantics: dot / (max(||a||,eps)*max(||b||,eps)),
    # eps = 1e-8  (max(sqrt(x), eps) == sqrt(max(x, eps^2))); rsqrt runs on EUP.
    dot = jnp.sum(attr_x * sent_x, axis=-1, keepdims=True)   # (bt, 1)
    n1s = jnp.sum(attr_x * attr_x, axis=-1, keepdims=True)
    n2s = jnp.sum(sent_x * sent_x, axis=-1, keepdims=True)
    eps2 = 1e-16
    cos = dot * lax.rsqrt(jnp.maximum(n1s, eps2)) * lax.rsqrt(jnp.maximum(n2s, eps2))

    prod = attr_x * sent_x                                   # (bt, D)

    # mlp1 on concat([prod, cos], -1): split W1 rows instead of concatenating,
    # i.e. [prod, cos] @ W1 == prod @ W1[:D] + cos * W1[D:].
    h1 = (jnp.dot(prod, w1m_ref[...], preferred_element_type=jnp.float32)
          + cos * w1c_ref[...] + b1_ref[...])
    h1 = jnp.maximum(h1, 0.0)
    # TODO(synk): nn.Dropout(0.3) treated as identity (eval-mode semantics).

    h2 = jnp.dot(h1, w2_ref[...], preferred_element_type=jnp.float32) + b2_ref[...]
    h2 = jnp.maximum(h2, 0.0)                                # (bt, 25)

    # Final layer emitted lane-dense: (1,25) x (bt,25)^T -> (1, bt) row -> one
    # unmasked store across a 128-multiple of lanes.
    out = lax.dot_general(
        w3t_ref[...], h2,
        dimension_numbers=(((1,), (1,)), ((), ())),
        preferred_element_type=jnp.float32) + b3_ref[...]    # (1, bt)
    out_ref[0] = out


def _vmem_bytes_estimate(block_b, S, D):
    """Honest per-tile VMEM estimate: layout padding, f32 temps, double buffers."""
    lane = lambda n: _round_up(max(n, 1), 128)
    sub = lambda n: _round_up(max(n, 1), 8)
    lstm_tile = block_b * sub(S) * lane(D) * 4               # f32 input tile (padded layout)
    idx_tile = 2 * sub(block_b) * lane(S) * 4
    out_tile = 8 * lane(block_b) * 4
    pipelined = 2 * (lstm_tile + idx_tile + out_tile)        # double-buffered streams
    # In-kernel f32 values: attr/sent accumulators, slab, prod, h1, h2, slack.
    temps = 7 * sub(block_b) * max(lane(D), 128) * 4
    weights = 2 * (sub(D) + 6 * 8) * 128 * 4
    return pipelined + temps + weights + (1 << 20)           # +1 MiB slack


def find_relationship_forward(lstm_x, attr_index, sent_index, params, *, block_b=None):
    """lstm_x: (B,S,D) f32; attr_index/sent_index: (B,1,S) -> (B,1,1) f32."""
    B, S, D = lstm_x.shape
    w1, b1, w2, b2, w3, b3 = params

    # Generation-aware VMEM budget: 3/4 of physical (v7x 64 MiB vs v5e/v6e 128 MiB).
    try:
        vmem_cap = int(getattr(pltpu.get_tpu_info(), "vmem_capacity_bytes", 0)) or (64 << 20)
    except Exception:
        vmem_cap = 64 << 20   # conservative fallback (v7x-sized)
    vmem_budget = (3 * vmem_cap) // 4

    if block_b is None:
        if B <= 128:
            block_b = 128
        else:
            # Large lane-dense tiles (multiples of 128) amortize the ~0.35us/step
            # pipeline overhead; keep >= 2 grid steps so the "parallel" batch axis
            # can be split across v7x's two TensorCores.
            block_b = min(1024, _round_up(pl.cdiv(B, 2), 128))
        while block_b > 128 and _vmem_bytes_estimate(block_b, S, D) > vmem_budget:
            block_b = max(128, ((block_b // 2) // 128) * 128)
    else:
        block_b = max(128, _round_up(block_b, 128))
    nt = pl.cdiv(B, block_b)

    # Tiny stacked (2, B, S) index stream: one DMA per tile instead of two.
    idx = jnp.stack([attr_index[:, 0, :], sent_index[:, 0, :]], axis=0).astype(jnp.float32)
    lstm_x = lstm_x.astype(jnp.float32)
    # No wrapper-side pad / dtype cast of the dominant lstm stream: f32 is
    # streamed straight from HBM; the ragged batch tail is handled as Pallas
    # partial edge blocks (tail rows produce garbage that is sliced off below).

    w1m, w1c = w1[:D, :], w1[D:, :]          # (D, 50), (1, 50)
    w3t = w3.T                               # (1, 25)

    flops = int(B) * (4 * S * D + 8 * D + 2 * D * 50 + 2 * 50 * 25 + 2 * 25 + 16)
    bytes_accessed = int(B) * (4 * S * D + 8 * S + 4) + 4 * (D * 50 + 50 + 50 * 25 + 25 + 25 + 1)

    out3d = pl.pallas_call(
        _relationship_kernel,
        out_shape=jax.ShapeDtypeStruct((nt, 1, block_b), jnp.float32),
        grid=(nt,),
        in_specs=[
            pl.BlockSpec((2, block_b, S), lambda t: (0, t, 0)),   # stacked attr/sent idx
            pl.BlockSpec((block_b, S, D), lambda t: (t, 0, 0)),   # lstm_x (f32, streamed once)
            pl.BlockSpec((D, 50), lambda t: (0, 0)),              # W1[:D]
            pl.BlockSpec((1, 50), lambda t: (0, 0)),              # W1[D:]
            pl.BlockSpec((1, 50), lambda t: (0, 0)),              # b1
            pl.BlockSpec((50, 25), lambda t: (0, 0)),             # W2
            pl.BlockSpec((1, 25), lambda t: (0, 0)),              # b2
            pl.BlockSpec((1, 25), lambda t: (0, 0)),              # W3^T
            pl.BlockSpec((1, 1), lambda t: (0, 0)),               # b3
        ],
        out_specs=pl.BlockSpec((1, 1, block_b), lambda t: (t, 0, 0)),
        compiler_params=pltpu.CompilerParams(
            dimension_semantics=("parallel",),
            vmem_limit_bytes=int(vmem_budget),
        ),
        cost_estimate=pl.CostEstimate(flops=flops, transcendentals=2 * int(B),
                                      bytes_accessed=bytes_accessed),
    )(idx, lstm_x, w1m, w1c, b1, w2, b2, w3t, b3)

    return out3d.reshape(-1)[:B].reshape(B, 1, 1)


if __name__ == "__main__":
    key = jax.random.PRNGKey(0)
    B, S, vocab, embed_dim, hidden = 200, 8, 20, 16, 16   # B not multiple of 128 -> ragged tail tile
    D = 2 * hidden                                        # 2 * ner.lstm2.hidden_size
    keys = jax.random.split(key, 12)

    # deterministic "pretrained" embedding matrix + token ids
    embedding_matrix = jax.random.normal(keys[0], (vocab, embed_dim), jnp.float32)
    x = jax.random.randint(keys[1], (B, S), 0, vocab)
    attr_index = jax.random.uniform(keys[2], (B, 1, S), jnp.float32)
    sent_index = jax.random.uniform(keys[3], (B, 1, S), jnp.float32)

    # TODO(synk): external ner_model (BiLSTM) not defined in source; deterministic
    # surrogate producing a (B, S, 2*hidden) sequence encoding (plain-JAX glue).
    w_ner = jax.random.normal(keys[4], (embed_dim, D), jnp.float32) * 0.1
    emb = embedding_matrix[x]                # (B, S, embed_dim)
    lstm_x = jnp.tanh(emb @ w_ner)           # (B, S, D)

    def linear_init(k, fan_in, shape):
        bound = 1.0 / float(fan_in) ** 0.5
        return jax.random.uniform(k, shape, jnp.float32, -bound, bound)

    w1 = linear_init(keys[5], D + 1, (D + 1, 50))
    b1 = linear_init(keys[6], D + 1, (1, 50))
    w2 = linear_init(keys[7], 50, (50, 25))
    b2 = linear_init(keys[8], 50, (1, 25))
    w3 = linear_init(keys[9], 25, (25, 1))
    b3 = linear_init(keys[10], 25, (1, 1))
    params = (w1, b1, w2, b2, w3, b3)

    out = find_relationship_forward(lstm_x, attr_index, sent_index, params)
    out = jax.block_until_ready(out)

    # pure-JAX f32 reference (no input quantization; HIGHEST-precision matmuls).
    hi = jax.lax.Precision.HIGHEST
    attr_x = jnp.einsum("bks,bsd->bkd", attr_index, lstm_x, precision=hi)
    sent_x = jnp.einsum("bks,bsd->bkd", sent_index, lstm_x, precision=hi)
    dot = jnp.sum(attr_x * sent_x, -1, keepdims=True)
    n1 = jnp.linalg.norm(attr_x, axis=-1, keepdims=True)
    n2 = jnp.linalg.norm(sent_x, axis=-1, keepdims=True)
    cos = dot / (jnp.maximum(n1, 1e-8) * jnp.maximum(n2, 1e-8))   # PyTorch eps semantics
    inp = jnp.concatenate([attr_x * sent_x, cos], axis=-1)
    h1 = jax.nn.relu(jnp.einsum("bki,ij->bkj", inp, w1, precision=hi) + b1[0])
    h2 = jax.nn.relu(jnp.einsum("bki,ij->bkj", h1, w2, precision=hi) + b2[0])
    ref = jnp.einsum("bki,ij->bkj", h2, w3, precision=hi) + b3[0]

    assert out.shape == (B, 1, 1)
    # Tolerance leaves headroom for MXU multiply-precision differences across
    # TPU generations (accumulation is always f32).
    assert jnp.allclose(out, ref, rtol=5e-3, atol=5e-3), float(jnp.max(jnp.abs(out - ref)))

    print("KERNEL_OK")
</pallas_src>

<mosaic_0001>
module attributes {stable_mosaic.version = 11 : i64} {
  func.func @_relationship_kernel(%arg0: i32, %arg1: memref<2x128x8xf32, #tpu.memory_space<vmem>>, %arg2: memref<128x8x32xf32, #tpu.memory_space<vmem>>, %arg3: memref<32x50xf32, #tpu.memory_space<vmem>>, %arg4: memref<1x50xf32, #tpu.memory_space<vmem>>, %arg5: memref<1x50xf32, #tpu.memory_space<vmem>>, %arg6: memref<50x25xf32, #tpu.memory_space<vmem>>, %arg7: memref<1x25xf32, #tpu.memory_space<vmem>>, %arg8: memref<1x25xf32, #tpu.memory_space<vmem>>, %arg9: memref<1x1xf32, #tpu.memory_space<vmem>>, %arg10: memref<1x1x128xf32, #tpu.memory_space<vmem>>) attributes {dimension_semantics = [#tpu.dimension_semantics<parallel>], iteration_bounds = array<i64: 2>, scalar_prefetch = 0 : i64, scratch_operands = 0 : i64, tpu.core_type = #tpu.core_type<tc>, window_params = [{transform_indices = @transform_0, window_bounds = array<i64: 2, 128, 8>}, {transform_indices = @transform_1, window_bounds = array<i64: 128, 8, 32>}, {pipeline_mode = #tpu.pipeline_mode<synchronous>, transform_indices = @transform_2, window_bounds = array<i64: 32, 50>}, {pipeline_mode = #tpu.pipeline_mode<synchronous>, transform_indices = @transform_3, window_bounds = array<i64: 1, 50>}, {pipeline_mode = #tpu.pipeline_mode<synchronous>, transform_indices = @transform_4, window_bounds = array<i64: 1, 50>}, {pipeline_mode = #tpu.pipeline_mode<synchronous>, transform_indices = @transform_5, window_bounds = array<i64: 50, 25>}, {pipeline_mode = #tpu.pipeline_mode<synchronous>, transform_indices = @transform_6, window_bounds = array<i64: 1, 25>}, {pipeline_mode = #tpu.pipeline_mode<synchronous>, transform_indices = @transform_7, window_bounds = array<i64: 1, 25>}, {pipeline_mode = #tpu.pipeline_mode<synchronous>, transform_indices = @transform_8, window_bounds = array<i64: 1, 1>}, {transform_indices = @transform_9, window_bounds = array<i64: 1, 1, 128>}]} {
    %c0 = arith.constant 0 : index
    %c0_0 = arith.constant 0 : index
    %c0_1 = arith.constant 0 : index
    %0 = vector.load %arg1[%c0, %c0_0, %c0_1] : memref<2x128x8xf32, #tpu.memory_space<vmem>>, vector<1x128x8xf32>
    %1 = vector.shape_cast %0 : vector<1x128x8xf32> to vector<128x8xf32>
    %c1 = arith.constant 1 : index
    %c0_2 = arith.constant 0 : index
    %c0_3 = arith.constant 0 : index
    %2 = vector.load %arg1[%c1, %c0_2, %c0_3] : memref<2x128x8xf32, #tpu.memory_space<vmem>>, vector<1x128x8xf32>
    %3 = vector.shape_cast %2 : vector<1x128x8xf32> to vector<128x8xf32>
    %cst = arith.constant 0.000000e+00 : f32
    %4 = vector.broadcast %cst : f32 to vector<128x32xf32>
    %cst_4 = arith.constant 0.000000e+00 : f32
    %5 = vector.broadcast %cst_4 : f32 to vector<128x32xf32>
    %c0_5 = arith.constant 0 : index
    %c0_6 = arith.constant 0 : index
    %c0_7 = arith.constant 0 : index
    %6 = vector.load %arg2[%c0_5, %c0_6, %c0_7] : memref<128x8x32xf32, #tpu.memory_space<vmem>>, vector<128x1x32xf32>
    %7 = vector.shape_cast %6 : vector<128x1x32xf32> to vector<128x32xf32>
    %8 = vector.extract_strided_slice %1 {offsets = [0, 0], sizes = [128, 1], strides = [1, 1]} : vector<128x8xf32> to vector<128x1xf32>
    %9 = vector.broadcast %8 : vector<128x1xf32> to vector<128x32xf32>
    %10 = arith.mulf %9, %7 : vector<128x32xf32>
    %11 = arith.addf %4, %10 : vector<128x32xf32>
    %12 = vector.extract_strided_slice %3 {offsets = [0, 0], sizes = [128, 1], strides = [1, 1]} : vector<128x8xf32> to vector<128x1xf32>
    %13 = vector.broadcast %12 : vector<128x1xf32> to vector<128x32xf32>
    %14 = arith.mulf %13, %7 : vector<128x32xf32>
    %15 = arith.addf %5, %14 : vector<128x32xf32>
    %c0_8 = arith.constant 0 : index
    %c1_9 = arith.constant 1 : index
    %c0_10 = arith.constant 0 : index
    %16 = vector.load %arg2[%c0_8, %c1_9, %c0_10] : memref<128x8x32xf32, #tpu.memory_space<vmem>>, vector<128x1x32xf32>
    %17 = vector.shape_cast %16 : vector<128x1x32xf32> to vector<128x32xf32>
    %18 = vector.extract_strided_slice %1 {offsets = [0, 1], sizes = [128, 1], strides = [1, 1]} : vector<128x8xf32> to vector<128x1xf32>
    %19 = vector.broadcast %18 : vector<128x1xf32> to vector<128x32xf32>
    %20 = arith.mulf %19, %17 : vector<128x32xf32>
    %21 = arith.addf %11, %20 : vector<128x32xf32>
    %22 = vector.extract_strided_slice %3 {offsets = [0, 1], sizes = [128, 1], strides = [1, 1]} : vector<128x8xf32> to vector<128x1xf32>
    %23 = vector.broadcast %22 : vector<128x1xf32> to vector<128x32xf32>
    %24 = arith.mulf %23, %17 : vector<128x32xf32>
    %25 = arith.addf %15, %24 : vector<128x32xf32>
    %c0_11 = arith.constant 0 : index
    %c2 = arith.constant 2 : index
    %c0_12 = arith.constant 0 : index
    %26 = vector.load %arg2[%c0_11, %c2, %c0_12] : memref<128x8x32xf32, #tpu.memory_space<vmem>>, vector<128x1x32xf32>
    %27 = vector.shape_cast %26 : vector<128x1x32xf32> to vector<128x32xf32>
    %28 = vector.extract_strided_slice %1 {offsets = [0, 2], sizes = [128, 1], strides = [1, 1]} : vector<128x8xf32> to vector<128x1xf32>
    %29 = vector.broadcast %28 : vector<128x1xf32> to vector<128x32xf32>
    %30 = arith.mulf %29, %27 : vector<128x32xf32>
    %31 = arith.addf %21, %30 : vector<128x32xf32>
    %32 = vector.extract_strided_slice %3 {offsets = [0, 2], sizes = [128, 1], strides = [1, 1]} : vector<128x8xf32> to vector<128x1xf32>
    %33 = vector.broadcast %32 : vector<128x1xf32> to vector<128x32xf32>
    %34 = arith.mulf %33, %27 : vector<128x32xf32>
    %35 = arith.addf %25, %34 : vector<128x32xf32>
    %c0_13 = arith.constant 0 : index
    %c3 = arith.constant 3 : index
    %c0_14 = arith.constant 0 : index
    %36 = vector.load %arg2[%c0_13, %c3, %c0_14] : memref<128x8x32xf32, #tpu.memory_space<vmem>>, vector<128x1x32xf32>
    %37 = vector.shape_cast %36 : vector<128x1x32xf32> to vector<128x32xf32>
    %38 = vector.extract_strided_slice %1 {offsets = [0, 3], sizes = [128, 1], strides = [1, 1]} : vector<128x8xf32> to vector<128x1xf32>
    %39 = vector.broadcast %38 : vector<128x1xf32> to vector<128x32xf32>
    %40 = arith.mulf %39, %37 : vector<128x32xf32>
    %41 = arith.addf %31, %40 : vector<128x32xf32>
    %42 = vector.extract_strided_slice %3 {offsets = [0, 3], sizes = [128, 1], strides = [1, 1]} : vector<128x8xf32> to vector<128x1xf32>
    %43 = vector.broadcast %42 : vector<128x1xf32> to vector<128x32xf32>
    %44 = arith.mulf %43, %37 : vector<128x32xf32>
    %45 = arith.addf %35, %44 : vector<128x32xf32>
    %c0_15 = arith.constant 0 : index
    %c4 = arith.constant 4 : index
    %c0_16 = arith.constant 0 : index
    %46 = vector.load %arg2[%c0_15, %c4, %c0_16] : memref<128x8x32xf32, #tpu.memory_space<vmem>>, vector<128x1x32xf32>
    %47 = vector.shape_cast %46 : vector<128x1x32xf32> to vector<128x32xf32>
    %48 = vector.extract_strided_slice %1 {offsets = [0, 4], sizes = [128, 1], strides = [1, 1]} : vector<128x8xf32> to vector<128x1xf32>
    %49 = vector.broadcast %48 : vector<128x1xf32> to vector<128x32xf32>
    %50 = arith.mulf %49, %47 : vector<128x32xf32>
    %51 = arith.addf %41, %50 : vector<128x32xf32>
    %52 = vector.extract_strided_slice %3 {offsets = [0, 4], sizes = [128, 1], strides = [1, 1]} : vector<128x8xf32> to vector<128x1xf32>
    %53 = vector.broadcast %52 : vector<128x1xf32> to vector<128x32xf32>
    %54 = arith.mulf %53, %47 : vector<128x32xf32>
    %55 = arith.addf %45, %54 : vector<128x32xf32>
    %c0_17 = arith.constant 0 : index
    %c5 = arith.constant 5 : index
    %c0_18 = arith.constant 0 : index
    %56 = vector.load %arg2[%c0_17, %c5, %c0_18] : memref<128x8x32xf32, #tpu.memory_space<vmem>>, vector<128x1x32xf32>
    %57 = vector.shape_cast %56 : vector<128x1x32xf32> to vector<128x32xf32>
    %58 = vector.extract_strided_slice %1 {offsets = [0, 5], sizes = [128, 1], strides = [1, 1]} : vector<128x8xf32> to vector<128x1xf32>
    %59 = vector.broadcast %58 : vector<128x1xf32> to vector<128x32xf32>
    %60 = arith.mulf %59, %57 : vector<128x32xf32>
    %61 = arith.addf %51, %60 : vector<128x32xf32>
    %62 = vector.extract_strided_slice %3 {offsets = [0, 5], sizes = [128, 1], strides = [1, 1]} : vector<128x8xf32> to vector<128x1xf32>
    %63 = vector.broadcast %62 : vector<128x1xf32> to vector<128x32xf32>
    %64 = arith.mulf %63, %57 : vector<128x32xf32>
    %65 = arith.addf %55, %64 : vector<128x32xf32>
    %c0_19 = arith.constant 0 : index
    %c6 = arith.constant 6 : index
    %c0_20 = arith.constant 0 : index
    %66 = vector.load %arg2[%c0_19, %c6, %c0_20] : memref<128x8x32xf32, #tpu.memory_space<vmem>>, vector<128x1x32xf32>
    %67 = vector.shape_cast %66 : vector<128x1x32xf32> to vector<128x32xf32>
    %68 = vector.extract_strided_slice %1 {offsets = [0, 6], sizes = [128, 1], strides = [1, 1]} : vector<128x8xf32> to vector<128x1xf32>
    %69 = vector.broadcast %68 : vector<128x1xf32> to vector<128x32xf32>
    %70 = arith.mulf %69, %67 : vector<128x32xf32>
    %71 = arith.addf %61, %70 : vector<128x32xf32>
    %72 = vector.extract_strided_slice %3 {offsets = [0, 6], sizes = [128, 1], strides = [1, 1]} : vector<128x8xf32> to vector<128x1xf32>
    %73 = vector.broadcast %72 : vector<128x1xf32> to vector<128x32xf32>
    %74 = arith.mulf %73, %67 : vector<128x32xf32>
    %75 = arith.addf %65, %74 : vector<128x32xf32>
    %c0_21 = arith.constant 0 : index
    %c7 = arith.constant 7 : index
    %c0_22 = arith.constant 0 : index
    %76 = vector.load %arg2[%c0_21, %c7, %c0_22] : memref<128x8x32xf32, #tpu.memory_space<vmem>>, vector<128x1x32xf32>
    %77 = vector.shape_cast %76 : vector<128x1x32xf32> to vector<128x32xf32>
    %78 = vector.extract_strided_slice %1 {offsets = [0, 7], sizes = [128, 1], strides = [1, 1]} : vector<128x8xf32> to vector<128x1xf32>
    %79 = vector.broadcast %78 : vector<128x1xf32> to vector<128x32xf32>
    %80 = arith.mulf %79, %77 : vector<128x32xf32>
    %81 = arith.addf %71, %80 : vector<128x32xf32>
    %82 = vector.extract_strided_slice %3 {offsets = [0, 7], sizes = [128, 1], strides = [1, 1]} : vector<128x8xf32> to vector<128x1xf32>
    %83 = vector.broadcast %82 : vector<128x1xf32> to vector<128x32xf32>
    %84 = arith.mulf %83, %77 : vector<128x32xf32>
    %85 = arith.addf %75, %84 : vector<128x32xf32>
    %86 = arith.mulf %81, %85 : vector<128x32xf32>
    %cst_23 = arith.constant dense<0.000000e+00> : vector<128xf32>
    %87 = vector.multi_reduction <add>, %86, %cst_23 [1] : vector<128x32xf32> to vector<128xf32>
    %88 = vector.shape_cast %87 : vector<128xf32> to vector<128x1xf32>
    %89 = arith.mulf %81, %81 : vector<128x32xf32>
    %cst_24 = arith.constant dense<0.000000e+00> : vector<128xf32>
    %90 = vector.multi_reduction <add>, %89, %cst_24 [1] : vector<128x32xf32> to vector<128xf32>
    %91 = vector.shape_cast %90 : vector<128xf32> to vector<128x1xf32>
    %92 = arith.mulf %85, %85 : vector<128x32xf32>
    %cst_25 = arith.constant dense<0.000000e+00> : vector<128xf32>
    %93 = vector.multi_reduction <add>, %92, %cst_25 [1] : vector<128x32xf32> to vector<128xf32>
    %94 = vector.shape_cast %93 : vector<128xf32> to vector<128x1xf32>
    %cst_26 = arith.constant 1.000000e-16 : f32
    %95 = vector.broadcast %cst_26 : f32 to vector<128x1xf32>
    %96 = arith.maximumf %91, %95 : vector<128x1xf32>
    %97 = math.rsqrt %96 : vector<128x1xf32>
    %98 = arith.mulf %88, %97 : vector<128x1xf32>
    %cst_27 = arith.constant 1.000000e-16 : f32
    %99 = vector.broadcast %cst_27 : f32 to vector<128x1xf32>
    %100 = arith.maximumf %94, %99 : vector<128x1xf32>
    %101 = math.rsqrt %100 : vector<128x1xf32>
    %102 = arith.mulf %98, %101 : vector<128x1xf32>
    %103 = arith.mulf %81, %85 : vector<128x32xf32>
    %c0_28 = arith.constant 0 : index
    %c0_29 = arith.constant 0 : index
    %104 = vector.load %arg3[%c0_28, %c0_29] : memref<32x50xf32, #tpu.memory_space<vmem>>, vector<32x50xf32>
    %cst_30 = arith.constant dense<0.000000e+00> : vector<128x50xf32>
    %105 = tpu.matmul %103, %104, %cst_30 {dimension_numbers = #tpu.dot_dimension_numbers<[1], [0], [0], [1], [0, 0, 1, 1], [], []>} : vector<128x32xf32>, vector<32x50xf32>, vector<128x50xf32> -> vector<128x50xf32>
    %c0_31 = arith.constant 0 : index
    %c0_32 = arith.constant 0 : index
    %106 = vector.load %arg4[%c0_31, %c0_32] : memref<1x50xf32, #tpu.memory_space<vmem>>, vector<1x50xf32>
    %107 = vector.broadcast %102 : vector<128x1xf32> to vector<128x50xf32>
    %108 = vector.broadcast %106 : vector<1x50xf32> to vector<128x50xf32>
    %109 = arith.mulf %107, %108 : vector<128x50xf32>
    %110 = arith.addf %105, %109 : vector<128x50xf32>
    %c0_33 = arith.constant 0 : index
    %c0_34 = arith.constant 0 : index
    %111 = vector.load %arg5[%c0_33, %c0_34] : memref<1x50xf32, #tpu.memory_space<vmem>>, vector<1x50xf32>
    %112 = vector.broadcast %111 : vector<1x50xf32> to vector<128x50xf32>
    %113 = arith.addf %110, %112 : vector<128x50xf32>
    %cst_35 = arith.constant 0.000000e+00 : f32
    %114 = vector.broadcast %cst_35 : f32 to vector<128x50xf32>
    %115 = arith.maximumf %113, %114 : vector<128x50xf32>
    %c0_36 = arith.constant 0 : index
    %c0_37 = arith.constant 0 : index
    %116 = vector.load %arg6[%c0_36, %c0_37] : memref<50x25xf32, #tpu.memory_space<vmem>>, vector<50x25xf32>
    %cst_38 = arith.constant dense<0.000000e+00> : vector<128x25xf32>
    %117 = tpu.matmul %115, %116, %cst_38 {dimension_numbers = #tpu.dot_dimension_numbers<[1], [0], [0], [1], [0, 0, 1, 1], [], []>} : vector<128x50xf32>, vector<50x25xf32>, vector<128x25xf32> -> vector<128x25xf32>
    %c0_39 = arith.constant 0 : index
    %c0_40 = arith.constant 0 : index
    %118 = vector.load %arg7[%c0_39, %c0_40] : memref<1x25xf32, #tpu.memory_space<vmem>>, vector<1x25xf32>
    %119 = vector.broadcast %118 : vector<1x25xf32> to vector<128x25xf32>
    %120 = arith.addf %117, %119 : vector<128x25xf32>
    %cst_41 = arith.constant 0.000000e+00 : f32
    %121 = vector.broadcast %cst_41 : f32 to vector<128x25xf32>
    %122 = arith.maximumf %120, %121 : vector<128x25xf32>
    %c0_42 = arith.constant 0 : index
    %c0_43 = arith.constant 0 : index
    %123 = vector.load %arg8[%c0_42, %c0_43] : memref<1x25xf32, #tpu.memory_space<vmem>>, vector<1x25xf32>
    %cst_44 = arith.constant dense<0.000000e+00> : vector<1x128xf32>
    %124 = tpu.matmul %123, %122, %cst_44 {dimension_numbers = #tpu.dot_dimension_numbers<[1], [1], [0], [0], [0, 0, 1, 0], [], []>} : vector<1x25xf32>, vector<128x25xf32>, vector<1x128xf32> -> vector<1x128xf32>
    %c0_45 = arith.constant 0 : index
    %c0_46 = arith.constant 0 : index
    %125 = vector.load %arg9[%c0_45, %c0_46] : memref<1x1xf32, #tpu.memory_space<vmem>>, vector<1x1xf32>
    %126 = vector.broadcast %125 : vector<1x1xf32> to vector<1x128xf32>
    %127 = arith.addf %124, %126 : vector<1x128xf32>
    %c0_47 = arith.constant 0 : index
    %c0_48 = arith.constant 0 : index
    %c0_49 = arith.constant 0 : index
    %128 = vector.load %arg10[%c0_47, %c0_48, %c0_49] : memref<1x1x128xf32, #tpu.memory_space<vmem>>, vector<1x1x128xf32>
    %129 = vector.shape_cast %128 : vector<1x1x128xf32> to vector<1x128xf32>
    %130 = vector.shape_cast %127 : vector<1x128xf32> to vector<1x1x128xf32>
    tpu.vector_store %arg10[%c0_47, %c0_48, %c0_49], %130 {strides = array<i32>} : memref<1x1x128xf32, #tpu.memory_space<vmem>>, vector<1x1x128xf32>,
    return
  }
  func.func @transform_0(%arg0: i32) -> (i32, i32, i32) {
    %c0_i32 = arith.constant 0 : i32
    %c0_i32_0 = arith.constant 0 : i32
    %c0_i32_1 = arith.constant 0 : i32
    return %c0_i32, %arg0, %c0_i32_0 : i32, i32, i32
  }
  func.func @transform_1(%arg0: i32) -> (i32, i32, i32) {
    %c0_i32 = arith.constant 0 : i32
    %c0_i32_0 = arith.constant 0 : i32
    %c0_i32_1 = arith.constant 0 : i32
    return %arg0, %c0_i32, %c0_i32_0 : i32, i32, i32
  }
  func.func @transform_2(%arg0: i32) -> (i32, i32) {
    %c0_i32 = arith.constant 0 : i32
    %c0_i32_0 = arith.constant 0 : i32
    %c0_i32_1 = arith.constant 0 : i32
    return %c0_i32, %c0_i32_0 : i32, i32
  }
  func.func @transform_3(%arg0: i32) -> (i32, i32) {
    %c0_i32 = arith.constant 0 : i32
    %c0_i32_0 = arith.constant 0 : i32
    %c0_i32_1 = arith.constant 0 : i32
    return %c0_i32, %c0_i32_0 : i32, i32
  }
  func.func @transform_4(%arg0: i32) -> (i32, i32) {
    %c0_i32 = arith.constant 0 : i32
    %c0_i32_0 = arith.constant 0 : i32
    %c0_i32_1 = arith.constant 0 : i32
    return %c0_i32, %c0_i32_0 : i32, i32
  }
  func.func @transform_5(%arg0: i32) -> (i32, i32) {
    %c0_i32 = arith.constant 0 : i32
    %c0_i32_0 = arith.constant 0 : i32
    %c0_i32_1 = arith.constant 0 : i32
    return %c0_i32, %c0_i32_0 : i32, i32
  }
  func.func @transform_6(%arg0: i32) -> (i32, i32) {
    %c0_i32 = arith.constant 0 : i32
    %c0_i32_0 = arith.constant 0 : i32
    %c0_i32_1 = arith.constant 0 : i32
    return %c0_i32, %c0_i32_0 : i32, i32
  }
  func.func @transform_7(%arg0: i32) -> (i32, i32) {
    %c0_i32 = arith.constant 0 : i32
    %c0_i32_0 = arith.constant 0 : i32
    %c0_i32_1 = arith.constant 0 : i32
    return %c0_i32, %c0_i32_0 : i32, i32
  }
  func.func @transform_8(%arg0: i32) -> (i32, i32) {
    %c0_i32 = arith.constant 0 : i32
    %c0_i32_0 = arith.constant 0 : i32
    %c0_i32_1 = arith.constant 0 : i32
    return %c0_i32, %c0_i32_0 : i32, i32
  }
  func.func @transform_9(%arg0: i32) -> (i32, i32, i32) {
    %c0_i32 = arith.constant 0 : i32
    %c0_i32_0 = arith.constant 0 : i32
    %c0_i32_1 = arith.constant 0 : i32
    return %arg0, %c0_i32, %c0_i32_0 : i32, i32, i32
  }
}

</mosaic_0001>

<llo_original>
// kernel: tpu_custom_call.1
$region0: #{tpu_custom_call.1}
  #allocation0 [shape = 'u32[]', space=smem, size = 0x4, offset = 0x4, fixed_abs, tag = 'smem constant byte address 0x4 - core index']
  #allocation1 [shape = 'u32[144,128]{1,0:T(1,128)}', space=vmem, size = 0x12000, scoped, tag = 'internal scratch']
  #allocation2 [shape = 'f32[1,1]{1,0:T(1,128)S(1)}', space=vmem, size = 0x200, scoped, tag = 'scoped memory for tpu_custom_call.1']
  %s0 = inlined_call_operand.vmem [shape: f32[2,200,8], index: 0, kind: input, shape index: {}]
  %s1 = inlined_call_operand.vmem [shape: f32[200,8,32], index: 1, kind: input, shape index: {}]
  %s2 = inlined_call_operand.vmem [shape: f32[32,50], index: 2, kind: input, shape index: {}]
  %s3 = inlined_call_operand.vmem [shape: f32[1,50], index: 3, kind: input, shape index: {}]
  %s4 = inlined_call_operand.vmem [shape: f32[1,50], index: 4, kind: input, shape index: {}]
  %s5 = inlined_call_operand.vmem [shape: f32[50,25], index: 5, kind: input, shape index: {}]
  %s6 = inlined_call_operand.vmem [shape: f32[1,25], index: 6, kind: input, shape index: {}]
  %s7 = inlined_call_operand.vmem [shape: f32[1,25], index: 7, kind: input, shape index: {}]
  %s8 = inlined_call_operand.<no memory space> [shape: f32[1,1], index: 8, kind: input, shape index: {}]
  %s9 = inlined_call_operand.hbm [shape: f32[2,1,128], index: 9, kind: output, shape index: {}]
  %s10 = sld [smem:[#allocation0]]
  $region121: #{tpu_custom_call.1} parent=0
    _
  %s12 = ssub.s32 1, %s10
  %s13 = scalar_select 0, %s12, %s10
  %v14 = vstv %s8
  %15 = vst [vmem:[#allocation2] sm:$0x1] %v14
  $region1: #{tpu_custom_call.1} parent=0
    #allocation3 [shape = 'u8[262144]{0}', space=vmem, size = 0x40000, scoped, tag = 'input window, operand 0']
    #allocation4 [shape = 'u8[1024]{0}', space=vmem, size = 0x400, scoped, tag = 'output window, operand 0']
    #allocation5 [shape = 's32[2]{0}', space=sflag, size = 0x8, scoped, tag = 'scoped memory for tpu_custom_call.1']
    %16 = vsyncpa [#allocation5], 0
    %s17 = scalar_lea.sflag [#allocation5], 1
    %18 = vsyncpa %s17, 0
    loop: start=0, step=1, limit=4
    $region2: #{tpu_custom_call.1} parent=1 // loop_pre_header
      _
    $region3: #{tpu_custom_call.1} parent=1 // loop_header
      %s20 = sphi 0, %s24
      %p21 = scmp.ge.s32.totalorder %s20, 4
      %s30 = sphi 0, %s32
      %s33 = sphi 0, %s30
      %s34 = sphi 0, %s33
      %s50 = sphi 0, %s34
      %s56 = sphi 0, %s58
      %s59 = sphi 0, %s56
      %s60 = sphi 0, %s59
      %s76 = sphi 0, %s60
      %s80 = sphi 0, %s80
      %s82 = sphi 0, %s80
      %s83 = sphi 0, %s82
      %s97 = sphi 0, %s83
      %s101 = sphi 0, %s101
      %s103 = sphi 0, %s101
      %s104 = sphi 0, %s103
      %s118 = sphi 0, %s104
      %s122 = sphi 0, %s122
      %s124 = sphi 0, %s122
      %s125 = sphi 0, %s124
      %s139 = sphi 0, %s125
      %s143 = sphi 0, %s143
      %s145 = sphi 0, %s143
      %s146 = sphi 0, %s145
      %s160 = sphi 0, %s146
      %s164 = sphi 0, %s164
      %s166 = sphi 0, %s164
      %s167 = sphi 0, %s166
      %s181 = sphi 0, %s167
      %s185 = sphi 0, %s185
      %s187 = sphi 0, %s185
      %s188 = sphi 0, %s187
      %s202 = sphi 0, %s188
      %s206 = sphi 0, %s206
      %s208 = sphi 0, %s206
      %s209 = sphi 0, %s208
      %s223 = sphi 0, %s209
      %s229 = sphi 0, %s231
      %s232 = sphi 0, %s229
      %s233 = sphi 0, %s232
      %s249 = sphi 0, %s233
    $region4: #{tpu_custom_call.1} parent=1 // loop_header_branch
      %23 = sbr.rel (%p21) target = $region8
    $region5: #{tpu_custom_call.1} parent=1 // loop_body
      %s25 = ssub.s32 %s20, 1
      %s26 = ssub.s32 %s20, 2
      %s27 = sadd.s32 %s20, 1
      %s28 = ssub.s32 %s20, %s27
      %p29 = scmp.eq.s32.totalorder %s28, 0
      %s31 = sadd.s32 %s30, 1
      %s32 = scalar_select %p29, %s30, %s31
      %p35 = pneg %p29
      %p36 = scmp.eq.s32.totalorder %s20, 1
      %p37 = por %p35, %p36
      %p38 = scmp.ne.s32.totalorder %s30, %s33
      %p39 = scmp.eq.s32.totalorder %s20, 0
      %p40 = por %p38, %p39
      %p41 = scmp.ne.s32.totalorder %s30, %s33
      %p42 = scmp.eq.s32.totalorder %s25, 1
      %p43 = por %p41, %p42
      %p44 = scmp.ne.s32.totalorder %s33, %s34
      %p45 = scmp.eq.s32.totalorder %s25, 0
      %p46 = por %p44, %p45
      %p47 = scmp.ne.s32.totalorder %s33, %s34
      %p48 = scmp.eq.s32.totalorder %s26, 1
      %p49 = por %p47, %p48
      %p51 = scmp.ne.s32.totalorder %s34, %s50
      %p52 = scmp.eq.s32.totalorder %s26, 0
      %p53 = por %p51, %p52
      %s54 = ssub.s32 %s20, %s27
      %p55 = scmp.eq.s32.totalorder %s54, 0
      %s57 = sadd.s32 %s56, 1
      %s58 = scalar_select %p55, %s56, %s57
      %p61 = pneg %p55
      %p62 = scmp.eq.s32.totalorder %s20, 1
      %p63 = por %p61, %p62
      %p64 = scmp.ne.s32.totalorder %s56, %s59
      %p65 = scmp.eq.s32.totalorder %s20, 0
      %p66 = por %p64, %p65
      %p67 = scmp.ne.s32.totalorder %s56, %s59
      %p68 = scmp.eq.s32.totalorder %s25, 1
      %p69 = por %p67, %p68
      %p70 = scmp.ne.s32.totalorder %s59, %s60
      %p71 = scmp.eq.s32.totalorder %s25, 0
      %p72 = por %p70, %p71
      %p73 = scmp.ne.s32.totalorder %s59, %s60
      %p74 = scmp.eq.s32.totalorder %s26, 1
      %p75 = por %p73, %p74
      %p77 = scmp.ne.s32.totalorder %s60, %s76
      %p78 = scmp.eq.s32.totalorder %s26, 0
      %p79 = por %p77, %p78
      %s81 = sadd.s32 %s80, 1
      %p84 = scmp.eq.s32.totalorder %s20, 1
      %p85 = scmp.ne.s32.totalorder %s80, %s82
      %p86 = scmp.eq.s32.totalorder %s20, 0
      %p87 = por %p85, %p86
      %p88 = scmp.ne.s32.totalorder %s80, %s82
      %p89 = scmp.eq.s32.totalorder %s25, 1
      %p90 = por %p88, %p89
      %p91 = scmp.ne.s32.totalorder %s82, %s83
      %p92 = scmp.eq.s32.totalorder %s25, 0
      %p93 = por %p91, %p92
      %p94 = scmp.ne.s32.totalorder %s82, %s83
      %p95 = scmp.eq.s32.totalorder %s26, 1
      %p96 = por %p94, %p95
      %p98 = scmp.ne.s32.totalorder %s83, %s97
      %p99 = scmp.eq.s32.totalorder %s26, 0
      %p100 = por %p98, %p99
      %s102 = sadd.s32 %s101, 1
      %p105 = scmp.eq.s32.totalorder %s20, 1
      %p106 = scmp.ne.s32.totalorder %s101, %s103
      %p107 = scmp.eq.s32.totalorder %s20, 0
      %p108 = por %p106, %p107
      %p109 = scmp.ne.s32.totalorder %s101, %s103
      %p110 = scmp.eq.s32.totalorder %s25, 1
      %p111 = por %p109, %p110
      %p112 = scmp.ne.s32.totalorder %s103, %s104
      %p113 = scmp.eq.s32.totalorder %s25, 0
      %p114 = por %p112, %p113
      %p115 = scmp.ne.s32.totalorder %s103, %s104
      %p116 = scmp.eq.s32.totalorder %s26, 1
      %p117 = por %p115, %p116
      %p119 = scmp.ne.s32.totalorder %s104, %s118
      %p120 = scmp.eq.s32.totalorder %s26, 0
      %p121 = por %p119, %p120
      %s123 = sadd.s32 %s122, 1
      %p126 = scmp.eq.s32.totalorder %s20, 1
      %p127 = scmp.ne.s32.totalorder %s122, %s124
      %p128 = scmp.eq.s32.totalorder %s20, 0
      %p129 = por %p127, %p128
      %p130 = scmp.ne.s32.totalorder %s122, %s124
      %p131 = scmp.eq.s32.totalorder %s25, 1
      %p132 = por %p130, %p131
      %p133 = scmp.ne.s32.totalorder %s124, %s125
      %p134 = scmp.eq.s32.totalorder %s25, 0
      %p135 = por %p133, %p134
      %p136 = scmp.ne.s32.totalorder %s124, %s125
      %p137 = scmp.eq.s32.totalorder %s26, 1
      %p138 = por %p136, %p137
      %p140 = scmp.ne.s32.totalorder %s125, %s139
      %p141 = scmp.eq.s32.totalorder %s26, 0
      %p142 = por %p140, %p141
      %s144 = sadd.s32 %s143, 1
      %p147 = scmp.eq.s32.totalorder %s20, 1
      %p148 = scmp.ne.s32.totalorder %s143, %s145
      %p149 = scmp.eq.s32.totalorder %s20, 0
      %p150 = por %p148, %p149
      %p151 = scmp.ne.s32.totalorder %s143, %s145
      %p152 = scmp.eq.s32.totalorder %s25, 1
      %p153 = por %p151, %p152
      %p154 = scmp.ne.s32.totalorder %s145, %s146
      %p155 = scmp.eq.s32.totalorder %s25, 0
      %p156 = por %p154, %p155
      %p157 = scmp.ne.s32.totalorder %s145, %s146
      %p158 = scmp.eq.s32.totalorder %s26, 1
      %p159 = por %p157, %p158
      %p161 = scmp.ne.s32.totalorder %s146, %s160
      %p162 = scmp.eq.s32.totalorder %s26, 0
      %p163 = por %p161, %p162
      %s165 = sadd.s32 %s164, 1
      %p168 = scmp.eq.s32.totalorder %s20, 1
      %p169 = scmp.ne.s32.totalorder %s164, %s166
      %p170 = scmp.eq.s32.totalorder %s20, 0
      %p171 = por %p169, %p170
      %p172 = scmp.ne.s32.totalorder %s164, %s166
      %p173 = scmp.eq.s32.totalorder %s25, 1
      %p174 = por %p172, %p173
      %p175 = scmp.ne.s32.totalorder %s166, %s167
      %p176 = scmp.eq.s32.totalorder %s25, 0
      %p177 = por %p175, %p176
      %p178 = scmp.ne.s32.totalorder %s166, %s167
      %p179 = scmp.eq.s32.totalorder %s26, 1
      %p180 = por %p178, %p179
      %p182 = scmp.ne.s32.totalorder %s167, %s181
      %p183 = scmp.eq.s32.totalorder %s26, 0
      %p184 = por %p182, %p183
      %s186 = sadd.s32 %s185, 1
      %p189 = scmp.eq.s32.totalorder %s20, 1
      %p190 = scmp.ne.s32.totalorder %s185, %s187
      %p191 = scmp.eq.s32.totalorder %s20, 0
      %p192 = por %p190, %p191
      %p193 = scmp.ne.s32.totalorder %s185, %s187
      %p194 = scmp.eq.s32.totalorder %s25, 1
      %p195 = por %p193, %p194
      %p196 = scmp.ne.s32.totalorder %s187, %s188
      %p197 = scmp.eq.s32.totalorder %s25, 0
      %p198 = por %p196, %p197
      %p199 = scmp.ne.s32.totalorder %s187, %s188
      %p200 = scmp.eq.s32.totalorder %s26, 1
      %p201 = por %p199, %p200
      %p203 = scmp.ne.s32.totalorder %s188, %s202
      %p204 = scmp.eq.s32.totalorder %s26, 0
      %p205 = por %p203, %p204
      %s207 = sadd.s32 %s206, 1
      %p210 = scmp.eq.s32.totalorder %s20, 1
      %p211 = scmp.ne.s32.totalorder %s206, %s208
      %p212 = scmp.eq.s32.totalorder %s20, 0
      %p213 = por %p211, %p212
      %p214 = scmp.ne.s32.totalorder %s206, %s208
      %p215 = scmp.eq.s32.totalorder %s25, 1
      %p216 = por %p214, %p215
      %p217 = scmp.ne.s32.totalorder %s208, %s209
      %p218 = scmp.eq.s32.totalorder %s25, 0
      %p219 = por %p217, %p218
      %p220 = scmp.ne.s32.totalorder %s208, %s209
      %p221 = scmp.eq.s32.totalorder %s26, 1
      %p222 = por %p220, %p221
      %p224 = scmp.ne.s32.totalorder %s209, %s223
      %p225 = scmp.eq.s32.totalorder %s26, 0
      %p226 = por %p224, %p225
      %s227 = ssub.s32 %s20, %s27
      %p228 = scmp.eq.s32.totalorder %s227, 0
      %s230 = sadd.s32 %s229, 1
      %s231 = scalar_select %p228, %s229, %s230
      %p234 = pneg %p228
      %p235 = scmp.eq.s32.totalorder %s20, 1
      %p236 = por %p234, %p235
      %p237 = scmp.ne.s32.totalorder %s229, %s232
      %p238 = scmp.eq.s32.totalorder %s20, 0
      %p239 = por %p237, %p238
      %p240 = scmp.ne.s32.totalorder %s229, %s232
      %p241 = scmp.eq.s32.totalorder %s25, 1
      %p242 = por %p240, %p241
      %p243 = scmp.ne.s32.totalorder %s232, %s233
      %p244 = scmp.eq.s32.totalorder %s25, 0
      %p245 = por %p243, %p244
      %p246 = scmp.ne.s32.totalorder %s232, %s233
      %p247 = scmp.eq.s32.totalorder %s26, 1
      %p248 = por %p246, %p247
      %p250 = scmp.ne.s32.totalorder %s233, %s249
      %p251 = scmp.eq.s32.totalorder %s26, 0
      %p252 = por %p250, %p251
      %p253 = scmp.le.s32.totalorder 1, %s20
      %p254 = scmp.lt.s32.totalorder %s20, 3
      %p255 = pnand %p253, %p254
      %p256 = pneg %p255
      // Predicated region
      $region9: #{tpu_custom_call.1} parent=5 // pred_check
        _
      $region10: #{tpu_custom_call.1} parent=5 // pred_check_branch
        %258 = sbr.rel (%p255) target = $region12
      $region11: #{tpu_custom_call.1} parent=5 // pred_region
        %s259 = ssub.s32 %s20, 1
        // Predicated region
        $region13: #{tpu_custom_call.1} parent=11 // pred_check
          %p260 = pneg %p93
        $region14: #{tpu_custom_call.1} parent=11 // pred_check_branch
          %262 = sbr.rel (%p260) target = $region16
        $region15: #{tpu_custom_call.1} parent=11 // pred_region
          _
        $region16: #{tpu_custom_call.1} parent=11 // pred_fallthru
          _
        // Predicated region
        $region17: #{tpu_custom_call.1} parent=11 // pred_check
          %p263 = pneg %p114
        $region18: #{tpu_custom_call.1} parent=11 // pred_check_branch
          %265 = sbr.rel (%p263) target = $region20
        $region19: #{tpu_custom_call.1} parent=11 // pred_region
          _
        $region20: #{tpu_custom_call.1} parent=11 // pred_fallthru
          _
        // Predicated region
        $region21: #{tpu_custom_call.1} parent=11 // pred_check
          %p266 = pneg %p135
        $region22: #{tpu_custom_call.1} parent=11 // pred_check_branch
          %268 = sbr.rel (%p266) target = $region24
        $region23: #{tpu_custom_call.1} parent=11 // pred_region
          _
        $region24: #{tpu_custom_call.1} parent=11 // pred_fallthru
          _
        // Predicated region
        $region25: #{tpu_custom_call.1} parent=11 // pred_check
          %p269 = pneg %p156
        $region26: #{tpu_custom_call.1} parent=11 // pred_check_branch
          %271 = sbr.rel (%p269) target = $region28
        $region27: #{tpu_custom_call.1} parent=11 // pred_region
          _
        $region28: #{tpu_custom_call.1} parent=11 // pred_fallthru
          _
        // Predicated region
        $region29: #{tpu_custom_call.1} parent=11 // pred_check
          %p272 = pneg %p177
        $region30: #{tpu_custom_call.1} parent=11 // pred_check_branch
          %274 = sbr.rel (%p272) target = $region32
        $region31: #{tpu_custom_call.1} parent=11 // pred_region
          _
        $region32: #{tpu_custom_call.1} parent=11 // pred_fallthru
          _
        // Predicated region
        $region33: #{tpu_custom_call.1} parent=11 // pred_check
          %p275 = pneg %p198
        $region34: #{tpu_custom_call.1} parent=11 // pred_check_branch
          %277 = sbr.rel (%p275) target = $region36
        $region35: #{tpu_custom_call.1} parent=11 // pred_region
          _
        $region36: #{tpu_custom_call.1} parent=11 // pred_fallthru
          _
        // Predicated region
        $region37: #{tpu_custom_call.1} parent=11 // pred_check
          %p278 = pneg %p219
        $region38: #{tpu_custom_call.1} parent=11 // pred_check_branch
          %280 = sbr.rel (%p278) target = $region40
        $region39: #{tpu_custom_call.1} parent=11 // pred_region
          _
        $region40: #{tpu_custom_call.1} parent=11 // pred_fallthru
          _
      $region12: #{tpu_custom_call.1} parent=5 // pred_fallthru
        _
      %p281 = scmp.lt.s32.totalorder %s20, 2
      // Predicated region
      $region41: #{tpu_custom_call.1} parent=5 // pred_check
        %p282 = pneg %p281
      $region42: #{tpu_custom_call.1} parent=5 // pred_check_branch
        %284 = sbr.rel (%p282) target = $region44
      $region43: #{tpu_custom_call.1} parent=5 // pred_region
        // Predicated region
        $region45: #{tpu_custom_call.1} parent=43 // pred_check
          %p285 = pneg %p40
        $region46: #{tpu_custom_call.1} parent=43 // pred_check_branch
          %287 = sbr.rel (%p285) target = $region48
        $region47: #{tpu_custom_call.1} parent=43 // pred_region
          %s288 = sand.u32 %s30, 1
          %s289 = sand.u32 %s30, 1
          %s290 = smul.addr %s289, 256
          %s291 = scalar_lea.vmem [#allocation3], %s290
          %s292 = smul.u32 16, %s20
          %s293 = ssub.s32 25, %s292
          %p294 = scmp.lt.s32.totalorder %s293, 16
          %s295 = scalar_select %p294, %s293, 16
          %s296 = smul.u32 256, %s295
          %p297 = scmp.ne.s32.totalorder 0, %s296
          %s298 = smul.addr %s292, 8
          %s299 = scalar_lea.vmem %s0, %s298
          // Predicated region
          $region49: #{tpu_custom_call.1} parent=47 // pred_check
            %p300 = pneg %p297
          $region50: #{tpu_custom_call.1} parent=47 // pred_check_branch
            %302 = sbr.rel (%p300) target = $region52
          $region51: #{tpu_custom_call.1} parent=47 // pred_region
            // Predicated region
            $region53: #{tpu_custom_call.1} parent=51 // pred_check
              _
            $region54: #{tpu_custom_call.1} parent=51 // pred_check_branch
              %304 = sbr.rel (0) target = $region56
            $region55: #{tpu_custom_call.1} parent=51 // pred_region
              // Predicated region
              $region75: #{tpu_custom_call.1} parent=55 // pred_check
                _
              $region76: #{tpu_custom_call.1} parent=55 // pred_check_branch
                %417 = sbr.rel (0) target = $region78
              $region77: #{tpu_custom_call.1} parent=55 // pred_region
                %s418 = sshrl.u32 %s295, 4
                // While loop
                $region79: #{tpu_custom_call.1} parent=77 // loop_pre_header
                  _
                $region80: #{tpu_custom_call.1} parent=77 // loop_header
                  %s420 = sphi 0, %s422
                  %p421 = scmp.ge.s32.totalorder %s420, %s418
                  %s425 = sphi 0, %s494
                  %s426 = sphi %s299, %s497
                  %s427 = sphi %s291, %s498
                $region81: #{tpu_custom_call.1} parent=77 // loop_header_branch
                  %424 = sbr.rel (%p421) target = $region85
                $region82: #{tpu_custom_call.1} parent=77 // loop_body
                  %v428 = vld [vmem:[%s426] sm:$0xff]
                  %429 = vst [vmem:[%s427] sm:$0xff] %v428
                  %v430 = vld [vmem:[%s426 + $0x8] sm:$0xff]
                  %431 = vst [vmem:[%s427 + $0x8] sm:$0xff] %v430
                  %v432 = vld [vmem:[%s426 + $0x10] sm:$0xff]
                  %433 = vst [vmem:[%s427 + $0x10] sm:$0xff] %v432
                  %v434 = vld [vmem:[%s426 + $0x18] sm:$0xff]
                  %435 = vst [vmem:[%s427 + $0x18] sm:$0xff] %v434
                  %v436 = vld [vmem:[%s426 + $0x20] sm:$0xff]
                  %437 = vst [vmem:[%s427 + $0x20] sm:$0xff] %v436
                  %v438 = vld [vmem:[%s426 + $0x28] sm:$0xff]
                  %439 = vst [vmem:[%s427 + $0x28] sm:$0xff] %v438
                  %v440 = vld [vmem:[%s426 + $0x30] sm:$0xff]
                  %441 = vst [vmem:[%s427 + $0x30] sm:$0xff] %v440
                  %v442 = vld [vmem:[%s426 + $0x38] sm:$0xff]
                  %443 = vst [vmem:[%s427 + $0x38] sm:$0xff] %v442
                  %v444 = vld [vmem:[%s426 + $0x40] sm:$0xff]
                  %445 = vst [vmem:[%s427 + $0x40] sm:$0xff] %v444
                  %v446 = vld [vmem:[%s426 + $0x48] sm:$0xff]
                  %447 = vst [vmem:[%s427 + $0x48] sm:$0xff] %v446
                  %v448 = vld [vmem:[%s426 + $0x50] sm:$0xff]
                  %449 = vst [vmem:[%s427 + $0x50] sm:$0xff] %v448
                  %v450 = vld [vmem:[%s426 + $0x58] sm:$0xff]
                  %451 = vst [vmem:[%s427 + $0x58] sm:$0xff] %v450
                  %v452 = vld [vmem:[%s426 + $0x60] sm:$0xff]
                  %453 = vst [vmem:[%s427 + $0x60] sm:$0xff] %v452
                  %v454 = vld [vmem:[%s426 + $0x68] sm:$0xff]
                  %455 = vst [vmem:[%s427 + $0x68] sm:$0xff] %v454
                  %v456 = vld [vmem:[%s426 + $0x70] sm:$0xff]
                  %457 = vst [vmem:[%s427 + $0x70] sm:$0xff] %v456
                  %v458 = vld [vmem:[%s426 + $0x78] sm:$0xff]
                  %459 = vst [vmem:[%s427 + $0x78] sm:$0xff] %v458
                  %v460 = vld [vmem:[%s426 + $0xc8] sm:$0xff]
                  %461 = vst [vmem:[%s427 + $0x80] sm:$0xff] %v460
                  %v462 = vld [vmem:[%s426 + $0xd0] sm:$0xff]
                  %463 = vst [vmem:[%s427 + $0x88] sm:$0xff] %v462
                  %v464 = vld [vmem:[%s426 + $0xd8] sm:$0xff]
                  %465 = vst [vmem:[%s427 + $0x90] sm:$0xff] %v464
                  %v466 = vld [vmem:[%s426 + $0xe0] sm:$0xff]
                  %467 = vst [vmem:[%s427 + $0x98] sm:$0xff] %v466
                  %v468 = vld [vmem:[%s426 + $0xe8] sm:$0xff]
                  %469 = vst [vmem:[%s427 + $0xa0] sm:$0xff] %v468
                  %v470 = vld [vmem:[%s426 + $0xf0] sm:$0xff]
                  %471 = vst [vmem:[%s427 + $0xa8] sm:$0xff] %v470
                  %v472 = vld [vmem:[%s426 + $0xf8] sm:$0xff]
                  %473 = vst [vmem:[%s427 + $0xb0] sm:$0xff] %v472
                  %v474 = vld [vmem:[%s426 + $0x100] sm:$0xff]
                  %475 = vst [vmem:[%s427 + $0xb8] sm:$0xff] %v474
                  %v476 = vld [vmem:[%s426 + $0x108] sm:$0xff]
                  %477 = vst [vmem:[%s427 + $0xc0] sm:$0xff] %v476
                  %v478 = vld [vmem:[%s426 + $0x110] sm:$0xff]
                  %479 = vst [vmem:[%s427 + $0xc8] sm:$0xff] %v478
                  %v480 = vld [vmem:[%s426 + $0x118] sm:$0xff]
                  %481 = vst [vmem:[%s427 + $0xd0] sm:$0xff] %v480
                  %v482 = vld [vmem:[%s426 + $0x120] sm:$0xff]
                  %483 = vst [vmem:[%s427 + $0xd8] sm:$0xff] %v482
                  %v484 = vld [vmem:[%s426 + $0x128] sm:$0xff]
                  %485 = vst [vmem:[%s427 + $0xe0] sm:$0xff] %v484
                  %v486 = vld [vmem:[%s426 + $0x130] sm:$0xff]
                  %487 = vst [vmem:[%s427 + $0xe8] sm:$0xff] %v486
                  %v488 = vld [vmem:[%s426 + $0x138] sm:$0xff]
                  %489 = vst [vmem:[%s427 + $0xf0] sm:$0xff] %v488
                  %v490 = vld [vmem:[%s426 + $0x140] sm:$0xff]
                  %491 = vst [vmem:[%s427 + $0xf8] sm:$0xff] %v490
                  %s492 = sadd.s32 1, %s425
                  %p493 = scmp.ge.s32.totalorder %s492, %s418
                  %s494 = scalar_select %p493, 0, %s492
                  %s495 = smul.u32 %s494, 128
                  %s496 = smul.u32 %s494, 128
                  %s497 = scalar_lea.vmem %s299, %s495
                  %s498 = scalar_lea.vmem %s291, %s496 [#allocation3]
                $region83: #{tpu_custom_call.1} parent=77 // loop_footer
                  %s422 = sadd.s32 %s420, 1
                $region84: #{tpu_custom_call.1} parent=77 // loop_footer_branch
                  %419 = sbr.rel target = $region80
                $region85: #{tpu_custom_call.1} parent=77 // loop_exit
                  _
                %s499 = sshrl.u32 %s295, 4
                %s500 = sand.u32 %s295, 15
                %s501 = smul.u32 %s499, 16
                %s502 = smul.u32 8, %s501
                %s503 = scalar_lea.vmem %s299, %s502
                %s504 = smul.u32 8, %s501
                %s505 = scalar_lea.vmem %s291, %s504 [#allocation3]
                // While loop
                $region86: #{tpu_custom_call.1} parent=77 // loop_pre_header
                  _
                $region87: #{tpu_custom_call.1} parent=77 // loop_header
                  %s507 = sphi 0, %s509
                  %p508 = scmp.ge.s32.totalorder %s507, %s500
                  %s512 = sphi 0, %s521
                  %s513 = sphi %s503, %s524
                  %s514 = sphi %s505, %s525
                $region88: #{tpu_custom_call.1} parent=77 // loop_header_branch
                  %511 = sbr.rel (%p508) target = $region92
                $region89: #{tpu_custom_call.1} parent=77 // loop_body
                  %v515 = vld [vmem:[%s513] sm:$0xff]
                  %516 = vst [vmem:[%s514] sm:$0xff] %v515
                  %v517 = vld [vmem:[%s513 + $0xc8] sm:$0xff]
                  %518 = vst [vmem:[%s514 + $0x80] sm:$0xff] %v517
                  %s519 = sadd.s32 1, %s512
                  %p520 = scmp.ge.s32.totalorder %s519, %s500
                  %s521 = scalar_select %p520, 0, %s519
                  %s522 = smul.u32 %s521, 8
                  %s523 = smul.u32 %s521, 8
                  %s524 = scalar_lea.vmem %s503, %s522
                  %s525 = scalar_lea.vmem %s505, %s523 [#allocation3]
                $region90: #{tpu_custom_call.1} parent=77 // loop_footer
                  %s509 = sadd.s32 %s507, 1
                $region91: #{tpu_custom_call.1} parent=77 // loop_footer_branch
                  %506 = sbr.rel target = $region87
                $region92: #{tpu_custom_call.1} parent=77 // loop_exit
                  _
              $region78: #{tpu_custom_call.1} parent=55 // pred_fallthru
                _
              // Predicated region
              $region93: #{tpu_custom_call.1} parent=55 // pred_check
                _
              $region94: #{tpu_custom_call.1} parent=55 // pred_check_branch
                %527 = sbr.rel target = $region96
              $region95: #{tpu_custom_call.1} parent=55 // pred_region
                _
              $region96: #{tpu_custom_call.1} parent=55 // pred_fallthru
                _
            $region56: #{tpu_custom_call.1} parent=51 // pred_fallthru
              _
            // Predicated region
            $region57: #{tpu_custom_call.1} parent=51 // pred_check
              _
            $region58: #{tpu_custom_call.1} parent=51 // pred_check_branch
              %306 = sbr.rel target = $region60
            $region59: #{tpu_custom_call.1} parent=51 // pred_region
              %s308 = sshrl.u32 %s295, 4
              // While loop
              $region61: #{tpu_custom_call.1} parent=59 // loop_pre_header
                _
              $region62: #{tpu_custom_call.1} parent=59 // loop_header
                %s310 = sphi 0, %s312
                %p311 = scmp.ge.s32.totalorder %s310, %s308
                %s315 = sphi 0, %s384
                %s316 = sphi %s299, %s387
                %s317 = sphi %s291, %s388
              $region63: #{tpu_custom_call.1} parent=59 // loop_header_branch
                %314 = sbr.rel (%p311) target = $region67
              $region64: #{tpu_custom_call.1} parent=59 // loop_body
                %v318 = vld [vmem:[%s316] sm:$0xff]
                %319 = vst [vmem:[%s317] sm:$0xff] %v318
                %v320 = vld [vmem:[%s316 + $0x8] sm:$0xff]
                %321 = vst [vmem:[%s317 + $0x8] sm:$0xff] %v320
                %v322 = vld [vmem:[%s316 + $0x10] sm:$0xff]
                %323 = vst [vmem:[%s317 + $0x10] sm:$0xff] %v322
                %v324 = vld [vmem:[%s316 + $0x18] sm:$0xff]
                %325 = vst [vmem:[%s317 + $0x18] sm:$0xff] %v324
                %v326 = vld [vmem:[%s316 + $0x20] sm:$0xff]
                %327 = vst [vmem:[%s317 + $0x20] sm:$0xff] %v326
                %v328 = vld [vmem:[%s316 + $0x28] sm:$0xff]
                %329 = vst [vmem:[%s317 + $0x28] sm:$0xff] %v328
                %v330 = vld [vmem:[%s316 + $0x30] sm:$0xff]
                %331 = vst [vmem:[%s317 + $0x30] sm:$0xff] %v330
                %v332 = vld [vmem:[%s316 + $0x38] sm:$0xff]
                %333 = vst [vmem:[%s317 + $0x38] sm:$0xff] %v332
                %v334 = vld [vmem:[%s316 + $0x40] sm:$0xff]
                %335 = vst [vmem:[%s317 + $0x40] sm:$0xff] %v334
                %v336 = vld [vmem:[%s316 + $0x48] sm:$0xff]
                %337 = vst [vmem:[%s317 + $0x48] sm:$0xff] %v336
                %v338 = vld [vmem:[%s316 + $0x50] sm:$0xff]
                %339 = vst [vmem:[%s317 + $0x50] sm:$0xff] %v338
                %v340 = vld [vmem:[%s316 + $0x58] sm:$0xff]
                %341 = vst [vmem:[%s317 + $0x58] sm:$0xff] %v340
                %v342 = vld [vmem:[%s316 + $0x60] sm:$0xff]
                %343 = vst [vmem:[%s317 + $0x60] sm:$0xff] %v342
                %v344 = vld [vmem:[%s316 + $0x68] sm:$0xff]
                %345 = vst [vmem:[%s317 + $0x68] sm:$0xff] %v344
                %v346 = vld [vmem:[%s316 + $0x70] sm:$0xff]
                %347 = vst [vmem:[%s317 + $0x70] sm:$0xff] %v346
                %v348 = vld [vmem:[%s316 + $0x78] sm:$0xff]
                %349 = vst [vmem:[%s317 + $0x78] sm:$0xff] %v348
                %v350 = vld [vmem:[%s316 + $0xc8] sm:$0xff]
                %351 = vst [vmem:[%s317 + $0x80] sm:$0xff] %v350
                %v352 = vld [vmem:[%s316 + $0xd0] sm:$0xff]
                %353 = vst [vmem:[%s317 + $0x88] sm:$0xff] %v352
                %v354 = vld [vmem:[%s316 + $0xd8] sm:$0xff]
                %355 = vst [vmem:[%s317 + $0x90] sm:$0xff] %v354
                %v356 = vld [vmem:[%s316 + $0xe0] sm:$0xff]
                %357 = vst [vmem:[%s317 + $0x98] sm:$0xff] %v356
                %v358 = vld [vmem:[%s316 + $0xe8] sm:$0xff]
                %359 = vst [vmem:[%s317 + $0xa0] sm:$0xff] %v358
                %v360 = vld [vmem:[%s316 + $0xf0] sm:$0xff]
                %361 = vst [vmem:[%s317 + $0xa8] sm:$0xff] %v360
                %v362 = vld [vmem:[%s316 + $0xf8] sm:$0xff]
                %363 = vst [vmem:[%s317 + $0xb0] sm:$0xff] %v362
                %v364 = vld [vmem:[%s316 + $0x100] sm:$0xff]
                %365 = vst [vmem:[%s317 + $0xb8] sm:$0xff] %v364
                %v366 = vld [vmem:[%s316 + $0x108] sm:$0xff]
                %367 = vst [vmem:[%s317 + $0xc0] sm:$0xff] %v366
                %v368 = vld [vmem:[%s316 + $0x110] sm:$0xff]
                %369 = vst [vmem:[%s317 + $0xc8] sm:$0xff] %v368
                %v370 = vld [vmem:[%s316 + $0x118] sm:$0xff]
                %371 = vst [vmem:[%s317 + $0xd0] sm:$0xff] %v370
                %v372 = vld [vmem:[%s316 + $0x120] sm:$0xff]
                %373 = vst [vmem:[%s317 + $0xd8] sm:$0xff] %v372
                %v374 = vld [vmem:[%s316 + $0x128] sm:$0xff]
                %375 = vst [vmem:[%s317 + $0xe0] sm:$0xff] %v374
                %v376 = vld [vmem:[%s316 + $0x130] sm:$0xff]
                %377 = vst [vmem:[%s317 + $0xe8] sm:$0xff] %v376
                %v378 = vld [vmem:[%s316 + $0x138] sm:$0xff]
                %379 = vst [vmem:[%s317 + $0xf0] sm:$0xff] %v378
                %v380 = vld [vmem:[%s316 + $0x140] sm:$0xff]
                %381 = vst [vmem:[%s317 + $0xf8] sm:$0xff] %v380
                %s382 = sadd.s32 1, %s315
                %p383 = scmp.ge.s32.totalorder %s382, %s308
                %s384 = scalar_select %p383, 0, %s382
                %s385 = smul.u32 %s384, 128
                %s386 = smul.u32 %s384, 128
                %s387 = scalar_lea.vmem %s299, %s385
                %s388 = scalar_lea.vmem %s291, %s386 [#allocation3]
              $region65: #{tpu_custom_call.1} parent=59 // loop_footer
                %s312 = sadd.s32 %s310, 1
              $region66: #{tpu_custom_call.1} parent=59 // loop_footer_branch
                %309 = sbr.rel target = $region62
              $region67: #{tpu_custom_call.1} parent=59 // loop_exit
                _
              %s389 = sshrl.u32 %s295, 4
              %s390 = sand.u32 %s295, 15
              %s391 = smul.u32 %s389, 16
              %s392 = smul.u32 8, %s391
              %s393 = scalar_lea.vmem %s299, %s392
              %s394 = smul.u32 8, %s391
              %s395 = scalar_lea.vmem %s291, %s394 [#allocation3]
              // While loop
              $region68: #{tpu_custom_call.1} parent=59 // loop_pre_header
                _
              $region69: #{tpu_custom_call.1} parent=59 // loop_header
                %s397 = sphi 0, %s399
                %p398 = scmp.ge.s32.totalorder %s397, %s390
                %s402 = sphi 0, %s411
                %s403 = sphi %s393, %s414
                %s404 = sphi %s395, %s415
              $region70: #{tpu_custom_call.1} parent=59 // loop_header_branch
                %401 = sbr.rel (%p398) target = $region74
              $region71: #{tpu_custom_call.1} parent=59 // loop_body
                %v405 = vld [vmem:[%s403] sm:$0xff]
                %406 = vst [vmem:[%s404] sm:$0xff] %v405
                %v407 = vld [vmem:[%s403 + $0xc8] sm:$0xff]
                %408 = vst [vmem:[%s404 + $0x80] sm:$0xff] %v407
                %s409 = sadd.s32 1, %s402
                %p410 = scmp.ge.s32.totalorder %s409, %s390
                %s411 = scalar_select %p410, 0, %s409
                %s412 = smul.u32 %s411, 8
                %s413 = smul.u32 %s411, 8
                %s414 = scalar_lea.vmem %s393, %s412
                %s415 = scalar_lea.vmem %s395, %s413 [#allocation3]
              $region72: #{tpu_custom_call.1} parent=59 // loop_footer
                %s399 = sadd.s32 %s397, 1
              $region73: #{tpu_custom_call.1} parent=59 // loop_footer_branch
                %396 = sbr.rel target = $region69
              $region74: #{tpu_custom_call.1} parent=59 // loop_exit
                _
            $region60: #{tpu_custom_call.1} parent=51 // pred_fallthru
              _
          $region52: #{tpu_custom_call.1} parent=47 // pred_fallthru
            _
          %528 = vnop
        $region48: #{tpu_custom_call.1} parent=43 // pred_fallthru
          _
        // Predicated region
        $region97: #{tpu_custom_call.1} parent=43 // pred_check
          %p529 = pneg %p66
        $region98: #{tpu_custom_call.1} parent=43 // pred_check_branch
          %531 = sbr.rel (%p529) target = $region100
        $region99: #{tpu_custom_call.1} parent=43 // pred_region
          %s532 = smul.u32 128, %s20
          %s533 = ssub.s32 200, %s532
          %p534 = scmp.lt.s32.totalorder %s533, 128
          %s535 = scalar_select %p534, %s533, 128
          %s536 = smul.u32 128, %s535
          %p537 = scmp.lt.s32.totalorder %s532, 199
          %s538 = scalar_select %p537, %s532, 199
          %s539 = smul.addr %s538, 8
          %s540 = scalar_lea.vmem %s1, %s539
          %s541 = smul.u32 128, %s20
          %s542 = ssub.s32 200, %s541
          %p543 = scmp.lt.s32.totalorder %s542, 128
          %s544 = scalar_select %p543, %s542, 128
          %s545 = smul.u32 128, %s544
        $region100: #{tpu_custom_call.1} parent=43 // pred_fallthru
          _
      $region44: #{tpu_custom_call.1} parent=5 // pred_fallthru
        _
      %p546 = scmp.le.s32.totalorder 1, %s20
      %p547 = scmp.lt.s32.totalorder %s20, 3
      %p548 = pnand %p546, %p547
      %p549 = pneg %p548
      // Predicated region
      $region101: #{tpu_custom_call.1} parent=5 // pred_check
        _
      $region102: #{tpu_custom_call.1} parent=5 // pred_check_branch
        %551 = sbr.rel (%p548) target = $region104
      $region103: #{tpu_custom_call.1} parent=5 // pred_region
        %s552 = ssub.s32 %s20, 1
        %s553 = sand.u32 %s33, 1
        %s554 = sand.u32 %s33, 1
        %s555 = smul.addr %s554, 256
        %s556 = scalar_lea.vmem [#allocation3], %s555
        // Predicated region
        $region105: #{tpu_custom_call.1} parent=103 // pred_check
          %p557 = pneg %p46
        $region106: #{tpu_custom_call.1} parent=103 // pred_check_branch
          %559 = sbr.rel (%p557) target = $region108
        $region107: #{tpu_custom_call.1} parent=103 // pred_region
          _
        $region108: #{tpu_custom_call.1} parent=103 // pred_fallthru
          _
        %s560 = sand.u32 %s33, 1
        %s561 = sand.u32 %s33, 1
        %s562 = smul.addr %s561, 256
        %s563 = scalar_lea.vmem [#allocation3], %s562
        %p564 = pneg %p46
        %p565 = pneg %p43
        %s566 = smul.u32 128, %s25
        %s567 = ssub.s32 200, %s566
        %p568 = scmp.lt.s32.totalorder %s567, 128
        %s569 = scalar_select %p568, %s567, 128
        %s570 = smul.u32 128, %s569
        %p571 = scmp.lt.s32.totalorder %s566, 199
        %s572 = scalar_select %p571, %s566, 199
        %s573 = smul.addr %s572, 8
        %s574 = scalar_lea.vmem %s1, %s573
        %p575 = pneg %p72
        %p576 = pneg %p69
        %p577 = pneg %p93
        %p578 = pneg %p90
        %p579 = pneg %p114
        %p580 = pneg %p111
        %p581 = pneg %p135
        %p582 = pneg %p132
        %p583 = pneg %p156
        %p584 = pneg %p153
        %p585 = pneg %p177
        %p586 = pneg %p174
        %p587 = pneg %p198
        %p588 = pneg %p195
        %p589 = pneg %p219
        %p590 = pneg %p216
        %p591 = pneg %p245
        %p592 = pneg %p242
        %s593 = sand.u32 %s232, 1
        %s594 = scalar_lea.sflag [#allocation5], %s593
        %s595 = sand.u32 %s232, 1
        %s596 = scalar_lea.vmem [#allocation4], %s595
        %s597 = smul.u32 16, %s25
        %s598 = ssub.s32 25, %s597
        %p599 = scmp.lt.s32.totalorder %s598, 16
        %s600 = scalar_select %p599, %s598, 16
        %s601 = smul.u32 256, %s600
        %s602 = smul.u32 128, %s25
        %s603 = ssub.s32 200, %s602
        %p604 = scmp.lt.s32.totalorder %s603, 128
        %s605 = scalar_select %p604, %s603, 128
        %s606 = smul.u32 128, %s605
        %p607 = scmp.lt.s32.totalorder %s602, 199
        %s608 = scalar_select %p607, %s602, 199
        %s609 = smul.addr %s608, 8
        %s610 = scalar_lea.vmem %s1, %s609
        %s611 = smul.u32 128, %s25
        %s612 = ssub.s32 200, %s611
        %p613 = scmp.lt.s32.totalorder %s612, 128
        %s614 = scalar_select %p613, %s612, 128
        %s615 = smul.u32 128, %s614
        %v616 = vld [vmem:[%s556] sm:$0xff]
        %v617 = vld [vmem:[%s556 + $0x8] sm:$0xff]
        %v618 = vld [vmem:[%s556 + $0x10] sm:$0xff]
        %v619 = vld [vmem:[%s556 + $0x18] sm:$0xff]
        %v620 = vld [vmem:[%s556 + $0x20] sm:$0xff]
        %v621 = vld [vmem:[%s556 + $0x28] sm:$0xff]
        %v622 = vld [vmem:[%s556 + $0x30] sm:$0xff]
        %v623 = vld [vmem:[%s556 + $0x38] sm:$0xff]
        %v624 = vld [vmem:[%s556 + $0x40] sm:$0xff]
        %v625 = vld [vmem:[%s556 + $0x48] sm:$0xff]
        %v626 = vld [vmem:[%s556 + $0x50] sm:$0xff]
        %v627 = vld [vmem:[%s556 + $0x58] sm:$0xff]
        %v628 = vld [vmem:[%s556 + $0x60] sm:$0xff]
        %v629 = vld [vmem:[%s556 + $0x68] sm:$0xff]
        %v630 = vld [vmem:[%s556 + $0x70] sm:$0xff]
        %v631 = vld [vmem:[%s556 + $0x78] sm:$0xff]
        %s632 = scalar_lea.vmem %s556, 128 [#allocation3]
        %v633 = vld [vmem:[%s632] sm:$0xff]
        %v634 = vld [vmem:[%s632 + $0x8] sm:$0xff]
        %v635 = vld [vmem:[%s632 + $0x10] sm:$0xff]
        %v636 = vld [vmem:[%s632 + $0x18] sm:$0xff]
        %v637 = vld [vmem:[%s632 + $0x20] sm:$0xff]
        %v638 = vld [vmem:[%s632 + $0x28] sm:$0xff]
        %v639 = vld [vmem:[%s632 + $0x30] sm:$0xff]
        %v640 = vld [vmem:[%s632 + $0x38] sm:$0xff]
        %v641 = vld [vmem:[%s632 + $0x40] sm:$0xff]
        %v642 = vld [vmem:[%s632 + $0x48] sm:$0xff]
        %v643 = vld [vmem:[%s632 + $0x50] sm:$0xff]
        %v644 = vld [vmem:[%s632 + $0x58] sm:$0xff]
        %v645 = vld [vmem:[%s632 + $0x60] sm:$0xff]
        %v646 = vld [vmem:[%s632 + $0x68] sm:$0xff]
        %v647 = vld [vmem:[%s632 + $0x70] sm:$0xff]
        %v648 = vld [vmem:[%s632 + $0x78] sm:$0xff]
        %v649 = vld [vmem:[%s610] sm:$0x1]
        %v650 = vld [vmem:[%s610 + $0x8] sm:$0x1]
        %v651 = vld [vmem:[%s610 + $0x10] sm:$0x1]
        %v652 = vld [vmem:[%s610 + $0x18] sm:$0x1]
        %v653 = vld [vmem:[%s610 + $0x20] sm:$0x1]
        %v654 = vld [vmem:[%s610 + $0x28] sm:$0x1]
        %v655 = vld [vmem:[%s610 + $0x30] sm:$0x1]
        %v656 = vld [vmem:[%s610 + $0x38] sm:$0x1]
        %v657 = vld [vmem:[%s610 + $0x40] sm:$0x1]
        %v658 = vld [vmem:[%s610 + $0x48] sm:$0x1]
        %v659 = vld [vmem:[%s610 + $0x50] sm:$0x1]
        %v660 = vld [vmem:[%s610 + $0x58] sm:$0x1]
        %v661 = vld [vmem:[%s610 + $0x60] sm:$0x1]
        %v662 = vld [vmem:[%s610 + $0x68] sm:$0x1]
        %v663 = vld [vmem:[%s610 + $0x70] sm:$0x1]
        %v664 = vld [vmem:[%s610 + $0x78] sm:$0x1]
        %v665 = vld [vmem:[%s610 + $0x80] sm:$0x1]
        %v666 = vld [vmem:[%s610 + $0x88] sm:$0x1]
        %v667 = vld [vmem:[%s610 + $0x90] sm:$0x1]
        %v668 = vld [vmem:[%s610 + $0x98] sm:$0x1]
        %v669 = vld [vmem:[%s610 + $0xa0] sm:$0x1]
        %v670 = vld [vmem:[%s610 + $0xa8] sm:$0x1]
        %v671 = vld [vmem:[%s610 + $0xb0] sm:$0x1]
        %v672 = vld [vmem:[%s610 + $0xb8] sm:$0x1]
        %v673 = vld [vmem:[%s610 + $0xc0] sm:$0x1]
        %v674 = vld [vmem:[%s610 + $0xc8] sm:$0x1]
        %v675 = vld [vmem:[%s610 + $0xd0] sm:$0x1]
        %v676 = vld [vmem:[%s610 + $0xd8] sm:$0x1]
        %v677 = vld [vmem:[%s610 + $0xe0] sm:$0x1]
        %v678 = vld [vmem:[%s610 + $0xe8] sm:$0x1]
        %v679 = vld [vmem:[%s610 + $0xf0] sm:$0x1]
        %v680 = vld [vmem:[%s610 + $0xf8] sm:$0x1]
        %v681 = vld [vmem:[%s610 + $0x100] sm:$0x1]
        %v682 = vld [vmem:[%s610 + $0x108] sm:$0x1]
        %v683 = vld [vmem:[%s610 + $0x110] sm:$0x1]
        %v684 = vld [vmem:[%s610 + $0x118] sm:$0x1]
        %v685 = vld [vmem:[%s610 + $0x120] sm:$0x1]
        %v686 = vld [vmem:[%s610 + $0x128] sm:$0x1]
        %v687 = vld [vmem:[%s610 + $0x130] sm:$0x1]
        %v688 = vld [vmem:[%s610 + $0x138] sm:$0x1]
        %v689 = vld [vmem:[%s610 + $0x140] sm:$0x1]
        %v690 = vld [vmem:[%s610 + $0x148] sm:$0x1]
        %v691 = vld [vmem:[%s610 + $0x150] sm:$0x1]
        %v692 = vld [vmem:[%s610 + $0x158] sm:$0x1]
        %v693 = vld [vmem:[%s610 + $0x160] sm:$0x1]
        %v694 = vld [vmem:[%s610 + $0x168] sm:$0x1]
        %v695 = vld [vmem:[%s610 + $0x170] sm:$0x1]
        %v696 = vld [vmem:[%s610 + $0x178] sm:$0x1]
        %v697 = vld [vmem:[%s610 + $0x180] sm:$0x1]
        %v698 = vld [vmem:[%s610 + $0x188] sm:$0x1]
        %v699 = vld [vmem:[%s610 + $0x190] sm:$0x1]
        %v700 = vld [vmem:[%s610 + $0x198] sm:$0x1]
        %v701 = vld [vmem:[%s610 + $0x1a0] sm:$0x1]
        %v702 = vld [vmem:[%s610 + $0x1a8] sm:$0x1]
        %v703 = vld [vmem:[%s610 + $0x1b0] sm:$0x1]
        %v704 = vld [vmem:[%s610 + $0x1b8] sm:$0x1]
        %v705 = vld [vmem:[%s610 + $0x1c0] sm:$0x1]
        %v706 = vld [vmem:[%s610 + $0x1c8] sm:$0x1]
        %v707 = vld [vmem:[%s610 + $0x1d0] sm:$0x1]
        %v708 = vld [vmem:[%s610 + $0x1d8] sm:$0x1]
        %v709 = vld [vmem:[%s610 + $0x1e0] sm:$0x1]
        %v710 = vld [vmem:[%s610 + $0x1e8] sm:$0x1]
        %v711 = vld [vmem:[%s610 + $0x1f0] sm:$0x1]
        %v712 = vld [vmem:[%s610 + $0x1f8] sm:$0x1]
        %v713 = vld [vmem:[%s610 + $0x200] sm:$0x1]
        %v714 = vld [vmem:[%s610 + $0x208] sm:$0x1]
        %v715 = vld [vmem:[%s610 + $0x210] sm:$0x1]
        %v716 = vld [vmem:[%s610 + $0x218] sm:$0x1]
        %v717 = vld [vmem:[%s610 + $0x220] sm:$0x1]
        %v718 = vld [vmem:[%s610 + $0x228] sm:$0x1]
        %v719 = vld [vmem:[%s610 + $0x230] sm:$0x1]
        %v720 = vld [vmem:[%s610 + $0x238] sm:$0x1]
        %v721 = vld [vmem:[%s610 + $0x240] sm:$0x1]
        %v722 = vld [vmem:[%s610 + $0x248] sm:$0x1]
        %v723 = vld [vmem:[%s610 + $0x250] sm:$0x1]
        %v724 = vld [vmem:[%s610 + $0x258] sm:$0x1]
        %v725 = vld [vmem:[%s610 + $0x260] sm:$0x1]
        %v726 = vld [vmem:[%s610 + $0x268] sm:$0x1]
        %v727 = vld [vmem:[%s610 + $0x270] sm:$0x1]
        %v728 = vld [vmem:[%s610 + $0x278] sm:$0x1]
        %v729 = vld [vmem:[%s610 + $0x280] sm:$0x1]
        %v730 = vld [vmem:[%s610 + $0x288] sm:$0x1]
        %v731 = vld [vmem:[%s610 + $0x290] sm:$0x1]
        %v732 = vld [vmem:[%s610 + $0x298] sm:$0x1]
        %v733 = vld [vmem:[%s610 + $0x2a0] sm:$0x1]
        %v734 = vld [vmem:[%s610 + $0x2a8] sm:$0x1]
        %v735 = vld [vmem:[%s610 + $0x2b0] sm:$0x1]
        %v736 = vld [vmem:[%s610 + $0x2b8] sm:$0x1]
        %v737 = vld [vmem:[%s610 + $0x2c0] sm:$0x1]
        %v738 = vld [vmem:[%s610 + $0x2c8] sm:$0x1]
        %v739 = vld [vmem:[%s610 + $0x2d0] sm:$0x1]
        %v740 = vld [vmem:[%s610 + $0x2d8] sm:$0x1]
        %v741 = vld [vmem:[%s610 + $0x2e0] sm:$0x1]
        %v742 = vld [vmem:[%s610 + $0x2e8] sm:$0x1]
        %v743 = vld [vmem:[%s610 + $0x2f0] sm:$0x1]
        %v744 = vld [vmem:[%s610 + $0x2f8] sm:$0x1]
        %v745 = vld [vmem:[%s610 + $0x300] sm:$0x1]
        %v746 = vld [vmem:[%s610 + $0x308] sm:$0x1]
        %v747 = vld [vmem:[%s610 + $0x310] sm:$0x1]
        %v748 = vld [vmem:[%s610 + $0x318] sm:$0x1]
        %v749 = vld [vmem:[%s610 + $0x320] sm:$0x1]
        %v750 = vld [vmem:[%s610 + $0x328] sm:$0x1]
        %v751 = vld [vmem:[%s610 + $0x330] sm:$0x1]
        %v752 = vld [vmem:[%s610 + $0x338] sm:$0x1]
        %v753 = vld [vmem:[%s610 + $0x340] sm:$0x1]
        %v754 = vld [vmem:[%s610 + $0x348] sm:$0x1]
        %v755 = vld [vmem:[%s610 + $0x350] sm:$0x1]
        %v756 = vld [vmem:[%s610 + $0x358] sm:$0x1]
        %v757 = vld [vmem:[%s610 + $0x360] sm:$0x1]
        %v758 = vld [vmem:[%s610 + $0x368] sm:$0x1]
        %v759 = vld [vmem:[%s610 + $0x370] sm:$0x1]
        %v760 = vld [vmem:[%s610 + $0x378] sm:$0x1]
        %v761 = vld [vmem:[%s610 + $0x380] sm:$0x1]
        %v762 = vld [vmem:[%s610 + $0x388] sm:$0x1]
        %v763 = vld [vmem:[%s610 + $0x390] sm:$0x1]
        %v764 = vld [vmem:[%s610 + $0x398] sm:$0x1]
        %v765 = vld [vmem:[%s610 + $0x3a0] sm:$0x1]
        %v766 = vld [vmem:[%s610 + $0x3a8] sm:$0x1]
        %v767 = vld [vmem:[%s610 + $0x3b0] sm:$0x1]
        %v768 = vld [vmem:[%s610 + $0x3b8] sm:$0x1]
        %v769 = vld [vmem:[%s610 + $0x3c0] sm:$0x1]
        %v770 = vld [vmem:[%s610 + $0x3c8] sm:$0x1]
        %v771 = vld [vmem:[%s610 + $0x3d0] sm:$0x1]
        %v772 = vld [vmem:[%s610 + $0x3d8] sm:$0x1]
        %v773 = vld [vmem:[%s610 + $0x3e0] sm:$0x1]
        %v774 = vld [vmem:[%s610 + $0x3e8] sm:$0x1]
        %v775 = vld [vmem:[%s610 + $0x3f0] sm:$0x1]
        %v776 = vld [vmem:[%s610 + $0x3f8] sm:$0x1]
        %778 = vset.pattern.permute.xlu0 0
        %779 = vperm.xlu0 %778, %v616
        %v780 = vpop.permute.xlu0 %779
        %783 = vset.pattern.permute.xlu0 0
        %784 = vperm.xlu0 %783, %v617
        %v785 = vpop.permute.xlu0 %784
        %788 = vset.pattern.permute.xlu0 0
        %789 = vperm.xlu0 %788, %v618
        %v790 = vpop.permute.xlu0 %789
        %793 = vset.pattern.permute.xlu0 0
        %794 = vperm.xlu0 %793, %v619
        %v795 = vpop.permute.xlu0 %794
        %798 = vset.pattern.permute.xlu0 0
        %799 = vperm.xlu0 %798, %v620
        %v800 = vpop.permute.xlu0 %799
        %803 = vset.pattern.permute.xlu0 0
        %804 = vperm.xlu0 %803, %v621
        %v805 = vpop.permute.xlu0 %804
        %808 = vset.pattern.permute.xlu0 0
        %809 = vperm.xlu0 %808, %v622
        %v810 = vpop.permute.xlu0 %809
        %813 = vset.pattern.permute.xlu0 0
        %814 = vperm.xlu0 %813, %v623
        %v815 = vpop.permute.xlu0 %814
        %818 = vset.pattern.permute.xlu0 0
        %819 = vperm.xlu0 %818, %v624
        %v820 = vpop.permute.xlu0 %819
        %823 = vset.pattern.permute.xlu0 0
        %824 = vperm.xlu0 %823, %v625
        %v825 = vpop.permute.xlu0 %824
        %828 = vset.pattern.permute.xlu0 0
        %829 = vperm.xlu0 %828, %v626
        %v830 = vpop.permute.xlu0 %829
        %833 = vset.pattern.permute.xlu0 0
        %834 = vperm.xlu0 %833, %v627
        %v835 = vpop.permute.xlu0 %834
        %838 = vset.pattern.permute.xlu0 0
        %839 = vperm.xlu0 %838, %v628
        %v840 = vpop.permute.xlu0 %839
        %843 = vset.pattern.permute.xlu0 0
        %844 = vperm.xlu0 %843, %v629
        %v845 = vpop.permute.xlu0 %844
        %848 = vset.pattern.permute.xlu0 0
        %849 = vperm.xlu0 %848, %v630
        %v850 = vpop.permute.xlu0 %849
        %853 = vset.pattern.permute.xlu0 0
        %854 = vperm.xlu0 %853, %v631
        %v855 = vpop.permute.xlu0 %854
        %v985 = vrot.slane %v650, 7
        %vm986 = vcmask 1041409
        %v987 = vsel %vm986, %v985, %v649
        %v988 = vrot.slane %v651, 6
        %vm989 = vcmask 1042434
        %v990 = vsel %vm989, %v988, %v987
        %v991 = vrot.slane %v652, 5
        %vm992 = vcmask 1043459
        %v993 = vsel %vm992, %v991, %v990
        %v994 = vrot.slane %v653, 4
        %vm995 = vcmask 1044484
        %v996 = vsel %vm995, %v994, %v993
        %v997 = vrot.slane %v654, 3
        %vm998 = vcmask 1045509
        %v999 = vsel %vm998, %v997, %v996
        %v1000 = vrot.slane %v655, 2
        %vm1001 = vcmask 1046534
        %v1002 = vsel %vm1001, %v1000, %v999
        %v1003 = vrot.slane %v656, 1
        %vm1004 = vcmask 1047559
        %v1005 = vsel %vm1004, %v1003, %v1002
        %v1006 = vrot.slane %v658, 7
        %v1007 = vsel %vm986, %v1006, %v657
        %v1008 = vrot.slane %v659, 6
        %v1009 = vsel %vm989, %v1008, %v1007
        %v1010 = vrot.slane %v660, 5
        %v1011 = vsel %vm992, %v1010, %v1009
        %v1012 = vrot.slane %v661, 4
        %v1013 = vsel %vm995, %v1012, %v1011
        %v1014 = vrot.slane %v662, 3
        %v1015 = vsel %vm998, %v1014, %v1013
        %v1016 = vrot.slane %v663, 2
        %v1017 = vsel %vm1001, %v1016, %v1015
        %v1018 = vrot.slane %v664, 1
        %v1019 = vsel %vm1004, %v1018, %v1017
        %v1020 = vrot.slane %v666, 7
        %v1021 = vsel %vm986, %v1020, %v665
        %v1022 = vrot.slane %v667, 6
        %v1023 = vsel %vm989, %v1022, %v1021
        %v1024 = vrot.slane %v668, 5
        %v1025 = vsel %vm992, %v1024, %v1023
        %v1026 = vrot.slane %v669, 4
        %v1027 = vsel %vm995, %v1026, %v1025
        %v1028 = vrot.slane %v670, 3
        %v1029 = vsel %vm998, %v1028, %v1027
        %v1030 = vrot.slane %v671, 2
        %v1031 = vsel %vm1001, %v1030, %v1029
        %v1032 = vrot.slane %v672, 1
        %v1033 = vsel %vm1004, %v1032, %v1031
        %v1034 = vrot.slane %v674, 7
        %v1035 = vsel %vm986, %v1034, %v673
        %v1036 = vrot.slane %v675, 6
        %v1037 = vsel %vm989, %v1036, %v1035
        %v1038 = vrot.slane %v676, 5
        %v1039 = vsel %vm992, %v1038, %v1037
        %v1040 = vrot.slane %v677, 4
        %v1041 = vsel %vm995, %v1040, %v1039
        %v1042 = vrot.slane %v678, 3
        %v1043 = vsel %vm998, %v1042, %v1041
        %v1044 = vrot.slane %v679, 2
        %v1045 = vsel %vm1001, %v1044, %v1043
        %v1046 = vrot.slane %v680, 1
        %v1047 = vsel %vm1004, %v1046, %v1045
        %v1048 = vrot.slane %v682, 7
        %v1049 = vsel %vm986, %v1048, %v681
        %v1050 = vrot.slane %v683, 6
        %v1051 = vsel %vm989, %v1050, %v1049
        %v1052 = vrot.slane %v684, 5
        %v1053 = vsel %vm992, %v1052, %v1051
        %v1054 = vrot.slane %v685, 4
        %v1055 = vsel %vm995, %v1054, %v1053
        %v1056 = vrot.slane %v686, 3
        %v1057 = vsel %vm998, %v1056, %v1055
        %v1058 = vrot.slane %v687, 2
        %v1059 = vsel %vm1001, %v1058, %v1057
        %v1060 = vrot.slane %v688, 1
        %v1061 = vsel %vm1004, %v1060, %v1059
        %v1062 = vrot.slane %v690, 7
        %v1063 = vsel %vm986, %v1062, %v689
        %v1064 = vrot.slane %v691, 6
        %v1065 = vsel %vm989, %v1064, %v1063
        %v1066 = vrot.slane %v692, 5
        %v1067 = vsel %vm992, %v1066, %v1065
        %v1068 = vrot.slane %v693, 4
        %v1069 = vsel %vm995, %v1068, %v1067
        %v1070 = vrot.slane %v694, 3
        %v1071 = vsel %vm998, %v1070, %v1069
        %v1072 = vrot.slane %v695, 2
        %v1073 = vsel %vm1001, %v1072, %v1071
        %v1074 = vrot.slane %v696, 1
        %v1075 = vsel %vm1004, %v1074, %v1073
        %v1076 = vrot.slane %v698, 7
        %v1077 = vsel %vm986, %v1076, %v697
        %v1078 = vrot.slane %v699, 6
        %v1079 = vsel %vm989, %v1078, %v1077
        %v1080 = vrot.slane %v700, 5
        %v1081 = vsel %vm992, %v1080, %v1079
        %v1082 = vrot.slane %v701, 4
        %v1083 = vsel %vm995, %v1082, %v1081
        %v1084 = vrot.slane %v702, 3
        %v1085 = vsel %vm998, %v1084, %v1083
        %v1086 = vrot.slane %v703, 2
        %v1087 = vsel %vm1001, %v1086, %v1085
        %v1088 = vrot.slane %v704, 1
        %v1089 = vsel %vm1004, %v1088, %v1087
        %v1090 = vrot.slane %v706, 7
        %v1091 = vsel %vm986, %v1090, %v705
        %v1092 = vrot.slane %v707, 6
        %v1093 = vsel %vm989, %v1092, %v1091
        %v1094 = vrot.slane %v708, 5
        %v1095 = vsel %vm992, %v1094, %v1093
        %v1096 = vrot.slane %v709, 4
        %v1097 = vsel %vm995, %v1096, %v1095
        %v1098 = vrot.slane %v710, 3
        %v1099 = vsel %vm998, %v1098, %v1097
        %v1100 = vrot.slane %v711, 2
        %v1101 = vsel %vm1001, %v1100, %v1099
        %v1102 = vrot.slane %v712, 1
        %v1103 = vsel %vm1004, %v1102, %v1101
        %v1104 = vrot.slane %v714, 7
        %v1105 = vsel %vm986, %v1104, %v713
        %v1106 = vrot.slane %v715, 6
        %v1107 = vsel %vm989, %v1106, %v1105
        %v1108 = vrot.slane %v716, 5
        %v1109 = vsel %vm992, %v1108, %v1107
        %v1110 = vrot.slane %v717, 4
        %v1111 = vsel %vm995, %v1110, %v1109
        %v1112 = vrot.slane %v718, 3
        %v1113 = vsel %vm998, %v1112, %v1111
        %v1114 = vrot.slane %v719, 2
        %v1115 = vsel %vm1001, %v1114, %v1113
        %v1116 = vrot.slane %v720, 1
        %v1117 = vsel %vm1004, %v1116, %v1115
        %v1118 = vrot.slane %v722, 7
        %v1119 = vsel %vm986, %v1118, %v721
        %v1120 = vrot.slane %v723, 6
        %v1121 = vsel %vm989, %v1120, %v1119
        %v1122 = vrot.slane %v724, 5
        %v1123 = vsel %vm992, %v1122, %v1121
        %v1124 = vrot.slane %v725, 4
        %v1125 = vsel %vm995, %v1124, %v1123
        %v1126 = vrot.slane %v726, 3
        %v1127 = vsel %vm998, %v1126, %v1125
        %v1128 = vrot.slane %v727, 2
        %v1129 = vsel %vm1001, %v1128, %v1127
        %v1130 = vrot.slane %v728, 1
        %v1131 = vsel %vm1004, %v1130, %v1129
        %v1132 = vrot.slane %v730, 7
        %v1133 = vsel %vm986, %v1132, %v729
        %v1134 = vrot.slane %v731, 6
        %v1135 = vsel %vm989, %v1134, %v1133
        %v1136 = vrot.slane %v732, 5
        %v1137 = vsel %vm992, %v1136, %v1135
        %v1138 = vrot.slane %v733, 4
        %v1139 = vsel %vm995, %v1138, %v1137
        %v1140 = vrot.slane %v734, 3
        %v1141 = vsel %vm998, %v1140, %v1139
        %v1142 = vrot.slane %v735, 2
        %v1143 = vsel %vm1001, %v1142, %v1141
        %v1144 = vrot.slane %v736, 1
        %v1145 = vsel %vm1004, %v1144, %v1143
        %v1146 = vrot.slane %v738, 7
        %v1147 = vsel %vm986, %v1146, %v737
        %v1148 = vrot.slane %v739, 6
        %v1149 = vsel %vm989, %v1148, %v1147
        %v1150 = vrot.slane %v740, 5
        %v1151 = vsel %vm992, %v1150, %v1149
        %v1152 = vrot.slane %v741, 4
        %v1153 = vsel %vm995, %v1152, %v1151
        %v1154 = vrot.slane %v742, 3
        %v1155 = vsel %vm998, %v1154, %v1153
        %v1156 = vrot.slane %v743, 2
        %v1157 = vsel %vm1001, %v1156, %v1155
        %v1158 = vrot.slane %v744, 1
        %v1159 = vsel %vm1004, %v1158, %v1157
        %v1160 = vrot.slane %v746, 7
        %v1161 = vsel %vm986, %v1160, %v745
        %v1162 = vrot.slane %v747, 6
        %v1163 = vsel %vm989, %v1162, %v1161
        %v1164 = vrot.slane %v748, 5
        %v1165 = vsel %vm992, %v1164, %v1163
        %v1166 = vrot.slane %v749, 4
        %v1167 = vsel %vm995, %v1166, %v1165
        %v1168 = vrot.slane %v750, 3
        %v1169 = vsel %vm998, %v1168, %v1167
        %v1170 = vrot.slane %v751, 2
        %v1171 = vsel %vm1001, %v1170, %v1169
        %v1172 = vrot.slane %v752, 1
        %v1173 = vsel %vm1004, %v1172, %v1171
        %v1174 = vrot.slane %v754, 7
        %v1175 = vsel %vm986, %v1174, %v753
        %v1176 = vrot.slane %v755, 6
        %v1177 = vsel %vm989, %v1176, %v1175
        %v1178 = vrot.slane %v756, 5
        %v1179 = vsel %vm992, %v1178, %v1177
        %v1180 = vrot.slane %v757, 4
        %v1181 = vsel %vm995, %v1180, %v1179
        %v1182 = vrot.slane %v758, 3
        %v1183 = vsel %vm998, %v1182, %v1181
        %v1184 = vrot.slane %v759, 2
        %v1185 = vsel %vm1001, %v1184, %v1183
        %v1186 = vrot.slane %v760, 1
        %v1187 = vsel %vm1004, %v1186, %v1185
        %v1188 = vrot.slane %v762, 7
        %v1189 = vsel %vm986, %v1188, %v761
        %v1190 = vrot.slane %v763, 6
        %v1191 = vsel %vm989, %v1190, %v1189
        %v1192 = vrot.slane %v764, 5
        %v1193 = vsel %vm992, %v1192, %v1191
        %v1194 = vrot.slane %v765, 4
        %v1195 = vsel %vm995, %v1194, %v1193
        %v1196 = vrot.slane %v766, 3
        %v1197 = vsel %vm998, %v1196, %v1195
        %v1198 = vrot.slane %v767, 2
        %v1199 = vsel %vm1001, %v1198, %v1197
        %v1200 = vrot.slane %v768, 1
        %v1201 = vsel %vm1004, %v1200, %v1199
        %v1202 = vrot.slane %v770, 7
        %v1203 = vsel %vm986, %v1202, %v769
        %v1204 = vrot.slane %v771, 6
        %v1205 = vsel %vm989, %v1204, %v1203
        %v1206 = vrot.slane %v772, 5
        %v1207 = vsel %vm992, %v1206, %v1205
        %v1208 = vrot.slane %v773, 4
        %v1209 = vsel %vm995, %v1208, %v1207
        %v1210 = vrot.slane %v774, 3
        %v1211 = vsel %vm998, %v1210, %v1209
        %v1212 = vrot.slane %v775, 2
        %v1213 = vsel %vm1001, %v1212, %v1211
        %v1214 = vrot.slane %v776, 1
        %v1215 = vsel %vm1004, %v1214, %v1213
        %v1232 = vmul.f32 %v780, %v1005
        %v1233 = vmul.f32 %v785, %v1019
        %v1234 = vmul.f32 %v790, %v1033
        %v1235 = vmul.f32 %v795, %v1047
        %v1236 = vmul.f32 %v800, %v1061
        %v1237 = vmul.f32 %v805, %v1075
        %v1238 = vmul.f32 %v810, %v1089
        %v1239 = vmul.f32 %v815, %v1103
        %v1240 = vmul.f32 %v820, %v1117
        %v1241 = vmul.f32 %v825, %v1131
        %v1242 = vmul.f32 %v830, %v1145
        %v1243 = vmul.f32 %v835, %v1159
        %v1244 = vmul.f32 %v840, %v1173
        %v1245 = vmul.f32 %v845, %v1187
        %v1246 = vmul.f32 %v850, %v1201
        %v1247 = vmul.f32 %v855, %v1215
        %v1248 = vadd.f32 %v1232, 0.0
        %v1249 = vadd.f32 %v1233, 0.0
        %v1250 = vadd.f32 %v1234, 0.0
        %v1251 = vadd.f32 %v1235, 0.0
        %v1252 = vadd.f32 %v1236, 0.0
        %v1253 = vadd.f32 %v1237, 0.0
        %v1254 = vadd.f32 %v1238, 0.0
        %v1255 = vadd.f32 %v1239, 0.0
        %v1256 = vadd.f32 %v1240, 0.0
        %v1257 = vadd.f32 %v1241, 0.0
        %v1258 = vadd.f32 %v1242, 0.0
        %v1259 = vadd.f32 %v1243, 0.0
        %v1260 = vadd.f32 %v1244, 0.0
        %v1261 = vadd.f32 %v1245, 0.0
        %v1262 = vadd.f32 %v1246, 0.0
        %v1263 = vadd.f32 %v1247, 0.0
        %1265 = vset.pattern.permute.xlu0 0
        %1266 = vperm.xlu0 %1265, %v633
        %v1267 = vpop.permute.xlu0 %1266
        %1270 = vset.pattern.permute.xlu0 0
        %1271 = vperm.xlu0 %1270, %v634
        %v1272 = vpop.permute.xlu0 %1271
        %1275 = vset.pattern.permute.xlu0 0
        %1276 = vperm.xlu0 %1275, %v635
        %v1277 = vpop.permute.xlu0 %1276
        %1280 = vset.pattern.permute.xlu0 0
        %1281 = vperm.xlu0 %1280, %v636
        %v1282 = vpop.permute.xlu0 %1281
        %1285 = vset.pattern.permute.xlu0 0
        %1286 = vperm.xlu0 %1285, %v637
        %v1287 = vpop.permute.xlu0 %1286
        %1290 = vset.pattern.permute.xlu0 0
        %1291 = vperm.xlu0 %1290, %v638
        %v1292 = vpop.permute.xlu0 %1291
        %1295 = vset.pattern.permute.xlu0 0
        %1296 = vperm.xlu0 %1295, %v639
        %v1297 = vpop.permute.xlu0 %1296
        %1300 = vset.pattern.permute.xlu0 0
        %1301 = vperm.xlu0 %1300, %v640
        %v1302 = vpop.permute.xlu0 %1301
        %1305 = vset.pattern.permute.xlu0 0
        %1306 = vperm.xlu0 %1305, %v641
        %v1307 = vpop.permute.xlu0 %1306
        %1310 = vset.pattern.permute.xlu0 0
        %1311 = vperm.xlu0 %1310, %v642
        %v1312 = vpop.permute.xlu0 %1311
        %1315 = vset.pattern.permute.xlu0 0
        %1316 = vperm.xlu0 %1315, %v643
        %v1317 = vpop.permute.xlu0 %1316
        %1320 = vset.pattern.permute.xlu0 0
        %1321 = vperm.xlu0 %1320, %v644
        %v1322 = vpop.permute.xlu0 %1321
        %1325 = vset.pattern.permute.xlu0 0
        %1326 = vperm.xlu0 %1325, %v645
        %v1327 = vpop.permute.xlu0 %1326
        %1330 = vset.pattern.permute.xlu0 0
        %1331 = vperm.xlu0 %1330, %v646
        %v1332 = vpop.permute.xlu0 %1331
        %1335 = vset.pattern.permute.xlu0 0
        %1336 = vperm.xlu0 %1335, %v647
        %v1337 = vpop.permute.xlu0 %1336
        %1340 = vset.pattern.permute.xlu0 0
        %1341 = vperm.xlu0 %1340, %v648
        %v1342 = vpop.permute.xlu0 %1341
        %v1344 = vmul.f32 %v1267, %v1005
        %v1345 = vmul.f32 %v1272, %v1019
        %v1346 = vmul.f32 %v1277, %v1033
        %v1347 = vmul.f32 %v1282, %v1047
        %v1348 = vmul.f32 %v1287, %v1061
        %v1349 = vmul.f32 %v1292, %v1075
        %v1350 = vmul.f32 %v1297, %v1089
        %v1351 = vmul.f32 %v1302, %v1103
        %v1352 = vmul.f32 %v1307, %v1117
        %v1353 = vmul.f32 %v1312, %v1131
        %v1354 = vmul.f32 %v1317, %v1145
        %v1355 = vmul.f32 %v1322, %v1159
        %v1356 = vmul.f32 %v1327, %v1173
        %v1357 = vmul.f32 %v1332, %v1187
        %v1358 = vmul.f32 %v1337, %v1201
        %v1359 = vmul.f32 %v1342, %v1215
        %v1360 = vadd.f32 %v1344, 0.0
        %v1361 = vadd.f32 %v1345, 0.0
        %v1362 = vadd.f32 %v1346, 0.0
        %v1363 = vadd.f32 %v1347, 0.0
        %v1364 = vadd.f32 %v1348, 0.0
        %v1365 = vadd.f32 %v1349, 0.0
        %v1366 = vadd.f32 %v1350, 0.0
        %v1367 = vadd.f32 %v1351, 0.0
        %v1368 = vadd.f32 %v1352, 0.0
        %v1369 = vadd.f32 %v1353, 0.0
        %v1370 = vadd.f32 %v1354, 0.0
        %v1371 = vadd.f32 %v1355, 0.0
        %v1372 = vadd.f32 %v1356, 0.0
        %v1373 = vadd.f32 %v1357, 0.0
        %v1374 = vadd.f32 %v1358, 0.0
        %v1375 = vadd.f32 %v1359, 0.0
        %v1376 = vld [vmem:[%s610 + $0x1] sm:$0x1]
        %v1377 = vld [vmem:[%s610 + $0x9] sm:$0x1]
        %v1378 = vld [vmem:[%s610 + $0x11] sm:$0x1]
        %v1379 = vld [vmem:[%s610 + $0x19] sm:$0x1]
        %v1380 = vld [vmem:[%s610 + $0x21] sm:$0x1]
        %v1381 = vld [vmem:[%s610 + $0x29] sm:$0x1]
        %v1382 = vld [vmem:[%s610 + $0x31] sm:$0x1]
        %v1383 = vld [vmem:[%s610 + $0x39] sm:$0x1]
        %v1384 = vld [vmem:[%s610 + $0x41] sm:$0x1]
        %v1385 = vld [vmem:[%s610 + $0x49] sm:$0x1]
        %v1386 = vld [vmem:[%s610 + $0x51] sm:$0x1]
        %v1387 = vld [vmem:[%s610 + $0x59] sm:$0x1]
        %v1388 = vld [vmem:[%s610 + $0x61] sm:$0x1]
        %v1389 = vld [vmem:[%s610 + $0x69] sm:$0x1]
        %v1390 = vld [vmem:[%s610 + $0x71] sm:$0x1]
        %v1391 = vld [vmem:[%s610 + $0x79] sm:$0x1]
        %v1392 = vld [vmem:[%s610 + $0x81] sm:$0x1]
        %v1393 = vld [vmem:[%s610 + $0x89] sm:$0x1]
        %v1394 = vld [vmem:[%s610 + $0x91] sm:$0x1]
        %v1395 = vld [vmem:[%s610 + $0x99] sm:$0x1]
        %v1396 = vld [vmem:[%s610 + $0xa1] sm:$0x1]
        %v1397 = vld [vmem:[%s610 + $0xa9] sm:$0x1]
        %v1398 = vld [vmem:[%s610 + $0xb1] sm:$0x1]
        %v1399 = vld [vmem:[%s610 + $0xb9] sm:$0x1]
        %v1400 = vld [vmem:[%s610 + $0xc1] sm:$0x1]
        %v1401 = vld [vmem:[%s610 + $0xc9] sm:$0x1]
        %v1402 = vld [vmem:[%s610 + $0xd1] sm:$0x1]
        %v1403 = vld [vmem:[%s610 + $0xd9] sm:$0x1]
        %v1404 = vld [vmem:[%s610 + $0xe1] sm:$0x1]
        %v1405 = vld [vmem:[%s610 + $0xe9] sm:$0x1]
        %v1406 = vld [vmem:[%s610 + $0xf1] sm:$0x1]
        %v1407 = vld [vmem:[%s610 + $0xf9] sm:$0x1]
        %v1408 = vld [vmem:[%s610 + $0x101] sm:$0x1]
        %v1409 = vld [vmem:[%s610 + $0x109] sm:$0x1]
        %v1410 = vld [vmem:[%s610 + $0x111] sm:$0x1]
        %v1411 = vld [vmem:[%s610 + $0x119] sm:$0x1]
        %v1412 = vld [vmem:[%s610 + $0x121] sm:$0x1]
        %v1413 = vld [vmem:[%s610 + $0x129] sm:$0x1]
        %v1414 = vld [vmem:[%s610 + $0x131] sm:$0x1]
        %v1415 = vld [vmem:[%s610 + $0x139] sm:$0x1]
        %v1416 = vld [vmem:[%s610 + $0x141] sm:$0x1]
        %v1417 = vld [vmem:[%s610 + $0x149] sm:$0x1]
        %v1418 = vld [vmem:[%s610 + $0x151] sm:$0x1]
        %v1419 = vld [vmem:[%s610 + $0x159] sm:$0x1]
        %v1420 = vld [vmem:[%s610 + $0x161] sm:$0x1]
        %v1421 = vld [vmem:[%s610 + $0x169] sm:$0x1]
        %v1422 = vld [vmem:[%s610 + $0x171] sm:$0x1]
        %v1423 = vld [vmem:[%s610 + $0x179] sm:$0x1]
        %v1424 = vld [vmem:[%s610 + $0x181] sm:$0x1]
        %v1425 = vld [vmem:[%s610 + $0x189] sm:$0x1]
        %v1426 = vld [vmem:[%s610 + $0x191] sm:$0x1]
        %v1427 = vld [vmem:[%s610 + $0x199] sm:$0x1]
        %v1428 = vld [vmem:[%s610 + $0x1a1] sm:$0x1]
        %v1429 = vld [vmem:[%s610 + $0x1a9] sm:$0x1]
        %v1430 = vld [vmem:[%s610 + $0x1b1] sm:$0x1]
        %v1431 = vld [vmem:[%s610 + $0x1b9] sm:$0x1]
        %v1432 = vld [vmem:[%s610 + $0x1c1] sm:$0x1]
        %v1433 = vld [vmem:[%s610 + $0x1c9] sm:$0x1]
        %v1434 = vld [vmem:[%s610 + $0x1d1] sm:$0x1]
        %v1435 = vld [vmem:[%s610 + $0x1d9] sm:$0x1]
        %v1436 = vld [vmem:[%s610 + $0x1e1] sm:$0x1]
        %v1437 = vld [vmem:[%s610 + $0x1e9] sm:$0x1]
        %v1438 = vld [vmem:[%s610 + $0x1f1] sm:$0x1]
        %v1439 = vld [vmem:[%s610 + $0x1f9] sm:$0x1]
        %v1440 = vld [vmem:[%s610 + $0x201] sm:$0x1]
        %v1441 = vld [vmem:[%s610 + $0x209] sm:$0x1]
        %v1442 = vld [vmem:[%s610 + $0x211] sm:$0x1]
        %v1443 = vld [vmem:[%s610 + $0x219] sm:$0x1]
        %v1444 = vld [vmem:[%s610 + $0x221] sm:$0x1]
        %v1445 = vld [vmem:[%s610 + $0x229] sm:$0x1]
        %v1446 = vld [vmem:[%s610 + $0x231] sm:$0x1]
        %v1447 = vld [vmem:[%s610 + $0x239] sm:$0x1]
        %v1448 = vld [vmem:[%s610 + $0x241] sm:$0x1]
        %v1449 = vld [vmem:[%s610 + $0x249] sm:$0x1]
        %v1450 = vld [vmem:[%s610 + $0x251] sm:$0x1]
        %v1451 = vld [vmem:[%s610 + $0x259] sm:$0x1]
        %v1452 = vld [vmem:[%s610 + $0x261] sm:$0x1]
        %v1453 = vld [vmem:[%s610 + $0x269] sm:$0x1]
        %v1454 = vld [vmem:[%s610 + $0x271] sm:$0x1]
        %v1455 = vld [vmem:[%s610 + $0x279] sm:$0x1]
        %v1456 = vld [vmem:[%s610 + $0x281] sm:$0x1]
        %v1457 = vld [vmem:[%s610 + $0x289] sm:$0x1]
        %v1458 = vld [vmem:[%s610 + $0x291] sm:$0x1]
        %v1459 = vld [vmem:[%s610 + $0x299] sm:$0x1]
        %v1460 = vld [vmem:[%s610 + $0x2a1] sm:$0x1]
        %v1461 = vld [vmem:[%s610 + $0x2a9] sm:$0x1]
        %v1462 = vld [vmem:[%s610 + $0x2b1] sm:$0x1]
        %v1463 = vld [vmem:[%s610 + $0x2b9] sm:$0x1]
        %v1464 = vld [vmem:[%s610 + $0x2c1] sm:$0x1]
        %v1465 = vld [vmem:[%s610 + $0x2c9] sm:$0x1]
        %v1466 = vld [vmem:[%s610 + $0x2d1] sm:$0x1]
        %v1467 = vld [vmem:[%s610 + $0x2d9] sm:$0x1]
        %v1468 = vld [vmem:[%s610 + $0x2e1] sm:$0x1]
        %v1469 = vld [vmem:[%s610 + $0x2e9] sm:$0x1]
        %v1470 = vld [vmem:[%s610 + $0x2f1] sm:$0x1]
        %v1471 = vld [vmem:[%s610 + $0x2f9] sm:$0x1]
        %v1472 = vld [vmem:[%s610 + $0x301] sm:$0x1]
        %v1473 = vld [vmem:[%s610 + $0x309] sm:$0x1]
        %v1474 = vld [vmem:[%s610 + $0x311] sm:$0x1]
        %v1475 = vld [vmem:[%s610 + $0x319] sm:$0x1]
        %v1476 = vld [vmem:[%s610 + $0x321] sm:$0x1]
        %v1477 = vld [vmem:[%s610 + $0x329] sm:$0x1]
        %v1478 = vld [vmem:[%s610 + $0x331] sm:$0x1]
        %v1479 = vld [vmem:[%s610 + $0x339] sm:$0x1]
        %v1480 = vld [vmem:[%s610 + $0x341] sm:$0x1]
        %v1481 = vld [vmem:[%s610 + $0x349] sm:$0x1]
        %v1482 = vld [vmem:[%s610 + $0x351] sm:$0x1]
        %v1483 = vld [vmem:[%s610 + $0x359] sm:$0x1]
        %v1484 = vld [vmem:[%s610 + $0x361] sm:$0x1]
        %v1485 = vld [vmem:[%s610 + $0x369] sm:$0x1]
        %v1486 = vld [vmem:[%s610 + $0x371] sm:$0x1]
        %v1487 = vld [vmem:[%s610 + $0x379] sm:$0x1]
        %v1488 = vld [vmem:[%s610 + $0x381] sm:$0x1]
        %v1489 = vld [vmem:[%s610 + $0x389] sm:$0x1]
        %v1490 = vld [vmem:[%s610 + $0x391] sm:$0x1]
        %v1491 = vld [vmem:[%s610 + $0x399] sm:$0x1]
        %v1492 = vld [vmem:[%s610 + $0x3a1] sm:$0x1]
        %v1493 = vld [vmem:[%s610 + $0x3a9] sm:$0x1]
        %v1494 = vld [vmem:[%s610 + $0x3b1] sm:$0x1]
        %v1495 = vld [vmem:[%s610 + $0x3b9] sm:$0x1]
        %v1496 = vld [vmem:[%s610 + $0x3c1] sm:$0x1]
        %v1497 = vld [vmem:[%s610 + $0x3c9] sm:$0x1]
        %v1498 = vld [vmem:[%s610 + $0x3d1] sm:$0x1]
        %v1499 = vld [vmem:[%s610 + $0x3d9] sm:$0x1]
        %v1500 = vld [vmem:[%s610 + $0x3e1] sm:$0x1]
        %v1501 = vld [vmem:[%s610 + $0x3e9] sm:$0x1]
        %v1502 = vld [vmem:[%s610 + $0x3f1] sm:$0x1]
        %v1503 = vld [vmem:[%s610 + $0x3f9] sm:$0x1]
        %1504 = vset.pattern.permute.xlu0 1
        %1505 = vperm.xlu0 %1504, %v616
        %v1506 = vpop.permute.xlu0 %1505
        %1508 = vset.pattern.permute.xlu0 1
        %1509 = vperm.xlu0 %1508, %v617
        %v1510 = vpop.permute.xlu0 %1509
        %1512 = vset.pattern.permute.xlu0 1
        %1513 = vperm.xlu0 %1512, %v618
        %v1514 = vpop.permute.xlu0 %1513
        %1516 = vset.pattern.permute.xlu0 1
        %1517 = vperm.xlu0 %1516, %v619
        %v1518 = vpop.permute.xlu0 %1517
        %1520 = vset.pattern.permute.xlu0 1
        %1521 = vperm.xlu0 %1520, %v620
        %v1522 = vpop.permute.xlu0 %1521
        %1524 = vset.pattern.permute.xlu0 1
        %1525 = vperm.xlu0 %1524, %v621
        %v1526 = vpop.permute.xlu0 %1525
        %1528 = vset.pattern.permute.xlu0 1
        %1529 = vperm.xlu0 %1528, %v622
        %v1530 = vpop.permute.xlu0 %1529
        %1532 = vset.pattern.permute.xlu0 1
        %1533 = vperm.xlu0 %1532, %v623
        %v1534 = vpop.permute.xlu0 %1533
        %1536 = vset.pattern.permute.xlu0 1
        %1537 = vperm.xlu0 %1536, %v624
        %v1538 = vpop.permute.xlu0 %1537
        %1540 = vset.pattern.permute.xlu0 1
        %1541 = vperm.xlu0 %1540, %v625
        %v1542 = vpop.permute.xlu0 %1541
        %1544 = vset.pattern.permute.xlu0 1
        %1545 = vperm.xlu0 %1544, %v626
        %v1546 = vpop.permute.xlu0 %1545
        %1548 = vset.pattern.permute.xlu0 1
        %1549 = vperm.xlu0 %1548, %v627
        %v1550 = vpop.permute.xlu0 %1549
        %1552 = vset.pattern.permute.xlu0 1
        %1553 = vperm.xlu0 %1552, %v628
        %v1554 = vpop.permute.xlu0 %1553
        %1556 = vset.pattern.permute.xlu0 1
        %1557 = vperm.xlu0 %1556, %v629
        %v1558 = vpop.permute.xlu0 %1557
        %1560 = vset.pattern.permute.xlu0 1
        %1561 = vperm.xlu0 %1560, %v630
        %v1562 = vpop.permute.xlu0 %1561
        %1564 = vset.pattern.permute.xlu0 1
        %1565 = vperm.xlu0 %1564, %v631
        %v1566 = vpop.permute.xlu0 %1565
        %v1696 = vrot.slane %v1377, 7
        %v1697 = vsel %vm986, %v1696, %v1376
        %v1698 = vrot.slane %v1378, 6
        %v1699 = vsel %vm989, %v1698, %v1697
        %v1700 = vrot.slane %v1379, 5
        %v1701 = vsel %vm992, %v1700, %v1699
        %v1702 = vrot.slane %v1380, 4
        %v1703 = vsel %vm995, %v1702, %v1701
        %v1704 = vrot.slane %v1381, 3
        %v1705 = vsel %vm998, %v1704, %v1703
        %v1706 = vrot.slane %v1382, 2
        %v1707 = vsel %vm1001, %v1706, %v1705
        %v1708 = vrot.slane %v1383, 1
        %v1709 = vsel %vm1004, %v1708, %v1707
        %v1710 = vrot.slane %v1385, 7
        %v1711 = vsel %vm986, %v1710, %v1384
        %v1712 = vrot.slane %v1386, 6
        %v1713 = vsel %vm989, %v1712, %v1711
        %v1714 = vrot.slane %v1387, 5
        %v1715 = vsel %vm992, %v1714, %v1713
        %v1716 = vrot.slane %v1388, 4
        %v1717 = vsel %vm995, %v1716, %v1715
        %v1718 = vrot.slane %v1389, 3
        %v1719 = vsel %vm998, %v1718, %v1717
        %v1720 = vrot.slane %v1390, 2
        %v1721 = vsel %vm1001, %v1720, %v1719
        %v1722 = vrot.slane %v1391, 1
        %v1723 = vsel %vm1004, %v1722, %v1721
        %v1724 = vrot.slane %v1393, 7
        %v1725 = vsel %vm986, %v1724, %v1392
        %v1726 = vrot.slane %v1394, 6
        %v1727 = vsel %vm989, %v1726, %v1725
        %v1728 = vrot.slane %v1395, 5
        %v1729 = vsel %vm992, %v1728, %v1727
        %v1730 = vrot.slane %v1396, 4
        %v1731 = vsel %vm995, %v1730, %v1729
        %v1732 = vrot.slane %v1397, 3
        %v1733 = vsel %vm998, %v1732, %v1731
        %v1734 = vrot.slane %v1398, 2
        %v1735 = vsel %vm1001, %v1734, %v1733
        %v1736 = vrot.slane %v1399, 1
        %v1737 = vsel %vm1004, %v1736, %v1735
        %v1738 = vrot.slane %v1401, 7
        %v1739 = vsel %vm986, %v1738, %v1400
        %v1740 = vrot.slane %v1402, 6
        %v1741 = vsel %vm989, %v1740, %v1739
        %v1742 = vrot.slane %v1403, 5
        %v1743 = vsel %vm992, %v1742, %v1741
        %v1744 = vrot.slane %v1404, 4
        %v1745 = vsel %vm995, %v1744, %v1743
        %v1746 = vrot.slane %v1405, 3
        %v1747 = vsel %vm998, %v1746, %v1745
        %v1748 = vrot.slane %v1406, 2
        %v1749 = vsel %vm1001, %v1748, %v1747
        %v1750 = vrot.slane %v1407, 1
        %v1751 = vsel %vm1004, %v1750, %v1749
        %v1752 = vrot.slane %v1409, 7
        %v1753 = vsel %vm986, %v1752, %v1408
        %v1754 = vrot.slane %v1410, 6
        %v1755 = vsel %vm989, %v1754, %v1753
        %v1756 = vrot.slane %v1411, 5
        %v1757 = vsel %vm992, %v1756, %v1755
        %v1758 = vrot.slane %v1412, 4
        %v1759 = vsel %vm995, %v1758, %v1757
        %v1760 = vrot.slane %v1413, 3
        %v1761 = vsel %vm998, %v1760, %v1759
        %v1762 = vrot.slane %v1414, 2
        %v1763 = vsel %vm1001, %v1762, %v1761
        %v1764 = vrot.slane %v1415, 1
        %v1765 = vsel %vm1004, %v1764, %v1763
        %v1766 = vrot.slane %v1417, 7
        %v1767 = vsel %vm986, %v1766, %v1416
        %v1768 = vrot.slane %v1418, 6
        %v1769 = vsel %vm989, %v1768, %v1767
        %v1770 = vrot.slane %v1419, 5
        %v1771 = vsel %vm992, %v1770, %v1769
        %v1772 = vrot.slane %v1420, 4
        %v1773 = vsel %vm995, %v1772, %v1771
        %v1774 = vrot.slane %v1421, 3
        %v1775 = vsel %vm998, %v1774, %v1773
        %v1776 = vrot.slane %v1422, 2
        %v1777 = vsel %vm1001, %v1776, %v1775
        %v1778 = vrot.slane %v1423, 1
        %v1779 = vsel %vm1004, %v1778, %v1777
        %v1780 = vrot.slane %v1425, 7
        %v1781 = vsel %vm986, %v1780, %v1424
        %v1782 = vrot.slane %v1426, 6
        %v1783 = vsel %vm989, %v1782, %v1781
        %v1784 = vrot.slane %v1427, 5
        %v1785 = vsel %vm992, %v1784, %v1783
        %v1786 = vrot.slane %v1428, 4
        %v1787 = vsel %vm995, %v1786, %v1785
        %v1788 = vrot.slane %v1429, 3
        %v1789 = vsel %vm998, %v1788, %v1787
        %v1790 = vrot.slane %v1430, 2
        %v1791 = vsel %vm1001, %v1790, %v1789
        %v1792 = vrot.slane %v1431, 1
        %v1793 = vsel %vm1004, %v1792, %v1791
        %v1794 = vrot.slane %v1433, 7
        %v1795 = vsel %vm986, %v1794, %v1432
        %v1796 = vrot.slane %v1434, 6
        %v1797 = vsel %vm989, %v1796, %v1795
        %v1798 = vrot.slane %v1435, 5
        %v1799 = vsel %vm992, %v1798, %v1797
        %v1800 = vrot.slane %v1436, 4
        %v1801 = vsel %vm995, %v1800, %v1799
        %v1802 = vrot.slane %v1437, 3
        %v1803 = vsel %vm998, %v1802, %v1801
        %v1804 = vrot.slane %v1438, 2
        %v1805 = vsel %vm1001, %v1804, %v1803
        %v1806 = vrot.slane %v1439, 1
        %v1807 = vsel %vm1004, %v1806, %v1805
        %v1808 = vrot.slane %v1441, 7
        %v1809 = vsel %vm986, %v1808, %v1440
        %v1810 = vrot.slane %v1442, 6
        %v1811 = vsel %vm989, %v1810, %v1809
        %v1812 = vrot.slane %v1443, 5
        %v1813 = vsel %vm992, %v1812, %v1811
        %v1814 = vrot.slane %v1444, 4
        %v1815 = vsel %vm995, %v1814, %v1813
        %v1816 = vrot.slane %v1445, 3
        %v1817 = vsel %vm998, %v1816, %v1815
        %v1818 = vrot.slane %v1446, 2
        %v1819 = vsel %vm1001, %v1818, %v1817
        %v1820 = vrot.slane %v1447, 1
        %v1821 = vsel %vm1004, %v1820, %v1819
        %v1822 = vrot.slane %v1449, 7
        %v1823 = vsel %vm986, %v1822, %v1448
        %v1824 = vrot.slane %v1450, 6
        %v1825 = vsel %vm989, %v1824, %v1823
        %v1826 = vrot.slane %v1451, 5
        %v1827 = vsel %vm992, %v1826, %v1825
        %v1828 = vrot.slane %v1452, 4
        %v1829 = vsel %vm995, %v1828, %v1827
        %v1830 = vrot.slane %v1453, 3
        %v1831 = vsel %vm998, %v1830, %v1829
        %v1832 = vrot.slane %v1454, 2
        %v1833 = vsel %vm1001, %v1832, %v1831
        %v1834 = vrot.slane %v1455, 1
        %v1835 = vsel %vm1004, %v1834, %v1833
        %v1836 = vrot.slane %v1457, 7
        %v1837 = vsel %vm986, %v1836, %v1456
        %v1838 = vrot.slane %v1458, 6
        %v1839 = vsel %vm989, %v1838, %v1837
        %v1840 = vrot.slane %v1459, 5
        %v1841 = vsel %vm992, %v1840, %v1839
        %v1842 = vrot.slane %v1460, 4
        %v1843 = vsel %vm995, %v1842, %v1841
        %v1844 = vrot.slane %v1461, 3
        %v1845 = vsel %vm998, %v1844, %v1843
        %v1846 = vrot.slane %v1462, 2
        %v1847 = vsel %vm1001, %v1846, %v1845
        %v1848 = vrot.slane %v1463, 1
        %v1849 = vsel %vm1004, %v1848, %v1847
        %v1850 = vrot.slane %v1465, 7
        %v1851 = vsel %vm986, %v1850, %v1464
        %v1852 = vrot.slane %v1466, 6
        %v1853 = vsel %vm989, %v1852, %v1851
        %v1854 = vrot.slane %v1467, 5
        %v1855 = vsel %vm992, %v1854, %v1853
        %v1856 = vrot.slane %v1468, 4
        %v1857 = vsel %vm995, %v1856, %v1855
        %v1858 = vrot.slane %v1469, 3
        %v1859 = vsel %vm998, %v1858, %v1857
        %v1860 = vrot.slane %v1470, 2
        %v1861 = vsel %vm1001, %v1860, %v1859
        %v1862 = vrot.slane %v1471, 1
        %v1863 = vsel %vm1004, %v1862, %v1861
        %v1864 = vrot.slane %v1473, 7
        %v1865 = vsel %vm986, %v1864, %v1472
        %v1866 = vrot.slane %v1474, 6
        %v1867 = vsel %vm989, %v1866, %v1865
        %v1868 = vrot.slane %v1475, 5
        %v1869 = vsel %vm992, %v1868, %v1867
        %v1870 = vrot.slane %v1476, 4
        %v1871 = vsel %vm995, %v1870, %v1869
        %v1872 = vrot.slane %v1477, 3
        %v1873 = vsel %vm998, %v1872, %v1871
        %v1874 = vrot.slane %v1478, 2
        %v1875 = vsel %vm1001, %v1874, %v1873
        %v1876 = vrot.slane %v1479, 1
        %v1877 = vsel %vm1004, %v1876, %v1875
        %v1878 = vrot.slane %v1481, 7
        %v1879 = vsel %vm986, %v1878, %v1480
        %v1880 = vrot.slane %v1482, 6
        %v1881 = vsel %vm989, %v1880, %v1879
        %v1882 = vrot.slane %v1483, 5
        %v1883 = vsel %vm992, %v1882, %v1881
        %v1884 = vrot.slane %v1484, 4
        %v1885 = vsel %vm995, %v1884, %v1883
        %v1886 = vrot.slane %v1485, 3
        %v1887 = vsel %vm998, %v1886, %v1885
        %v1888 = vrot.slane %v1486, 2
        %v1889 = vsel %vm1001, %v1888, %v1887
        %v1890 = vrot.slane %v1487, 1
        %v1891 = vsel %vm1004, %v1890, %v1889
        %v1892 = vrot.slane %v1489, 7
        %v1893 = vsel %vm986, %v1892, %v1488
        %v1894 = vrot.slane %v1490, 6
        %v1895 = vsel %vm989, %v1894, %v1893
        %v1896 = vrot.slane %v1491, 5
        %v1897 = vsel %vm992, %v1896, %v1895
        %v1898 = vrot.slane %v1492, 4
        %v1899 = vsel %vm995, %v1898, %v1897
        %v1900 = vrot.slane %v1493, 3
        %v1901 = vsel %vm998, %v1900, %v1899
        %v1902 = vrot.slane %v1494, 2
        %v1903 = vsel %vm1001, %v1902, %v1901
        %v1904 = vrot.slane %v1495, 1
        %v1905 = vsel %vm1004, %v1904, %v1903
        %v1906 = vrot.slane %v1497, 7
        %v1907 = vsel %vm986, %v1906, %v1496
        %v1908 = vrot.slane %v1498, 6
        %v1909 = vsel %vm989, %v1908, %v1907
        %v1910 = vrot.slane %v1499, 5
        %v1911 = vsel %vm992, %v1910, %v1909
        %v1912 = vrot.slane %v1500, 4
        %v1913 = vsel %vm995, %v1912, %v1911
        %v1914 = vrot.slane %v1501, 3
        %v1915 = vsel %vm998, %v1914, %v1913
        %v1916 = vrot.slane %v1502, 2
        %v1917 = vsel %vm1001, %v1916, %v1915
        %v1918 = vrot.slane %v1503, 1
        %v1919 = vsel %vm1004, %v1918, %v1917
        %v1936 = vmul.f32 %v1506, %v1709
        %v1937 = vmul.f32 %v1510, %v1723
        %v1938 = vmul.f32 %v1514, %v1737
        %v1939 = vmul.f32 %v1518, %v1751
        %v1940 = vmul.f32 %v1522, %v1765
        %v1941 = vmul.f32 %v1526, %v1779
        %v1942 = vmul.f32 %v1530, %v1793
        %v1943 = vmul.f32 %v1534, %v1807
        %v1944 = vmul.f32 %v1538, %v1821
        %v1945 = vmul.f32 %v1542, %v1835
        %v1946 = vmul.f32 %v1546, %v1849
        %v1947 = vmul.f32 %v1550, %v1863
        %v1948 = vmul.f32 %v1554, %v1877
        %v1949 = vmul.f32 %v1558, %v1891
        %v1950 = vmul.f32 %v1562, %v1905
        %v1951 = vmul.f32 %v1566, %v1919
        %v1952 = vadd.f32 %v1248, %v1936
        %v1953 = vadd.f32 %v1249, %v1937
        %v1954 = vadd.f32 %v1250, %v1938
        %v1955 = vadd.f32 %v1251, %v1939
        %v1956 = vadd.f32 %v1252, %v1940
        %v1957 = vadd.f32 %v1253, %v1941
        %v1958 = vadd.f32 %v1254, %v1942
        %v1959 = vadd.f32 %v1255, %v1943
        %v1960 = vadd.f32 %v1256, %v1944
        %v1961 = vadd.f32 %v1257, %v1945
        %v1962 = vadd.f32 %v1258, %v1946
        %v1963 = vadd.f32 %v1259, %v1947
        %v1964 = vadd.f32 %v1260, %v1948
        %v1965 = vadd.f32 %v1261, %v1949
        %v1966 = vadd.f32 %v1262, %v1950
        %v1967 = vadd.f32 %v1263, %v1951
        %1968 = vset.pattern.permute.xlu0 1
        %1969 = vperm.xlu0 %1968, %v633
        %v1970 = vpop.permute.xlu0 %1969
        %1972 = vset.pattern.permute.xlu0 1
        %1973 = vperm.xlu0 %1972, %v634
        %v1974 = vpop.permute.xlu0 %1973
        %1976 = vset.pattern.permute.xlu0 1
        %1977 = vperm.xlu0 %1976, %v635
        %v1978 = vpop.permute.xlu0 %1977
        %1980 = vset.pattern.permute.xlu0 1
        %1981 = vperm.xlu0 %1980, %v636
        %v1982 = vpop.permute.xlu0 %1981
        %1984 = vset.pattern.permute.xlu0 1
        %1985 = vperm.xlu0 %1984, %v637
        %v1986 = vpop.permute.xlu0 %1985
        %1988 = vset.pattern.permute.xlu0 1
        %1989 = vperm.xlu0 %1988, %v638
        %v1990 = vpop.permute.xlu0 %1989
        %1992 = vset.pattern.permute.xlu0 1
        %1993 = vperm.xlu0 %1992, %v639
        %v1994 = vpop.permute.xlu0 %1993
        %1996 = vset.pattern.permute.xlu0 1
        %1997 = vperm.xlu0 %1996, %v640
        %v1998 = vpop.permute.xlu0 %1997
        %2000 = vset.pattern.permute.xlu0 1
        %2001 = vperm.xlu0 %2000, %v641
        %v2002 = vpop.permute.xlu0 %2001
        %2004 = vset.pattern.permute.xlu0 1
        %2005 = vperm.xlu0 %2004, %v642
        %v2006 = vpop.permute.xlu0 %2005
        %2008 = vset.pattern.permute.xlu0 1
        %2009 = vperm.xlu0 %2008, %v643
        %v2010 = vpop.permute.xlu0 %2009
        %2012 = vset.pattern.permute.xlu0 1
        %2013 = vperm.xlu0 %2012, %v644
        %v2014 = vpop.permute.xlu0 %2013
        %2016 = vset.pattern.permute.xlu0 1
        %2017 = vperm.xlu0 %2016, %v645
        %v2018 = vpop.permute.xlu0 %2017
        %2020 = vset.pattern.permute.xlu0 1
        %2021 = vperm.xlu0 %2020, %v646
        %v2022 = vpop.permute.xlu0 %2021
        %2024 = vset.pattern.permute.xlu0 1
        %2025 = vperm.xlu0 %2024, %v647
        %v2026 = vpop.permute.xlu0 %2025
        %2028 = vset.pattern.permute.xlu0 1
        %2029 = vperm.xlu0 %2028, %v648
        %v2030 = vpop.permute.xlu0 %2029
        %v2032 = vmul.f32 %v1970, %v1709
        %v2033 = vmul.f32 %v1974, %v1723
        %v2034 = vmul.f32 %v1978, %v1737
        %v2035 = vmul.f32 %v1982, %v1751
        %v2036 = vmul.f32 %v1986, %v1765
        %v2037 = vmul.f32 %v1990, %v1779
        %v2038 = vmul.f32 %v1994, %v1793
        %v2039 = vmul.f32 %v1998, %v1807
        %v2040 = vmul.f32 %v2002, %v1821
        %v2041 = vmul.f32 %v2006, %v1835
        %v2042 = vmul.f32 %v2010, %v1849
        %v2043 = vmul.f32 %v2014, %v1863
        %v2044 = vmul.f32 %v2018, %v1877
        %v2045 = vmul.f32 %v2022, %v1891
        %v2046 = vmul.f32 %v2026, %v1905
        %v2047 = vmul.f32 %v2030, %v1919
        %v2048 = vadd.f32 %v1360, %v2032
        %v2049 = vadd.f32 %v1361, %v2033
        %v2050 = vadd.f32 %v1362, %v2034
        %v2051 = vadd.f32 %v1363, %v2035
        %v2052 = vadd.f32 %v1364, %v2036
        %v2053 = vadd.f32 %v1365, %v2037
        %v2054 = vadd.f32 %v1366, %v2038
        %v2055 = vadd.f32 %v1367, %v2039
        %v2056 = vadd.f32 %v1368, %v2040
        %v2057 = vadd.f32 %v1369, %v2041
        %v2058 = vadd.f32 %v1370, %v2042
        %v2059 = vadd.f32 %v1371, %v2043
        %v2060 = vadd.f32 %v1372, %v2044
        %v2061 = vadd.f32 %v1373, %v2045
        %v2062 = vadd.f32 %v1374, %v2046
        %v2063 = vadd.f32 %v1375, %v2047
        %v2064 = vld [vmem:[%s610 + $0x2] sm:$0x1]
        %v2065 = vld [vmem:[%s610 + $0xa] sm:$0x1]
        %v2066 = vld [vmem:[%s610 + $0x12] sm:$0x1]
        %v2067 = vld [vmem:[%s610 + $0x1a] sm:$0x1]
        %v2068 = vld [vmem:[%s610 + $0x22] sm:$0x1]
        %v2069 = vld [vmem:[%s610 + $0x2a] sm:$0x1]
        %v2070 = vld [vmem:[%s610 + $0x32] sm:$0x1]
        %v2071 = vld [vmem:[%s610 + $0x3a] sm:$0x1]
        %v2072 = vld [vmem:[%s610 + $0x42] sm:$0x1]
        %v2073 = vld [vmem:[%s610 + $0x4a] sm:$0x1]
        %v2074 = vld [vmem:[%s610 + $0x52] sm:$0x1]
        %v2075 = vld [vmem:[%s610 + $0x5a] sm:$0x1]
        %v2076 = vld [vmem:[%s610 + $0x62] sm:$0x1]
        %v2077 = vld [vmem:[%s610 + $0x6a] sm:$0x1]
        %v2078 = vld [vmem:[%s610 + $0x72] sm:$0x1]
        %v2079 = vld [vmem:[%s610 + $0x7a] sm:$0x1]
        %v2080 = vld [vmem:[%s610 + $0x82] sm:$0x1]
        %v2081 = vld [vmem:[%s610 + $0x8a] sm:$0x1]
        %v2082 = vld [vmem:[%s610 + $0x92] sm:$0x1]
        %v2083 = vld [vmem:[%s610 + $0x9a] sm:$0x1]
        %v2084 = vld [vmem:[%s610 + $0xa2] sm:$0x1]
        %v2085 = vld [vmem:[%s610 + $0xaa] sm:$0x1]
        %v2086 = vld [vmem:[%s610 + $0xb2] sm:$0x1]
        %v2087 = vld [vmem:[%s610 + $0xba] sm:$0x1]
        %v2088 = vld [vmem:[%s610 + $0xc2] sm:$0x1]
        %v2089 = vld [vmem:[%s610 + $0xca] sm:$0x1]
        %v2090 = vld [vmem:[%s610 + $0xd2] sm:$0x1]
        %v2091 = vld [vmem:[%s610 + $0xda] sm:$0x1]
        %v2092 = vld [vmem:[%s610 + $0xe2] sm:$0x1]
        %v2093 = vld [vmem:[%s610 + $0xea] sm:$0x1]
        %v2094 = vld [vmem:[%s610 + $0xf2] sm:$0x1]
        %v2095 = vld [vmem:[%s610 + $0xfa] sm:$0x1]
        %v2096 = vld [vmem:[%s610 + $0x102] sm:$0x1]
        %v2097 = vld [vmem:[%s610 + $0x10a] sm:$0x1]
        %v2098 = vld [vmem:[%s610 + $0x112] sm:$0x1]
        %v2099 = vld [vmem:[%s610 + $0x11a] sm:$0x1]
        %v2100 = vld [vmem:[%s610 + $0x122] sm:$0x1]
        %v2101 = vld [vmem:[%s610 + $0x12a] sm:$0x1]
        %v2102 = vld [vmem:[%s610 + $0x132] sm:$0x1]
        %v2103 = vld [vmem:[%s610 + $0x13a] sm:$0x1]
        %v2104 = vld [vmem:[%s610 + $0x142] sm:$0x1]
        %v2105 = vld [vmem:[%s610 + $0x14a] sm:$0x1]
        %v2106 = vld [vmem:[%s610 + $0x152] sm:$0x1]
        %v2107 = vld [vmem:[%s610 + $0x15a] sm:$0x1]
        %v2108 = vld [vmem:[%s610 + $0x162] sm:$0x1]
        %v2109 = vld [vmem:[%s610 + $0x16a] sm:$0x1]
        %v2110 = vld [vmem:[%s610 + $0x172] sm:$0x1]
        %v2111 = vld [vmem:[%s610 + $0x17a] sm:$0x1]
        %v2112 = vld [vmem:[%s610 + $0x182] sm:$0x1]
        %v2113 = vld [vmem:[%s610 + $0x18a] sm:$0x1]
        %v2114 = vld [vmem:[%s610 + $0x192] sm:$0x1]
        %v2115 = vld [vmem:[%s610 + $0x19a] sm:$0x1]
        %v2116 = vld [vmem:[%s610 + $0x1a2] sm:$0x1]
        %v2117 = vld [vmem:[%s610 + $0x1aa] sm:$0x1]
        %v2118 = vld [vmem:[%s610 + $0x1b2] sm:$0x1]
        %v2119 = vld [vmem:[%s610 + $0x1ba] sm:$0x1]
        %v2120 = vld [vmem:[%s610 + $0x1c2] sm:$0x1]
        %v2121 = vld [vmem:[%s610 + $0x1ca] sm:$0x1]
        %v2122 = vld [vmem:[%s610 + $0x1d2] sm:$0x1]
        %v2123 = vld [vmem:[%s610 + $0x1da] sm:$0x1]
        %v2124 = vld [vmem:[%s610 + $0x1e2] sm:$0x1]
        %v2125 = vld [vmem:[%s610 + $0x1ea] sm:$0x1]
        %v2126 = vld [vmem:[%s610 + $0x1f2] sm:$0x1]
        %v2127 = vld [vmem:[%s610 + $0x1fa] sm:$0x1]
        %v2128 = vld [vmem:[%s610 + $0x202] sm:$0x1]
        %v2129 = vld [vmem:[%s610 + $0x20a] sm:$0x1]
        %v2130 = vld [vmem:[%s610 + $0x212] sm:$0x1]
        %v2131 = vld [vmem:[%s610 + $0x21a] sm:$0x1]
        %v2132 = vld [vmem:[%s610 + $0x222] sm:$0x1]
        %v2133 = vld [vmem:[%s610 + $0x22a] sm:$0x1]
        %v2134 = vld [vmem:[%s610 + $0x232] sm:$0x1]
        %v2135 = vld [vmem:[%s610 + $0x23a] sm:$0x1]
        %v2136 = vld [vmem:[%s610 + $0x242] sm:$0x1]
        %v2137 = vld [vmem:[%s610 + $0x24a] sm:$0x1]
        %v2138 = vld [vmem:[%s610 + $0x252] sm:$0x1]
        %v2139 = vld [vmem:[%s610 + $0x25a] sm:$0x1]
        %v2140 = vld [vmem:[%s610 + $0x262] sm:$0x1]
        %v2141 = vld [vmem:[%s610 + $0x26a] sm:$0x1]
        %v2142 = vld [vmem:[%s610 + $0x272] sm:$0x1]
        %v2143 = vld [vmem:[%s610 + $0x27a] sm:$0x1]
        %v2144 = vld [vmem:[%s610 + $0x282] sm:$0x1]
        %v2145 = vld [vmem:[%s610 + $0x28a] sm:$0x1]
        %v2146 = vld [vmem:[%s610 + $0x292] sm:$0x1]
        %v2147 = vld [vmem:[%s610 + $0x29a] sm:$0x1]
        %v2148 = vld [vmem:[%s610 + $0x2a2] sm:$0x1]
        %v2149 = vld [vmem:[%s610 + $0x2aa] sm:$0x1]
        %v2150 = vld [vmem:[%s610 + $0x2b2] sm:$0x1]
        %v2151 = vld [vmem:[%s610 + $0x2ba] sm:$0x1]
        %v2152 = vld [vmem:[%s610 + $0x2c2] sm:$0x1]
        %v2153 = vld [vmem:[%s610 + $0x2ca] sm:$0x1]
        %v2154 = vld [vmem:[%s610 + $0x2d2] sm:$0x1]
        %v2155 = vld [vmem:[%s610 + $0x2da] sm:$0x1]
        %v2156 = vld [vmem:[%s610 + $0x2e2] sm:$0x1]
        %v2157 = vld [vmem:[%s610 + $0x2ea] sm:$0x1]
        %v2158 = vld [vmem:[%s610 + $0x2f2] sm:$0x1]
        %v2159 = vld [vmem:[%s610 + $0x2fa] sm:$0x1]
        %v2160 = vld [vmem:[%s610 + $0x302] sm:$0x1]
        %v2161 = vld [vmem:[%s610 + $0x30a] sm:$0x1]
        %v2162 = vld [vmem:[%s610 + $0x312] sm:$0x1]
        %v2163 = vld [vmem:[%s610 + $0x31a] sm:$0x1]
        %v2164 = vld [vmem:[%s610 + $0x322] sm:$0x1]
        %v2165 = vld [vmem:[%s610 + $0x32a] sm:$0x1]
        %v2166 = vld [vmem:[%s610 + $0x332] sm:$0x1]
        %v2167 = vld [vmem:[%s610 + $0x33a] sm:$0x1]
        %v2168 = vld [vmem:[%s610 + $0x342] sm:$0x1]
        %v2169 = vld [vmem:[%s610 + $0x34a] sm:$0x1]
        %v2170 = vld [vmem:[%s610 + $0x352] sm:$0x1]
        %v2171 = vld [vmem:[%s610 + $0x35a] sm:$0x1]
        %v2172 = vld [vmem:[%s610 + $0x362] sm:$0x1]
        %v2173 = vld [vmem:[%s610 + $0x36a] sm:$0x1]
        %v2174 = vld [vmem:[%s610 + $0x372] sm:$0x1]
        %v2175 = vld [vmem:[%s610 + $0x37a] sm:$0x1]
        %v2176 = vld [vmem:[%s610 + $0x382] sm:$0x1]
        %v2177 = vld [vmem:[%s610 + $0x38a] sm:$0x1]
        %v2178 = vld [vmem:[%s610 + $0x392] sm:$0x1]
        %v2179 = vld [vmem:[%s610 + $0x39a] sm:$0x1]
        %v2180 = vld [vmem:[%s610 + $0x3a2] sm:$0x1]
        %v2181 = vld [vmem:[%s610 + $0x3aa] sm:$0x1]
        %v2182 = vld [vmem:[%s610 + $0x3b2] sm:$0x1]
        %v2183 = vld [vmem:[%s610 + $0x3ba] sm:$0x1]
        %v2184 = vld [vmem:[%s610 + $0x3c2] sm:$0x1]
        %v2185 = vld [vmem:[%s610 + $0x3ca] sm:$0x1]
        %v2186 = vld [vmem:[%s610 + $0x3d2] sm:$0x1]
        %v2187 = vld [vmem:[%s610 + $0x3da] sm:$0x1]
        %v2188 = vld [vmem:[%s610 + $0x3e2] sm:$0x1]
        %v2189 = vld [vmem:[%s610 + $0x3ea] sm:$0x1]
        %v2190 = vld [vmem:[%s610 + $0x3f2] sm:$0x1]
        %v2191 = vld [vmem:[%s610 + $0x3fa] sm:$0x1]
        %2192 = vset.pattern.permute.xlu0 2
        %2193 = vperm.xlu0 %2192, %v616
        %v2194 = vpop.permute.xlu0 %2193
        %2196 = vset.pattern.permute.xlu0 2
        %2197 = vperm.xlu0 %2196, %v617
        %v2198 = vpop.permute.xlu0 %2197
        %2200 = vset.pattern.permute.xlu0 2
        %2201 = vperm.xlu0 %2200, %v618
        %v2202 = vpop.permute.xlu0 %2201
        %2204 = vset.pattern.permute.xlu0 2
        %2205 = vperm.xlu0 %2204, %v619
        %v2206 = vpop.permute.xlu0 %2205
        %2208 = vset.pattern.permute.xlu0 2
        %2209 = vperm.xlu0 %2208, %v620
        %v2210 = vpop.permute.xlu0 %2209
        %2212 = vset.pattern.permute.xlu0 2
        %2213 = vperm.xlu0 %2212, %v621
        %v2214 = vpop.permute.xlu0 %2213
        %2216 = vset.pattern.permute.xlu0 2
        %2217 = vperm.xlu0 %2216, %v622
        %v2218 = vpop.permute.xlu0 %2217
        %2220 = vset.pattern.permute.xlu0 2
        %2221 = vperm.xlu0 %2220, %v623
        %v2222 = vpop.permute.xlu0 %2221
        %2224 = vset.pattern.permute.xlu0 2
        %2225 = vperm.xlu0 %2224, %v624
        %v2226 = vpop.permute.xlu0 %2225
        %2228 = vset.pattern.permute.xlu0 2
        %2229 = vperm.xlu0 %2228, %v625
        %v2230 = vpop.permute.xlu0 %2229
        %2232 = vset.pattern.permute.xlu0 2
        %2233 = vperm.xlu0 %2232, %v626
        %v2234 = vpop.permute.xlu0 %2233
        %2236 = vset.pattern.permute.xlu0 2
        %2237 = vperm.xlu0 %2236, %v627
        %v2238 = vpop.permute.xlu0 %2237
        %2240 = vset.pattern.permute.xlu0 2
        %2241 = vperm.xlu0 %2240, %v628
        %v2242 = vpop.permute.xlu0 %2241
        %2244 = vset.pattern.permute.xlu0 2
        %2245 = vperm.xlu0 %2244, %v629
        %v2246 = vpop.permute.xlu0 %2245
        %2248 = vset.pattern.permute.xlu0 2
        %2249 = vperm.xlu0 %2248, %v630
        %v2250 = vpop.permute.xlu0 %2249
        %2252 = vset.pattern.permute.xlu0 2
        %2253 = vperm.xlu0 %2252, %v631
        %v2254 = vpop.permute.xlu0 %2253
        %v2384 = vrot.slane %v2065, 7
        %v2385 = vsel %vm986, %v2384, %v2064
        %v2386 = vrot.slane %v2066, 6
        %v2387 = vsel %vm989, %v2386, %v2385
        %v2388 = vrot.slane %v2067, 5
        %v2389 = vsel %vm992, %v2388, %v2387
        %v2390 = vrot.slane %v2068, 4
        %v2391 = vsel %vm995, %v2390, %v2389
        %v2392 = vrot.slane %v2069, 3
        %v2393 = vsel %vm998, %v2392, %v2391
        %v2394 = vrot.slane %v2070, 2
        %v2395 = vsel %vm1001, %v2394, %v2393
        %v2396 = vrot.slane %v2071, 1
        %v2397 = vsel %vm1004, %v2396, %v2395
        %v2398 = vrot.slane %v2073, 7
        %v2399 = vsel %vm986, %v2398, %v2072
        %v2400 = vrot.slane %v2074, 6
        %v2401 = vsel %vm989, %v2400, %v2399
        %v2402 = vrot.slane %v2075, 5
        %v2403 = vsel %vm992, %v2402, %v2401
        %v2404 = vrot.slane %v2076, 4
        %v2405 = vsel %vm995, %v2404, %v2403
        %v2406 = vrot.slane %v2077, 3
        %v2407 = vsel %vm998, %v2406, %v2405
        %v2408 = vrot.slane %v2078, 2
        %v2409 = vsel %vm1001, %v2408, %v2407
        %v2410 = vrot.slane %v2079, 1
        %v2411 = vsel %vm1004, %v2410, %v2409
        %v2412 = vrot.slane %v2081, 7
        %v2413 = vsel %vm986, %v2412, %v2080
        %v2414 = vrot.slane %v2082, 6
        %v2415 = vsel %vm989, %v2414, %v2413
        %v2416 = vrot.slane %v2083, 5
        %v2417 = vsel %vm992, %v2416, %v2415
        %v2418 = vrot.slane %v2084, 4
        %v2419 = vsel %vm995, %v2418, %v2417
        %v2420 = vrot.slane %v2085, 3
        %v2421 = vsel %vm998, %v2420, %v2419
        %v2422 = vrot.slane %v2086, 2
        %v2423 = vsel %vm1001, %v2422, %v2421
        %v2424 = vrot.slane %v2087, 1
        %v2425 = vsel %vm1004, %v2424, %v2423
        %v2426 = vrot.slane %v2089, 7
        %v2427 = vsel %vm986, %v2426, %v2088
        %v2428 = vrot.slane %v2090, 6
        %v2429 = vsel %vm989, %v2428, %v2427
        %v2430 = vrot.slane %v2091, 5
        %v2431 = vsel %vm992, %v2430, %v2429
        %v2432 = vrot.slane %v2092, 4
        %v2433 = vsel %vm995, %v2432, %v2431
        %v2434 = vrot.slane %v2093, 3
        %v2435 = vsel %vm998, %v2434, %v2433
        %v2436 = vrot.slane %v2094, 2
        %v2437 = vsel %vm1001, %v2436, %v2435
        %v2438 = vrot.slane %v2095, 1
        %v2439 = vsel %vm1004, %v2438, %v2437
        %v2440 = vrot.slane %v2097, 7
        %v2441 = vsel %vm986, %v2440, %v2096
        %v2442 = vrot.slane %v2098, 6
        %v2443 = vsel %vm989, %v2442, %v2441
        %v2444 = vrot.slane %v2099, 5
        %v2445 = vsel %vm992, %v2444, %v2443
        %v2446 = vrot.slane %v2100, 4
        %v2447 = vsel %vm995, %v2446, %v2445
        %v2448 = vrot.slane %v2101, 3
        %v2449 = vsel %vm998, %v2448, %v2447
        %v2450 = vrot.slane %v2102, 2
        %v2451 = vsel %vm1001, %v2450, %v2449
        %v2452 = vrot.slane %v2103, 1
        %v2453 = vsel %vm1004, %v2452, %v2451
        %v2454 = vrot.slane %v2105, 7
        %v2455 = vsel %vm986, %v2454, %v2104
        %v2456 = vrot.slane %v2106, 6
        %v2457 = vsel %vm989, %v2456, %v2455
        %v2458 = vrot.slane %v2107, 5
        %v2459 = vsel %vm992, %v2458, %v2457
        %v2460 = vrot.slane %v2108, 4
        %v2461 = vsel %vm995, %v2460, %v2459
        %v2462 = vrot.slane %v2109, 3
        %v2463 = vsel %vm998, %v2462, %v2461
        %v2464 = vrot.slane %v2110, 2
        %v2465 = vsel %vm1001, %v2464, %v2463
        %v2466 = vrot.slane %v2111, 1
        %v2467 = vsel %vm1004, %v2466, %v2465
        %v2468 = vrot.slane %v2113, 7
        %v2469 = vsel %vm986, %v2468, %v2112
        %v2470 = vrot.slane %v2114, 6
        %v2471 = vsel %vm989, %v2470, %v2469
        %v2472 = vrot.slane %v2115, 5
        %v2473 = vsel %vm992, %v2472, %v2471
        %v2474 = vrot.slane %v2116, 4
        %v2475 = vsel %vm995, %v2474, %v2473
        %v2476 = vrot.slane %v2117, 3
        %v2477 = vsel %vm998, %v2476, %v2475
        %v2478 = vrot.slane %v2118, 2
        %v2479 = vsel %vm1001, %v2478, %v2477
        %v2480 = vrot.slane %v2119, 1
        %v2481 = vsel %vm1004, %v2480, %v2479
        %v2482 = vrot.slane %v2121, 7
        %v2483 = vsel %vm986, %v2482, %v2120
        %v2484 = vrot.slane %v2122, 6
        %v2485 = vsel %vm989, %v2484, %v2483
        %v2486 = vrot.slane %v2123, 5
        %v2487 = vsel %vm992, %v2486, %v2485
        %v2488 = vrot.slane %v2124, 4
        %v2489 = vsel %vm995, %v2488, %v2487
        %v2490 = vrot.slane %v2125, 3
        %v2491 = vsel %vm998, %v2490, %v2489
        %v2492 = vrot.slane %v2126, 2
        %v2493 = vsel %vm1001, %v2492, %v2491
        %v2494 = vrot.slane %v2127, 1
        %v2495 = vsel %vm1004, %v2494, %v2493
        %v2496 = vrot.slane %v2129, 7
        %v2497 = vsel %vm986, %v2496, %v2128
        %v2498 = vrot.slane %v2130, 6
        %v2499 = vsel %vm989, %v2498, %v2497
        %v2500 = vrot.slane %v2131, 5
        %v2501 = vsel %vm992, %v2500, %v2499
        %v2502 = vrot.slane %v2132, 4
        %v2503 = vsel %vm995, %v2502, %v2501
        %v2504 = vrot.slane %v2133, 3
        %v2505 = vsel %vm998, %v2504, %v2503
        %v2506 = vrot.slane %v2134, 2
        %v2507 = vsel %vm1001, %v2506, %v2505
        %v2508 = vrot.slane %v2135, 1
        %v2509 = vsel %vm1004, %v2508, %v2507
        %v2510 = vrot.slane %v2137, 7
        %v2511 = vsel %vm986, %v2510, %v2136
        %v2512 = vrot.slane %v2138, 6
        %v2513 = vsel %vm989, %v2512, %v2511
        %v2514 = vrot.slane %v2139, 5
        %v2515 = vsel %vm992, %v2514, %v2513
        %v2516 = vrot.slane %v2140, 4
        %v2517 = vsel %vm995, %v2516, %v2515
        %v2518 = vrot.slane %v2141, 3
        %v2519 = vsel %vm998, %v2518, %v2517
        %v2520 = vrot.slane %v2142, 2
        %v2521 = vsel %vm1001, %v2520, %v2519
        %v2522 = vrot.slane %v2143, 1
        %v2523 = vsel %vm1004, %v2522, %v2521
        %v2524 = vrot.slane %v2145, 7
        %v2525 = vsel %vm986, %v2524, %v2144
        %v2526 = vrot.slane %v2146, 6
        %v2527 = vsel %vm989, %v2526, %v2525
        %v2528 = vrot.slane %v2147, 5
        %v2529 = vsel %vm992, %v2528, %v2527
        %v2530 = vrot.slane %v2148, 4
        %v2531 = vsel %vm995, %v2530, %v2529
        %v2532 = vrot.slane %v2149, 3
        %v2533 = vsel %vm998, %v2532, %v2531
        %v2534 = vrot.slane %v2150, 2
        %v2535 = vsel %vm1001, %v2534, %v2533
        %v2536 = vrot.slane %v2151, 1
        %v2537 = vsel %vm1004, %v2536, %v2535
        %v2538 = vrot.slane %v2153, 7
        %v2539 = vsel %vm986, %v2538, %v2152
        %v2540 = vrot.slane %v2154, 6
        %v2541 = vsel %vm989, %v2540, %v2539
        %v2542 = vrot.slane %v2155, 5
        %v2543 = vsel %vm992, %v2542, %v2541
        %v2544 = vrot.slane %v2156, 4
        %v2545 = vsel %vm995, %v2544, %v2543
        %v2546 = vrot.slane %v2157, 3
        %v2547 = vsel %vm998, %v2546, %v2545
        %v2548 = vrot.slane %v2158, 2
        %v2549 = vsel %vm1001, %v2548, %v2547
        %v2550 = vrot.slane %v2159, 1
        %v2551 = vsel %vm1004, %v2550, %v2549
        %v2552 = vrot.slane %v2161, 7
        %v2553 = vsel %vm986, %v2552, %v2160
        %v2554 = vrot.slane %v2162, 6
        %v2555 = vsel %vm989, %v2554, %v2553
        %v2556 = vrot.slane %v2163, 5
        %v2557 = vsel %vm992, %v2556, %v2555
        %v2558 = vrot.slane %v2164, 4
        %v2559 = vsel %vm995, %v2558, %v2557
        %v2560 = vrot.slane %v2165, 3
        %v2561 = vsel %vm998, %v2560, %v2559
        %v2562 = vrot.slane %v2166, 2
        %v2563 = vsel %vm1001, %v2562, %v2561
        %v2564 = vrot.slane %v2167, 1
        %v2565 = vsel %vm1004, %v2564, %v2563
        %v2566 = vrot.slane %v2169, 7
        %v2567 = vsel %vm986, %v2566, %v2168
        %v2568 = vrot.slane %v2170, 6
        %v2569 = vsel %vm989, %v2568, %v2567
        %v2570 = vrot.slane %v2171, 5
        %v2571 = vsel %vm992, %v2570, %v2569
        %v2572 = vrot.slane %v2172, 4
        %v2573 = vsel %vm995, %v2572, %v2571
        %v2574 = vrot.slane %v2173, 3
        %v2575 = vsel %vm998, %v2574, %v2573
        %v2576 = vrot.slane %v2174, 2
        %v2577 = vsel %vm1001, %v2576, %v2575
        %v2578 = vrot.slane %v2175, 1
        %v2579 = vsel %vm1004, %v2578, %v2577
        %v2580 = vrot.slane %v2177, 7
        %v2581 = vsel %vm986, %v2580, %v2176
        %v2582 = vrot.slane %v2178, 6
        %v2583 = vsel %vm989, %v2582, %v2581
        %v2584 = vrot.slane %v2179, 5
        %v2585 = vsel %vm992, %v2584, %v2583
        %v2586 = vrot.slane %v2180, 4
        %v2587 = vsel %vm995, %v2586, %v2585
        %v2588 = vrot.slane %v2181, 3
        %v2589 = vsel %vm998, %v2588, %v2587
        %v2590 = vrot.slane %v2182, 2
        %v2591 = vsel %vm1001, %v2590, %v2589
        %v2592 = vrot.slane %v2183, 1
        %v2593 = vsel %vm1004, %v2592, %v2591
        %v2594 = vrot.slane %v2185, 7
        %v2595 = vsel %vm986, %v2594, %v2184
        %v2596 = vrot.slane %v2186, 6
        %v2597 = vsel %vm989, %v2596, %v2595
        %v2598 = vrot.slane %v2187, 5
        %v2599 = vsel %vm992, %v2598, %v2597
        %v2600 = vrot.slane %v2188, 4
        %v2601 = vsel %vm995, %v2600, %v2599
        %v2602 = vrot.slane %v2189, 3
        %v2603 = vsel %vm998, %v2602, %v2601
        %v2604 = vrot.slane %v2190, 2
        %v2605 = vsel %vm1001, %v2604, %v2603
        %v2606 = vrot.slane %v2191, 1
        %v2607 = vsel %vm1004, %v2606, %v2605
        %v2624 = vmul.f32 %v2194, %v2397
        %v2625 = vmul.f32 %v2198, %v2411
        %v2626 = vmul.f32 %v2202, %v2425
        %v2627 = vmul.f32 %v2206, %v2439
        %v2628 = vmul.f32 %v2210, %v2453
        %v2629 = vmul.f32 %v2214, %v2467
        %v2630 = vmul.f32 %v2218, %v2481
        %v2631 = vmul.f32 %v2222, %v2495
        %v2632 = vmul.f32 %v2226, %v2509
        %v2633 = vmul.f32 %v2230, %v2523
        %v2634 = vmul.f32 %v2234, %v2537
        %v2635 = vmul.f32 %v2238, %v2551
        %v2636 = vmul.f32 %v2242, %v2565
        %v2637 = vmul.f32 %v2246, %v2579
        %v2638 = vmul.f32 %v2250, %v2593
        %v2639 = vmul.f32 %v2254, %v2607
        %v2640 = vadd.f32 %v1952, %v2624
        %v2641 = vadd.f32 %v1953, %v2625
        %v2642 = vadd.f32 %v1954, %v2626
        %v2643 = vadd.f32 %v1955, %v2627
        %v2644 = vadd.f32 %v1956, %v2628
        %v2645 = vadd.f32 %v1957, %v2629
        %v2646 = vadd.f32 %v1958, %v2630
        %v2647 = vadd.f32 %v1959, %v2631
        %v2648 = vadd.f32 %v1960, %v2632
        %v2649 = vadd.f32 %v1961, %v2633
        %v2650 = vadd.f32 %v1962, %v2634
        %v2651 = vadd.f32 %v1963, %v2635
        %v2652 = vadd.f32 %v1964, %v2636
        %v2653 = vadd.f32 %v1965, %v2637
        %v2654 = vadd.f32 %v1966, %v2638
        %v2655 = vadd.f32 %v1967, %v2639
        %2656 = vset.pattern.permute.xlu0 2
        %2657 = vperm.xlu0 %2656, %v633
        %v2658 = vpop.permute.xlu0 %2657
        %2660 = vset.pattern.permute.xlu0 2
        %2661 = vperm.xlu0 %2660, %v634
        %v2662 = vpop.permute.xlu0 %2661
        %2664 = vset.pattern.permute.xlu0 2
        %2665 = vperm.xlu0 %2664, %v635
        %v2666 = vpop.permute.xlu0 %2665
        %2668 = vset.pattern.permute.xlu0 2
        %2669 = vperm.xlu0 %2668, %v636
        %v2670 = vpop.permute.xlu0 %2669
        %2672 = vset.pattern.permute.xlu0 2
        %2673 = vperm.xlu0 %2672, %v637
        %v2674 = vpop.permute.xlu0 %2673
        %2676 = vset.pattern.permute.xlu0 2
        %2677 = vperm.xlu0 %2676, %v638
        %v2678 = vpop.permute.xlu0 %2677
        %2680 = vset.pattern.permute.xlu0 2
        %2681 = vperm.xlu0 %2680, %v639
        %v2682 = vpop.permute.xlu0 %2681
        %2684 = vset.pattern.permute.xlu0 2
        %2685 = vperm.xlu0 %2684, %v640
        %v2686 = vpop.permute.xlu0 %2685
        %2688 = vset.pattern.permute.xlu0 2
        %2689 = vperm.xlu0 %2688, %v641
        %v2690 = vpop.permute.xlu0 %2689
        %2692 = vset.pattern.permute.xlu0 2
        %2693 = vperm.xlu0 %2692, %v642
        %v2694 = vpop.permute.xlu0 %2693
        %2696 = vset.pattern.permute.xlu0 2
        %2697 = vperm.xlu0 %2696, %v643
        %v2698 = vpop.permute.xlu0 %2697
        %2700 = vset.pattern.permute.xlu0 2
        %2701 = vperm.xlu0 %2700, %v644
        %v2702 = vpop.permute.xlu0 %2701
        %2704 = vset.pattern.permute.xlu0 2
        %2705 = vperm.xlu0 %2704, %v645
        %v2706 = vpop.permute.xlu0 %2705
        %2708 = vset.pattern.permute.xlu0 2
        %2709 = vperm.xlu0 %2708, %v646
        %v2710 = vpop.permute.xlu0 %2709
        %2712 = vset.pattern.permute.xlu0 2
        %2713 = vperm.xlu0 %2712, %v647
        %v2714 = vpop.permute.xlu0 %2713
        %2716 = vset.pattern.permute.xlu0 2
        %2717 = vperm.xlu0 %2716, %v648
        %v2718 = vpop.permute.xlu0 %2717
        %v2720 = vmul.f32 %v2658, %v2397
        %v2721 = vmul.f32 %v2662, %v2411
        %v2722 = vmul.f32 %v2666, %v2425
        %v2723 = vmul.f32 %v2670, %v2439
        %v2724 = vmul.f32 %v2674, %v2453
        %v2725 = vmul.f32 %v2678, %v2467
        %v2726 = vmul.f32 %v2682, %v2481
        %v2727 = vmul.f32 %v2686, %v2495
        %v2728 = vmul.f32 %v2690, %v2509
        %v2729 = vmul.f32 %v2694, %v2523
        %v2730 = vmul.f32 %v2698, %v2537
        %v2731 = vmul.f32 %v2702, %v2551
        %v2732 = vmul.f32 %v2706, %v2565
        %v2733 = vmul.f32 %v2710, %v2579
        %v2734 = vmul.f32 %v2714, %v2593
        %v2735 = vmul.f32 %v2718, %v2607
        %v2736 = vadd.f32 %v2048, %v2720
        %v2737 = vadd.f32 %v2049, %v2721
        %v2738 = vadd.f32 %v2050, %v2722
        %v2739 = vadd.f32 %v2051, %v2723
        %v2740 = vadd.f32 %v2052, %v2724
        %v2741 = vadd.f32 %v2053, %v2725
        %v2742 = vadd.f32 %v2054, %v2726
        %v2743 = vadd.f32 %v2055, %v2727
        %v2744 = vadd.f32 %v2056, %v2728
        %v2745 = vadd.f32 %v2057, %v2729
        %v2746 = vadd.f32 %v2058, %v2730
        %v2747 = vadd.f32 %v2059, %v2731
        %v2748 = vadd.f32 %v2060, %v2732
        %v2749 = vadd.f32 %v2061, %v2733
        %v2750 = vadd.f32 %v2062, %v2734
        %v2751 = vadd.f32 %v2063, %v2735
        %v2752 = vld [vmem:[%s610 + $0x3] sm:$0x1]
        %v2753 = vld [vmem:[%s610 + $0xb] sm:$0x1]
        %v2754 = vld [vmem:[%s610 + $0x13] sm:$0x1]
        %v2755 = vld [vmem:[%s610 + $0x1b] sm:$0x1]
        %v2756 = vld [vmem:[%s610 + $0x23] sm:$0x1]
        %v2757 = vld [vmem:[%s610 + $0x2b] sm:$0x1]
        %v2758 = vld [vmem:[%s610 + $0x33] sm:$0x1]
        %v2759 = vld [vmem:[%s610 + $0x3b] sm:$0x1]
        %v2760 = vld [vmem:[%s610 + $0x43] sm:$0x1]
        %v2761 = vld [vmem:[%s610 + $0x4b] sm:$0x1]
        %v2762 = vld [vmem:[%s610 + $0x53] sm:$0x1]
        %v2763 = vld [vmem:[%s610 + $0x5b] sm:$0x1]
        %v2764 = vld [vmem:[%s610 + $0x63] sm:$0x1]
        %v2765 = vld [vmem:[%s610 + $0x6b] sm:$0x1]
        %v2766 = vld [vmem:[%s610 + $0x73] sm:$0x1]
        %v2767 = vld [vmem:[%s610 + $0x7b] sm:$0x1]
        %v2768 = vld [vmem:[%s610 + $0x83] sm:$0x1]
        %v2769 = vld [vmem:[%s610 + $0x8b] sm:$0x1]
        %v2770 = vld [vmem:[%s610 + $0x93] sm:$0x1]
        %v2771 = vld [vmem:[%s610 + $0x9b] sm:$0x1]
        %v2772 = vld [vmem:[%s610 + $0xa3] sm:$0x1]
        %v2773 = vld [vmem:[%s610 + $0xab] sm:$0x1]
        %v2774 = vld [vmem:[%s610 + $0xb3] sm:$0x1]
        %v2775 = vld [vmem:[%s610 + $0xbb] sm:$0x1]
        %v2776 = vld [vmem:[%s610 + $0xc3] sm:$0x1]
        %v2777 = vld [vmem:[%s610 + $0xcb] sm:$0x1]
        %v2778 = vld [vmem:[%s610 + $0xd3] sm:$0x1]
        %v2779 = vld [vmem:[%s610 + $0xdb] sm:$0x1]
        %v2780 = vld [vmem:[%s610 + $0xe3] sm:$0x1]
        %v2781 = vld [vmem:[%s610 + $0xeb] sm:$0x1]
        %v2782 = vld [vmem:[%s610 + $0xf3] sm:$0x1]
        %v2783 = vld [vmem:[%s610 + $0xfb] sm:$0x1]
        %v2784 = vld [vmem:[%s610 + $0x103] sm:$0x1]
        %v2785 = vld [vmem:[%s610 + $0x10b] sm:$0x1]
        %v2786 = vld [vmem:[%s610 + $0x113] sm:$0x1]
        %v2787 = vld [vmem:[%s610 + $0x11b] sm:$0x1]
        %v2788 = vld [vmem:[%s610 + $0x123] sm:$0x1]
        %v2789 = vld [vmem:[%s610 + $0x12b] sm:$0x1]
        %v2790 = vld [vmem:[%s610 + $0x133] sm:$0x1]
        %v2791 = vld [vmem:[%s610 + $0x13b] sm:$0x1]
        %v2792 = vld [vmem:[%s610 + $0x143] sm:$0x1]
        %v2793 = vld [vmem:[%s610 + $0x14b] sm:$0x1]
        %v2794 = vld [vmem:[%s610 + $0x153] sm:$0x1]
        %v2795 = vld [vmem:[%s610 + $0x15b] sm:$0x1]
        %v2796 = vld [vmem:[%s610 + $0x163] sm:$0x1]
        %v2797 = vld [vmem:[%s610 + $0x16b] sm:$0x1]
        %v2798 = vld [vmem:[%s610 + $0x173] sm:$0x1]
        %v2799 = vld [vmem:[%s610 + $0x17b] sm:$0x1]
        %v2800 = vld [vmem:[%s610 + $0x183] sm:$0x1]
        %v2801 = vld [vmem:[%s610 + $0x18b] sm:$0x1]
        %v2802 = vld [vmem:[%s610 + $0x193] sm:$0x1]
        %v2803 = vld [vmem:[%s610 + $0x19b] sm:$0x1]
        %v2804 = vld [vmem:[%s610 + $0x1a3] sm:$0x1]
        %v2805 = vld [vmem:[%s610 + $0x1ab] sm:$0x1]
        %v2806 = vld [vmem:[%s610 + $0x1b3] sm:$0x1]
        %v2807 = vld [vmem:[%s610 + $0x1bb] sm:$0x1]
        %v2808 = vld [vmem:[%s610 + $0x1c3] sm:$0x1]
        %v2809 = vld [vmem:[%s610 + $0x1cb] sm:$0x1]
        %v2810 = vld [vmem:[%s610 + $0x1d3] sm:$0x1]
        %v2811 = vld [vmem:[%s610 + $0x1db] sm:$0x1]
        %v2812 = vld [vmem:[%s610 + $0x1e3] sm:$0x1]
        %v2813 = vld [vmem:[%s610 + $0x1eb] sm:$0x1]
        %v2814 = vld [vmem:[%s610 + $0x1f3] sm:$0x1]
        %v2815 = vld [vmem:[%s610 + $0x1fb] sm:$0x1]
        %v2816 = vld [vmem:[%s610 + $0x203] sm:$0x1]
        %v2817 = vld [vmem:[%s610 + $0x20b] sm:$0x1]
        %v2818 = vld [vmem:[%s610 + $0x213] sm:$0x1]
        %v2819 = vld [vmem:[%s610 + $0x21b] sm:$0x1]
        %v2820 = vld [vmem:[%s610 + $0x223] sm:$0x1]
        %v2821 = vld [vmem:[%s610 + $0x22b] sm:$0x1]
        %v2822 = vld [vmem:[%s610 + $0x233] sm:$0x1]
        %v2823 = vld [vmem:[%s610 + $0x23b] sm:$0x1]
        %v2824 = vld [vmem:[%s610 + $0x243] sm:$0x1]
        %v2825 = vld [vmem:[%s610 + $0x24b] sm:$0x1]
        %v2826 = vld [vmem:[%s610 + $0x253] sm:$0x1]
        %v2827 = vld [vmem:[%s610 + $0x25b] sm:$0x1]
        %v2828 = vld [vmem:[%s610 + $0x263] sm:$0x1]
        %v2829 = vld [vmem:[%s610 + $0x26b] sm:$0x1]
        %v2830 = vld [vmem:[%s610 + $0x273] sm:$0x1]
        %v2831 = vld [vmem:[%s610 + $0x27b] sm:$0x1]
        %v2832 = vld [vmem:[%s610 + $0x283] sm:$0x1]
        %v2833 = vld [vmem:[%s610 + $0x28b] sm:$0x1]
        %v2834 = vld [vmem:[%s610 + $0x293] sm:$0x1]
        %v2835 = vld [vmem:[%s610 + $0x29b] sm:$0x1]
        %v2836 = vld [vmem:[%s610 + $0x2a3] sm:$0x1]
        %v2837 = vld [vmem:[%s610 + $0x2ab] sm:$0x1]
        %v2838 = vld [vmem:[%s610 + $0x2b3] sm:$0x1]
        %v2839 = vld [vmem:[%s610 + $0x2bb] sm:$0x1]
        %v2840 = vld [vmem:[%s610 + $0x2c3] sm:$0x1]
        %v2841 = vld [vmem:[%s610 + $0x2cb] sm:$0x1]
        %v2842 = vld [vmem:[%s610 + $0x2d3] sm:$0x1]
        %v2843 = vld [vmem:[%s610 + $0x2db] sm:$0x1]
        %v2844 = vld [vmem:[%s610 + $0x2e3] sm:$0x1]
        %v2845 = vld [vmem:[%s610 + $0x2eb] sm:$0x1]
        %v2846 = vld [vmem:[%s610 + $0x2f3] sm:$0x1]
        %v2847 = vld [vmem:[%s610 + $0x2fb] sm:$0x1]
        %v2848 = vld [vmem:[%s610 + $0x303] sm:$0x1]
        %v2849 = vld [vmem:[%s610 + $0x30b] sm:$0x1]
        %v2850 = vld [vmem:[%s610 + $0x313] sm:$0x1]
        %v2851 = vld [vmem:[%s610 + $0x31b] sm:$0x1]
        %v2852 = vld [vmem:[%s610 + $0x323] sm:$0x1]
        %v2853 = vld [vmem:[%s610 + $0x32b] sm:$0x1]
        %v2854 = vld [vmem:[%s610 + $0x333] sm:$0x1]
        %v2855 = vld [vmem:[%s610 + $0x33b] sm:$0x1]
        %v2856 = vld [vmem:[%s610 + $0x343] sm:$0x1]
        %v2857 = vld [vmem:[%s610 + $0x34b] sm:$0x1]
        %v2858 = vld [vmem:[%s610 + $0x353] sm:$0x1]
        %v2859 = vld [vmem:[%s610 + $0x35b] sm:$0x1]
        %v2860 = vld [vmem:[%s610 + $0x363] sm:$0x1]
        %v2861 = vld [vmem:[%s610 + $0x36b] sm:$0x1]
        %v2862 = vld [vmem:[%s610 + $0x373] sm:$0x1]
        %v2863 = vld [vmem:[%s610 + $0x37b] sm:$0x1]
        %v2864 = vld [vmem:[%s610 + $0x383] sm:$0x1]
        %v2865 = vld [vmem:[%s610 + $0x38b] sm:$0x1]
        %v2866 = vld [vmem:[%s610 + $0x393] sm:$0x1]
        %v2867 = vld [vmem:[%s610 + $0x39b] sm:$0x1]
        %v2868 = vld [vmem:[%s610 + $0x3a3] sm:$0x1]
        %v2869 = vld [vmem:[%s610 + $0x3ab] sm:$0x1]
        %v2870 = vld [vmem:[%s610 + $0x3b3] sm:$0x1]
        %v2871 = vld [vmem:[%s610 + $0x3bb] sm:$0x1]
        %v2872 = vld [vmem:[%s610 + $0x3c3] sm:$0x1]
        %v2873 = vld [vmem:[%s610 + $0x3cb] sm:$0x1]
        %v2874 = vld [vmem:[%s610 + $0x3d3] sm:$0x1]
        %v2875 = vld [vmem:[%s610 + $0x3db] sm:$0x1]
        %v2876 = vld [vmem:[%s610 + $0x3e3] sm:$0x1]
        %v2877 = vld [vmem:[%s610 + $0x3eb] sm:$0x1]
        %v2878 = vld [vmem:[%s610 + $0x3f3] sm:$0x1]
        %v2879 = vld [vmem:[%s610 + $0x3fb] sm:$0x1]
        %2880 = vset.pattern.permute.xlu0 3
        %2881 = vperm.xlu0 %2880, %v616
        %v2882 = vpop.permute.xlu0 %2881
        %2884 = vset.pattern.permute.xlu0 3
        %2885 = vperm.xlu0 %2884, %v617
        %v2886 = vpop.permute.xlu0 %2885
        %2888 = vset.pattern.permute.xlu0 3
        %2889 = vperm.xlu0 %2888, %v618
        %v2890 = vpop.permute.xlu0 %2889
        %2892 = vset.pattern.permute.xlu0 3
        %2893 = vperm.xlu0 %2892, %v619
        %v2894 = vpop.permute.xlu0 %2893
        %2896 = vset.pattern.permute.xlu0 3
        %2897 = vperm.xlu0 %2896, %v620
        %v2898 = vpop.permute.xlu0 %2897
        %2900 = vset.pattern.permute.xlu0 3
        %2901 = vperm.xlu0 %2900, %v621
        %v2902 = vpop.permute.xlu0 %2901
        %2904 = vset.pattern.permute.xlu0 3
        %2905 = vperm.xlu0 %2904, %v622
        %v2906 = vpop.permute.xlu0 %2905
        %2908 = vset.pattern.permute.xlu0 3
        %2909 = vperm.xlu0 %2908, %v623
        %v2910 = vpop.permute.xlu0 %2909
        %2912 = vset.pattern.permute.xlu0 3
        %2913 = vperm.xlu0 %2912, %v624
        %v2914 = vpop.permute.xlu0 %2913
        %2916 = vset.pattern.permute.xlu0 3
        %2917 = vperm.xlu0 %2916, %v625
        %v2918 = vpop.permute.xlu0 %2917
        %2920 = vset.pattern.permute.xlu0 3
        %2921 = vperm.xlu0 %2920, %v626
        %v2922 = vpop.permute.xlu0 %2921
        %2924 = vset.pattern.permute.xlu0 3
        %2925 = vperm.xlu0 %2924, %v627
        %v2926 = vpop.permute.xlu0 %2925
        %2928 = vset.pattern.permute.xlu0 3
        %2929 = vperm.xlu0 %2928, %v628
        %v2930 = vpop.permute.xlu0 %2929
        %2932 = vset.pattern.permute.xlu0 3
        %2933 = vperm.xlu0 %2932, %v629
        %v2934 = vpop.permute.xlu0 %2933
        %2936 = vset.pattern.permute.xlu0 3
        %2937 = vperm.xlu0 %2936, %v630
        %v2938 = vpop.permute.xlu0 %2937
        %2940 = vset.pattern.permute.xlu0 3
        %2941 = vperm.xlu0 %2940, %v631
        %v2942 = vpop.permute.xlu0 %2941
        %v3072 = vrot.slane %v2753, 7
        %v3073 = vsel %vm986, %v3072, %v2752
        %v3074 = vrot.slane %v2754, 6
        %v3075 = vsel %vm989, %v3074, %v3073
        %v3076 = vrot.slane %v2755, 5
        %v3077 = vsel %vm992, %v3076, %v3075
        %v3078 = vrot.slane %v2756, 4
        %v3079 = vsel %vm995, %v3078, %v3077
        %v3080 = vrot.slane %v2757, 3
        %v3081 = vsel %vm998, %v3080, %v3079
        %v3082 = vrot.slane %v2758, 2
        %v3083 = vsel %vm1001, %v3082, %v3081
        %v3084 = vrot.slane %v2759, 1
        %v3085 = vsel %vm1004, %v3084, %v3083
        %v3086 = vrot.slane %v2761, 7
        %v3087 = vsel %vm986, %v3086, %v2760
        %v3088 = vrot.slane %v2762, 6
        %v3089 = vsel %vm989, %v3088, %v3087
        %v3090 = vrot.slane %v2763, 5
        %v3091 = vsel %vm992, %v3090, %v3089
        %v3092 = vrot.slane %v2764, 4
        %v3093 = vsel %vm995, %v3092, %v3091
        %v3094 = vrot.slane %v2765, 3
        %v3095 = vsel %vm998, %v3094, %v3093
        %v3096 = vrot.slane %v2766, 2
        %v3097 = vsel %vm1001, %v3096, %v3095
        %v3098 = vrot.slane %v2767, 1
        %v3099 = vsel %vm1004, %v3098, %v3097
        %v3100 = vrot.slane %v2769, 7
        %v3101 = vsel %vm986, %v3100, %v2768
        %v3102 = vrot.slane %v2770, 6
        %v3103 = vsel %vm989, %v3102, %v3101
        %v3104 = vrot.slane %v2771, 5
        %v3105 = vsel %vm992, %v3104, %v3103
        %v3106 = vrot.slane %v2772, 4
        %v3107 = vsel %vm995, %v3106, %v3105
        %v3108 = vrot.slane %v2773, 3
        %v3109 = vsel %vm998, %v3108, %v3107
        %v3110 = vrot.slane %v2774, 2
        %v3111 = vsel %vm1001, %v3110, %v3109
        %v3112 = vrot.slane %v2775, 1
        %v3113 = vsel %vm1004, %v3112, %v3111
        %v3114 = vrot.slane %v2777, 7
        %v3115 = vsel %vm986, %v3114, %v2776
        %v3116 = vrot.slane %v2778, 6
        %v3117 = vsel %vm989, %v3116, %v3115
        %v3118 = vrot.slane %v2779, 5
        %v3119 = vsel %vm992, %v3118, %v3117
        %v3120 = vrot.slane %v2780, 4
        %v3121 = vsel %vm995, %v3120, %v3119
        %v3122 = vrot.slane %v2781, 3
        %v3123 = vsel %vm998, %v3122, %v3121
        %v3124 = vrot.slane %v2782, 2
        %v3125 = vsel %vm1001, %v3124, %v3123
        %v3126 = vrot.slane %v2783, 1
        %v3127 = vsel %vm1004, %v3126, %v3125
        %v3128 = vrot.slane %v2785, 7
        %v3129 = vsel %vm986, %v3128, %v2784
        %v3130 = vrot.slane %v2786, 6
        %v3131 = vsel %vm989, %v3130, %v3129
        %v3132 = vrot.slane %v2787, 5
        %v3133 = vsel %vm992, %v3132, %v3131
        %v3134 = vrot.slane %v2788, 4
        %v3135 = vsel %vm995, %v3134, %v3133
        %v3136 = vrot.slane %v2789, 3
        %v3137 = vsel %vm998, %v3136, %v3135
        %v3138 = vrot.slane %v2790, 2
        %v3139 = vsel %vm1001, %v3138, %v3137
        %v3140 = vrot.slane %v2791, 1
        %v3141 = vsel %vm1004, %v3140, %v3139
        %v3142 = vrot.slane %v2793, 7
        %v3143 = vsel %vm986, %v3142, %v2792
        %v3144 = vrot.slane %v2794, 6
        %v3145 = vsel %vm989, %v3144, %v3143
        %v3146 = vrot.slane %v2795, 5
        %v3147 = vsel %vm992, %v3146, %v3145
        %v3148 = vrot.slane %v2796, 4
        %v3149 = vsel %vm995, %v3148, %v3147
        %v3150 = vrot.slane %v2797, 3
        %v3151 = vsel %vm998, %v3150, %v3149
        %v3152 = vrot.slane %v2798, 2
        %v3153 = vsel %vm1001, %v3152, %v3151
        %v3154 = vrot.slane %v2799, 1
        %v3155 = vsel %vm1004, %v3154, %v3153
        %v3156 = vrot.slane %v2801, 7
        %v3157 = vsel %vm986, %v3156, %v2800
        %v3158 = vrot.slane %v2802, 6
        %v3159 = vsel %vm989, %v3158, %v3157
        %v3160 = vrot.slane %v2803, 5
        %v3161 = vsel %vm992, %v3160, %v3159
        %v3162 = vrot.slane %v2804, 4
        %v3163 = vsel %vm995, %v3162, %v3161
        %v3164 = vrot.slane %v2805, 3
        %v3165 = vsel %vm998, %v3164, %v3163
        %v3166 = vrot.slane %v2806, 2
        %v3167 = vsel %vm1001, %v3166, %v3165
        %v3168 = vrot.slane %v2807, 1
        %v3169 = vsel %vm1004, %v3168, %v3167
        %v3170 = vrot.slane %v2809, 7
        %v3171 = vsel %vm986, %v3170, %v2808
        %v3172 = vrot.slane %v2810, 6
        %v3173 = vsel %vm989, %v3172, %v3171
        %v3174 = vrot.slane %v2811, 5
        %v3175 = vsel %vm992, %v3174, %v3173
        %v3176 = vrot.slane %v2812, 4
        %v3177 = vsel %vm995, %v3176, %v3175
        %v3178 = vrot.slane %v2813, 3
        %v3179 = vsel %vm998, %v3178, %v3177
        %v3180 = vrot.slane %v2814, 2
        %v3181 = vsel %vm1001, %v3180, %v3179
        %v3182 = vrot.slane %v2815, 1
        %v3183 = vsel %vm1004, %v3182, %v3181
        %v3184 = vrot.slane %v2817, 7
        %v3185 = vsel %vm986, %v3184, %v2816
        %v3186 = vrot.slane %v2818, 6
        %v3187 = vsel %vm989, %v3186, %v3185
        %v3188 = vrot.slane %v2819, 5
        %v3189 = vsel %vm992, %v3188, %v3187
        %v3190 = vrot.slane %v2820, 4
        %v3191 = vsel %vm995, %v3190, %v3189
        %v3192 = vrot.slane %v2821, 3
        %v3193 = vsel %vm998, %v3192, %v3191
        %v3194 = vrot.slane %v2822, 2
        %v3195 = vsel %vm1001, %v3194, %v3193
        %v3196 = vrot.slane %v2823, 1
        %v3197 = vsel %vm1004, %v3196, %v3195
        %v3198 = vrot.slane %v2825, 7
        %v3199 = vsel %vm986, %v3198, %v2824
        %v3200 = vrot.slane %v2826, 6
        %v3201 = vsel %vm989, %v3200, %v3199
        %v3202 = vrot.slane %v2827, 5
        %v3203 = vsel %vm992, %v3202, %v3201
        %v3204 = vrot.slane %v2828, 4
        %v3205 = vsel %vm995, %v3204, %v3203
        %v3206 = vrot.slane %v2829, 3
        %v3207 = vsel %vm998, %v3206, %v3205
        %v3208 = vrot.slane %v2830, 2
        %v3209 = vsel %vm1001, %v3208, %v3207
        %v3210 = vrot.slane %v2831, 1
        %v3211 = vsel %vm1004, %v3210, %v3209
        %v3212 = vrot.slane %v2833, 7
        %v3213 = vsel %vm986, %v3212, %v2832
        %v3214 = vrot.slane %v2834, 6
        %v3215 = vsel %vm989, %v3214, %v3213
        %v3216 = vrot.slane %v2835, 5
        %v3217 = vsel %vm992, %v3216, %v3215
        %v3218 = vrot.slane %v2836, 4
        %v3219 = vsel %vm995, %v3218, %v3217
        %v3220 = vrot.slane %v2837, 3
        %v3221 = vsel %vm998, %v3220, %v3219
        %v3222 = vrot.slane %v2838, 2
        %v3223 = vsel %vm1001, %v3222, %v3221
        %v3224 = vrot.slane %v2839, 1
        %v3225 = vsel %vm1004, %v3224, %v3223
        %v3226 = vrot.slane %v2841, 7
        %v3227 = vsel %vm986, %v3226, %v2840
        %v3228 = vrot.slane %v2842, 6
        %v3229 = vsel %vm989, %v3228, %v3227
        %v3230 = vrot.slane %v2843, 5
        %v3231 = vsel %vm992, %v3230, %v3229
        %v3232 = vrot.slane %v2844, 4
        %v3233 = vsel %vm995, %v3232, %v3231
        %v3234 = vrot.slane %v2845, 3
        %v3235 = vsel %vm998, %v3234, %v3233
        %v3236 = vrot.slane %v2846, 2
        %v3237 = vsel %vm1001, %v3236, %v3235
        %v3238 = vrot.slane %v2847, 1
        %v3239 = vsel %vm1004, %v3238, %v3237
        %v3240 = vrot.slane %v2849, 7
        %v3241 = vsel %vm986, %v3240, %v2848
        %v3242 = vrot.slane %v2850, 6
        %v3243 = vsel %vm989, %v3242, %v3241
        %v3244 = vrot.slane %v2851, 5
        %v3245 = vsel %vm992, %v3244, %v3243
        %v3246 = vrot.slane %v2852, 4
        %v3247 = vsel %vm995, %v3246, %v3245
        %v3248 = vrot.slane %v2853, 3
        %v3249 = vsel %vm998, %v3248, %v3247
        %v3250 = vrot.slane %v2854, 2
        %v3251 = vsel %vm1001, %v3250, %v3249
        %v3252 = vrot.slane %v2855, 1
        %v3253 = vsel %vm1004, %v3252, %v3251
        %v3254 = vrot.slane %v2857, 7
        %v3255 = vsel %vm986, %v3254, %v2856
        %v3256 = vrot.slane %v2858, 6
        %v3257 = vsel %vm989, %v3256, %v3255
        %v3258 = vrot.slane %v2859, 5
        %v3259 = vsel %vm992, %v3258, %v3257
        %v3260 = vrot.slane %v2860, 4
        %v3261 = vsel %vm995, %v3260, %v3259
        %v3262 = vrot.slane %v2861, 3
        %v3263 = vsel %vm998, %v3262, %v3261
        %v3264 = vrot.slane %v2862, 2
        %v3265 = vsel %vm1001, %v3264, %v3263
        %v3266 = vrot.slane %v2863, 1
        %v3267 = vsel %vm1004, %v3266, %v3265
        %v3268 = vrot.slane %v2865, 7
        %v3269 = vsel %vm986, %v3268, %v2864
        %v3270 = vrot.slane %v2866, 6
        %v3271 = vsel %vm989, %v3270, %v3269
        %v3272 = vrot.slane %v2867, 5
        %v3273 = vsel %vm992, %v3272, %v3271
        %v3274 = vrot.slane %v2868, 4
        %v3275 = vsel %vm995, %v3274, %v3273
        %v3276 = vrot.slane %v2869, 3
        %v3277 = vsel %vm998, %v3276, %v3275
        %v3278 = vrot.slane %v2870, 2
        %v3279 = vsel %vm1001, %v3278, %v3277
        %v3280 = vrot.slane %v2871, 1
        %v3281 = vsel %vm1004, %v3280, %v3279
        %v3282 = vrot.slane %v2873, 7
        %v3283 = vsel %vm986, %v3282, %v2872
        %v3284 = vrot.slane %v2874, 6
        %v3285 = vsel %vm989, %v3284, %v3283
        %v3286 = vrot.slane %v2875, 5
        %v3287 = vsel %vm992, %v3286, %v3285
        %v3288 = vrot.slane %v2876, 4
        %v3289 = vsel %vm995, %v3288, %v3287
        %v3290 = vrot.slane %v2877, 3
        %v3291 = vsel %vm998, %v3290, %v3289
        %v3292 = vrot.slane %v2878, 2
        %v3293 = vsel %vm1001, %v3292, %v3291
        %v3294 = vrot.slane %v2879, 1
        %v3295 = vsel %vm1004, %v3294, %v3293
        %v3312 = vmul.f32 %v2882, %v3085
        %v3313 = vmul.f32 %v2886, %v3099
        %v3314 = vmul.f32 %v2890, %v3113
        %v3315 = vmul.f32 %v2894, %v3127
        %v3316 = vmul.f32 %v2898, %v3141
        %v3317 = vmul.f32 %v2902, %v3155
        %v3318 = vmul.f32 %v2906, %v3169
        %v3319 = vmul.f32 %v2910, %v3183
        %v3320 = vmul.f32 %v2914, %v3197
        %v3321 = vmul.f32 %v2918, %v3211
        %v3322 = vmul.f32 %v2922, %v3225
        %v3323 = vmul.f32 %v2926, %v3239
        %v3324 = vmul.f32 %v2930, %v3253
        %v3325 = vmul.f32 %v2934, %v3267
        %v3326 = vmul.f32 %v2938, %v3281
        %v3327 = vmul.f32 %v2942, %v3295
        %v3328 = vadd.f32 %v2640, %v3312
        %v3329 = vadd.f32 %v2641, %v3313
        %v3330 = vadd.f32 %v2642, %v3314
        %v3331 = vadd.f32 %v2643, %v3315
        %v3332 = vadd.f32 %v2644, %v3316
        %v3333 = vadd.f32 %v2645, %v3317
        %v3334 = vadd.f32 %v2646, %v3318
        %v3335 = vadd.f32 %v2647, %v3319
        %v3336 = vadd.f32 %v2648, %v3320
        %v3337 = vadd.f32 %v2649, %v3321
        %v3338 = vadd.f32 %v2650, %v3322
        %v3339 = vadd.f32 %v2651, %v3323
        %v3340 = vadd.f32 %v2652, %v3324
        %v3341 = vadd.f32 %v2653, %v3325
        %v3342 = vadd.f32 %v2654, %v3326
        %v3343 = vadd.f32 %v2655, %v3327
        %3344 = vset.pattern.permute.xlu0 3
        %3345 = vperm.xlu0 %3344, %v633
        %v3346 = vpop.permute.xlu0 %3345
        %3348 = vset.pattern.permute.xlu0 3
        %3349 = vperm.xlu0 %3348, %v634
        %v3350 = vpop.permute.xlu0 %3349
        %3352 = vset.pattern.permute.xlu0 3
        %3353 = vperm.xlu0 %3352, %v635
        %v3354 = vpop.permute.xlu0 %3353
        %3356 = vset.pattern.permute.xlu0 3
        %3357 = vperm.xlu0 %3356, %v636
        %v3358 = vpop.permute.xlu0 %3357
        %3360 = vset.pattern.permute.xlu0 3
        %3361 = vperm.xlu0 %3360, %v637
        %v3362 = vpop.permute.xlu0 %3361
        %3364 = vset.pattern.permute.xlu0 3
        %3365 = vperm.xlu0 %3364, %v638
        %v3366 = vpop.permute.xlu0 %3365
        %3368 = vset.pattern.permute.xlu0 3
        %3369 = vperm.xlu0 %3368, %v639
        %v3370 = vpop.permute.xlu0 %3369
        %3372 = vset.pattern.permute.xlu0 3
        %3373 = vperm.xlu0 %3372, %v640
        %v3374 = vpop.permute.xlu0 %3373
        %3376 = vset.pattern.permute.xlu0 3
        %3377 = vperm.xlu0 %3376, %v641
        %v3378 = vpop.permute.xlu0 %3377
        %3380 = vset.pattern.permute.xlu0 3
        %3381 = vperm.xlu0 %3380, %v642
        %v3382 = vpop.permute.xlu0 %3381
        %3384 = vset.pattern.permute.xlu0 3
        %3385 = vperm.xlu0 %3384, %v643
        %v3386 = vpop.permute.xlu0 %3385
        %3388 = vset.pattern.permute.xlu0 3
        %3389 = vperm.xlu0 %3388, %v644
        %v3390 = vpop.permute.xlu0 %3389
        %3392 = vset.pattern.permute.xlu0 3
        %3393 = vperm.xlu0 %3392, %v645
        %v3394 = vpop.permute.xlu0 %3393
        %3396 = vset.pattern.permute.xlu0 3
        %3397 = vperm.xlu0 %3396, %v646
        %v3398 = vpop.permute.xlu0 %3397
        %3400 = vset.pattern.permute.xlu0 3
        %3401 = vperm.xlu0 %3400, %v647
        %v3402 = vpop.permute.xlu0 %3401
        %3404 = vset.pattern.permute.xlu0 3
        %3405 = vperm.xlu0 %3404, %v648
        %v3406 = vpop.permute.xlu0 %3405
        %v3408 = vmul.f32 %v3346, %v3085
        %v3409 = vmul.f32 %v3350, %v3099
        %v3410 = vmul.f32 %v3354, %v3113
        %v3411 = vmul.f32 %v3358, %v3127
        %v3412 = vmul.f32 %v3362, %v3141
        %v3413 = vmul.f32 %v3366, %v3155
        %v3414 = vmul.f32 %v3370, %v3169
        %v3415 = vmul.f32 %v3374, %v3183
        %v3416 = vmul.f32 %v3378, %v3197
        %v3417 = vmul.f32 %v3382, %v3211
        %v3418 = vmul.f32 %v3386, %v3225
        %v3419 = vmul.f32 %v3390, %v3239
        %v3420 = vmul.f32 %v3394, %v3253
        %v3421 = vmul.f32 %v3398, %v3267
        %v3422 = vmul.f32 %v3402, %v3281
        %v3423 = vmul.f32 %v3406, %v3295
        %v3424 = vadd.f32 %v2736, %v3408
        %v3425 = vadd.f32 %v2737, %v3409
        %v3426 = vadd.f32 %v2738, %v3410
        %v3427 = vadd.f32 %v2739, %v3411
        %v3428 = vadd.f32 %v2740, %v3412
        %v3429 = vadd.f32 %v2741, %v3413
        %v3430 = vadd.f32 %v2742, %v3414
        %v3431 = vadd.f32 %v2743, %v3415
        %v3432 = vadd.f32 %v2744, %v3416
        %v3433 = vadd.f32 %v2745, %v3417
        %v3434 = vadd.f32 %v2746, %v3418
        %v3435 = vadd.f32 %v2747, %v3419
        %v3436 = vadd.f32 %v2748, %v3420
        %v3437 = vadd.f32 %v2749, %v3421
        %v3438 = vadd.f32 %v2750, %v3422
        %v3439 = vadd.f32 %v2751, %v3423
        %v3440 = vld [vmem:[%s610 + $0x4] sm:$0x1]
        %v3441 = vld [vmem:[%s610 + $0xc] sm:$0x1]
        %v3442 = vld [vmem:[%s610 + $0x14] sm:$0x1]
        %v3443 = vld [vmem:[%s610 + $0x1c] sm:$0x1]
        %v3444 = vld [vmem:[%s610 + $0x24] sm:$0x1]
        %v3445 = vld [vmem:[%s610 + $0x2c] sm:$0x1]
        %v3446 = vld [vmem:[%s610 + $0x34] sm:$0x1]
        %v3447 = vld [vmem:[%s610 + $0x3c] sm:$0x1]
        %v3448 = vld [vmem:[%s610 + $0x44] sm:$0x1]
        %v3449 = vld [vmem:[%s610 + $0x4c] sm:$0x1]
        %v3450 = vld [vmem:[%s610 + $0x54] sm:$0x1]
        %v3451 = vld [vmem:[%s610 + $0x5c] sm:$0x1]
        %v3452 = vld [vmem:[%s610 + $0x64] sm:$0x1]
        %v3453 = vld [vmem:[%s610 + $0x6c] sm:$0x1]
        %v3454 = vld [vmem:[%s610 + $0x74] sm:$0x1]
        %v3455 = vld [vmem:[%s610 + $0x7c] sm:$0x1]
        %v3456 = vld [vmem:[%s610 + $0x84] sm:$0x1]
        %v3457 = vld [vmem:[%s610 + $0x8c] sm:$0x1]
        %v3458 = vld [vmem:[%s610 + $0x94] sm:$0x1]
        %v3459 = vld [vmem:[%s610 + $0x9c] sm:$0x1]
        %v3460 = vld [vmem:[%s610 + $0xa4] sm:$0x1]
        %v3461 = vld [vmem:[%s610 + $0xac] sm:$0x1]
        %v3462 = vld [vmem:[%s610 + $0xb4] sm:$0x1]
        %v3463 = vld [vmem:[%s610 + $0xbc] sm:$0x1]
        %v3464 = vld [vmem:[%s610 + $0xc4] sm:$0x1]
        %v3465 = vld [vmem:[%s610 + $0xcc] sm:$0x1]
        %v3466 = vld [vmem:[%s610 + $0xd4] sm:$0x1]
        %v3467 = vld [vmem:[%s610 + $0xdc] sm:$0x1]
        %v3468 = vld [vmem:[%s610 + $0xe4] sm:$0x1]
        %v3469 = vld [vmem:[%s610 + $0xec] sm:$0x1]
        %v3470 = vld [vmem:[%s610 + $0xf4] sm:$0x1]
        %v3471 = vld [vmem:[%s610 + $0xfc] sm:$0x1]
        %v3472 = vld [vmem:[%s610 + $0x104] sm:$0x1]
        %v3473 = vld [vmem:[%s610 + $0x10c] sm:$0x1]
        %v3474 = vld [vmem:[%s610 + $0x114] sm:$0x1]
        %v3475 = vld [vmem:[%s610 + $0x11c] sm:$0x1]
        %v3476 = vld [vmem:[%s610 + $0x124] sm:$0x1]
        %v3477 = vld [vmem:[%s610 + $0x12c] sm:$0x1]
        %v3478 = vld [vmem:[%s610 + $0x134] sm:$0x1]
        %v3479 = vld [vmem:[%s610 + $0x13c] sm:$0x1]
        %v3480 = vld [vmem:[%s610 + $0x144] sm:$0x1]
        %v3481 = vld [vmem:[%s610 + $0x14c] sm:$0x1]
        %v3482 = vld [vmem:[%s610 + $0x154] sm:$0x1]
        %v3483 = vld [vmem:[%s610 + $0x15c] sm:$0x1]
        %v3484 = vld [vmem:[%s610 + $0x164] sm:$0x1]
        %v3485 = vld [vmem:[%s610 + $0x16c] sm:$0x1]
        %v3486 = vld [vmem:[%s610 + $0x174] sm:$0x1]
        %v3487 = vld [vmem:[%s610 + $0x17c] sm:$0x1]
        %v3488 = vld [vmem:[%s610 + $0x184] sm:$0x1]
        %v3489 = vld [vmem:[%s610 + $0x18c] sm:$0x1]
        %v3490 = vld [vmem:[%s610 + $0x194] sm:$0x1]
        %v3491 = vld [vmem:[%s610 + $0x19c] sm:$0x1]
        %v3492 = vld [vmem:[%s610 + $0x1a4] sm:$0x1]
        %v3493 = vld [vmem:[%s610 + $0x1ac] sm:$0x1]
        %v3494 = vld [vmem:[%s610 + $0x1b4] sm:$0x1]
        %v3495 = vld [vmem:[%s610 + $0x1bc] sm:$0x1]
        %v3496 = vld [vmem:[%s610 + $0x1c4] sm:$0x1]
        %v3497 = vld [vmem:[%s610 + $0x1cc] sm:$0x1]
        %v3498 = vld [vmem:[%s610 + $0x1d4] sm:$0x1]
        %v3499 = vld [vmem:[%s610 + $0x1dc] sm:$0x1]
        %v3500 = vld [vmem:[%s610 + $0x1e4] sm:$0x1]
        %v3501 = vld [vmem:[%s610 + $0x1ec] sm:$0x1]
        %v3502 = vld [vmem:[%s610 + $0x1f4] sm:$0x1]
        %v3503 = vld [vmem:[%s610 + $0x1fc] sm:$0x1]
        %v3504 = vld [vmem:[%s610 + $0x204] sm:$0x1]
        %v3505 = vld [vmem:[%s610 + $0x20c] sm:$0x1]
        %v3506 = vld [vmem:[%s610 + $0x214] sm:$0x1]
        %v3507 = vld [vmem:[%s610 + $0x21c] sm:$0x1]
        %v3508 = vld [vmem:[%s610 + $0x224] sm:$0x1]
        %v3509 = vld [vmem:[%s610 + $0x22c] sm:$0x1]
        %v3510 = vld [vmem:[%s610 + $0x234] sm:$0x1]
        %v3511 = vld [vmem:[%s610 + $0x23c] sm:$0x1]
        %v3512 = vld [vmem:[%s610 + $0x244] sm:$0x1]
        %v3513 = vld [vmem:[%s610 + $0x24c] sm:$0x1]
        %v3514 = vld [vmem:[%s610 + $0x254] sm:$0x1]
        %v3515 = vld [vmem:[%s610 + $0x25c] sm:$0x1]
        %v3516 = vld [vmem:[%s610 + $0x264] sm:$0x1]
        %v3517 = vld [vmem:[%s610 + $0x26c] sm:$0x1]
        %v3518 = vld [vmem:[%s610 + $0x274] sm:$0x1]
        %v3519 = vld [vmem:[%s610 + $0x27c] sm:$0x1]
        %v3520 = vld [vmem:[%s610 + $0x284] sm:$0x1]
        %v3521 = vld [vmem:[%s610 + $0x28c] sm:$0x1]
        %v3522 = vld [vmem:[%s610 + $0x294] sm:$0x1]
        %v3523 = vld [vmem:[%s610 + $0x29c] sm:$0x1]
        %v3524 = vld [vmem:[%s610 + $0x2a4] sm:$0x1]
        %v3525 = vld [vmem:[%s610 + $0x2ac] sm:$0x1]
        %v3526 = vld [vmem:[%s610 + $0x2b4] sm:$0x1]
        %v3527 = vld [vmem:[%s610 + $0x2bc] sm:$0x1]
        %v3528 = vld [vmem:[%s610 + $0x2c4] sm:$0x1]
        %v3529 = vld [vmem:[%s610 + $0x2cc] sm:$0x1]
        %v3530 = vld [vmem:[%s610 + $0x2d4] sm:$0x1]
        %v3531 = vld [vmem:[%s610 + $0x2dc] sm:$0x1]
        %v3532 = vld [vmem:[%s610 + $0x2e4] sm:$0x1]
        %v3533 = vld [vmem:[%s610 + $0x2ec] sm:$0x1]
        %v3534 = vld [vmem:[%s610 + $0x2f4] sm:$0x1]
        %v3535 = vld [vmem:[%s610 + $0x2fc] sm:$0x1]
        %v3536 = vld [vmem:[%s610 + $0x304] sm:$0x1]
        %v3537 = vld [vmem:[%s610 + $0x30c] sm:$0x1]
        %v3538 = vld [vmem:[%s610 + $0x314] sm:$0x1]
        %v3539 = vld [vmem:[%s610 + $0x31c] sm:$0x1]
        %v3540 = vld [vmem:[%s610 + $0x324] sm:$0x1]
        %v3541 = vld [vmem:[%s610 + $0x32c] sm:$0x1]
        %v3542 = vld [vmem:[%s610 + $0x334] sm:$0x1]
        %v3543 = vld [vmem:[%s610 + $0x33c] sm:$0x1]
        %v3544 = vld [vmem:[%s610 + $0x344] sm:$0x1]
        %v3545 = vld [vmem:[%s610 + $0x34c] sm:$0x1]
        %v3546 = vld [vmem:[%s610 + $0x354] sm:$0x1]
        %v3547 = vld [vmem:[%s610 + $0x35c] sm:$0x1]
        %v3548 = vld [vmem:[%s610 + $0x364] sm:$0x1]
        %v3549 = vld [vmem:[%s610 + $0x36c] sm:$0x1]
        %v3550 = vld [vmem:[%s610 + $0x374] sm:$0x1]
        %v3551 = vld [vmem:[%s610 + $0x37c] sm:$0x1]
        %v3552 = vld [vmem:[%s610 + $0x384] sm:$0x1]
        %v3553 = vld [vmem:[%s610 + $0x38c] sm:$0x1]
        %v3554 = vld [vmem:[%s610 + $0x394] sm:$0x1]
        %v3555 = vld [vmem:[%s610 + $0x39c] sm:$0x1]
        %v3556 = vld [vmem:[%s610 + $0x3a4] sm:$0x1]
        %v3557 = vld [vmem:[%s610 + $0x3ac] sm:$0x1]
        %v3558 = vld [vmem:[%s610 + $0x3b4] sm:$0x1]
        %v3559 = vld [vmem:[%s610 + $0x3bc] sm:$0x1]
        %v3560 = vld [vmem:[%s610 + $0x3c4] sm:$0x1]
        %v3561 = vld [vmem:[%s610 + $0x3cc] sm:$0x1]
        %v3562 = vld [vmem:[%s610 + $0x3d4] sm:$0x1]
        %v3563 = vld [vmem:[%s610 + $0x3dc] sm:$0x1]
        %v3564 = vld [vmem:[%s610 + $0x3e4] sm:$0x1]
        %v3565 = vld [vmem:[%s610 + $0x3ec] sm:$0x1]
        %v3566 = vld [vmem:[%s610 + $0x3f4] sm:$0x1]
        %v3567 = vld [vmem:[%s610 + $0x3fc] sm:$0x1]
        %3568 = vset.pattern.permute.xlu0 4
        %3569 = vperm.xlu0 %3568, %v616
        %v3570 = vpop.permute.xlu0 %3569
        %3572 = vset.pattern.permute.xlu0 4
        %3573 = vperm.xlu0 %3572, %v617
        %v3574 = vpop.permute.xlu0 %3573
        %3576 = vset.pattern.permute.xlu0 4
        %3577 = vperm.xlu0 %3576, %v618
        %v3578 = vpop.permute.xlu0 %3577
        %3580 = vset.pattern.permute.xlu0 4
        %3581 = vperm.xlu0 %3580, %v619
        %v3582 = vpop.permute.xlu0 %3581
        %3584 = vset.pattern.permute.xlu0 4
        %3585 = vperm.xlu0 %3584, %v620
        %v3586 = vpop.permute.xlu0 %3585
        %3588 = vset.pattern.permute.xlu0 4
        %3589 = vperm.xlu0 %3588, %v621
        %v3590 = vpop.permute.xlu0 %3589
        %3592 = vset.pattern.permute.xlu0 4
        %3593 = vperm.xlu0 %3592, %v622
        %v3594 = vpop.permute.xlu0 %3593
        %3596 = vset.pattern.permute.xlu0 4
        %3597 = vperm.xlu0 %3596, %v623
        %v3598 = vpop.permute.xlu0 %3597
        %3600 = vset.pattern.permute.xlu0 4
        %3601 = vperm.xlu0 %3600, %v624
        %v3602 = vpop.permute.xlu0 %3601
        %3604 = vset.pattern.permute.xlu0 4
        %3605 = vperm.xlu0 %3604, %v625
        %v3606 = vpop.permute.xlu0 %3605
        %3608 = vset.pattern.permute.xlu0 4
        %3609 = vperm.xlu0 %3608, %v626
        %v3610 = vpop.permute.xlu0 %3609
        %3612 = vset.pattern.permute.xlu0 4
        %3613 = vperm.xlu0 %3612, %v627
        %v3614 = vpop.permute.xlu0 %3613
        %3616 = vset.pattern.permute.xlu0 4
        %3617 = vperm.xlu0 %3616, %v628
        %v3618 = vpop.permute.xlu0 %3617
        %3620 = vset.pattern.permute.xlu0 4
        %3621 = vperm.xlu0 %3620, %v629
        %v3622 = vpop.permute.xlu0 %3621
        %3624 = vset.pattern.permute.xlu0 4
        %3625 = vperm.xlu0 %3624, %v630
        %v3626 = vpop.permute.xlu0 %3625
        %3628 = vset.pattern.permute.xlu0 4
        %3629 = vperm.xlu0 %3628, %v631
        %v3630 = vpop.permute.xlu0 %3629
        %v3760 = vrot.slane %v3441, 7
        %v3761 = vsel %vm986, %v3760, %v3440
        %v3762 = vrot.slane %v3442, 6
        %v3763 = vsel %vm989, %v3762, %v3761
        %v3764 = vrot.slane %v3443, 5
        %v3765 = vsel %vm992, %v3764, %v3763
        %v3766 = vrot.slane %v3444, 4
        %v3767 = vsel %vm995, %v3766, %v3765
        %v3768 = vrot.slane %v3445, 3
        %v3769 = vsel %vm998, %v3768, %v3767
        %v3770 = vrot.slane %v3446, 2
        %v3771 = vsel %vm1001, %v3770, %v3769
        %v3772 = vrot.slane %v3447, 1
        %v3773 = vsel %vm1004, %v3772, %v3771
        %v3774 = vrot.slane %v3449, 7
        %v3775 = vsel %vm986, %v3774, %v3448
        %v3776 = vrot.slane %v3450, 6
        %v3777 = vsel %vm989, %v3776, %v3775
        %v3778 = vrot.slane %v3451, 5
        %v3779 = vsel %vm992, %v3778, %v3777
        %v3780 = vrot.slane %v3452, 4
        %v3781 = vsel %vm995, %v3780, %v3779
        %v3782 = vrot.slane %v3453, 3
        %v3783 = vsel %vm998, %v3782, %v3781
        %v3784 = vrot.slane %v3454, 2
        %v3785 = vsel %vm1001, %v3784, %v3783
        %v3786 = vrot.slane %v3455, 1
        %v3787 = vsel %vm1004, %v3786, %v3785
        %v3788 = vrot.slane %v3457, 7
        %v3789 = vsel %vm986, %v3788, %v3456
        %v3790 = vrot.slane %v3458, 6
        %v3791 = vsel %vm989, %v3790, %v3789
        %v3792 = vrot.slane %v3459, 5
        %v3793 = vsel %vm992, %v3792, %v3791
        %v3794 = vrot.slane %v3460, 4
        %v3795 = vsel %vm995, %v3794, %v3793
        %v3796 = vrot.slane %v3461, 3
        %v3797 = vsel %vm998, %v3796, %v3795
        %v3798 = vrot.slane %v3462, 2
        %v3799 = vsel %vm1001, %v3798, %v3797
        %v3800 = vrot.slane %v3463, 1
        %v3801 = vsel %vm1004, %v3800, %v3799
        %v3802 = vrot.slane %v3465, 7
        %v3803 = vsel %vm986, %v3802, %v3464
        %v3804 = vrot.slane %v3466, 6
        %v3805 = vsel %vm989, %v3804, %v3803
        %v3806 = vrot.slane %v3467, 5
        %v3807 = vsel %vm992, %v3806, %v3805
        %v3808 = vrot.slane %v3468, 4
        %v3809 = vsel %vm995, %v3808, %v3807
        %v3810 = vrot.slane %v3469, 3
        %v3811 = vsel %vm998, %v3810, %v3809
        %v3812 = vrot.slane %v3470, 2
        %v3813 = vsel %vm1001, %v3812, %v3811
        %v3814 = vrot.slane %v3471, 1
        %v3815 = vsel %vm1004, %v3814, %v3813
        %v3816 = vrot.slane %v3473, 7
        %v3817 = vsel %vm986, %v3816, %v3472
        %v3818 = vrot.slane %v3474, 6
        %v3819 = vsel %vm989, %v3818, %v3817
        %v3820 = vrot.slane %v3475, 5
        %v3821 = vsel %vm992, %v3820, %v3819
        %v3822 = vrot.slane %v3476, 4
        %v3823 = vsel %vm995, %v3822, %v3821
        %v3824 = vrot.slane %v3477, 3
        %v3825 = vsel %vm998, %v3824, %v3823
        %v3826 = vrot.slane %v3478, 2
        %v3827 = vsel %vm1001, %v3826, %v3825
        %v3828 = vrot.slane %v3479, 1
        %v3829 = vsel %vm1004, %v3828, %v3827
        %v3830 = vrot.slane %v3481, 7
        %v3831 = vsel %vm986, %v3830, %v3480
        %v3832 = vrot.slane %v3482, 6
        %v3833 = vsel %vm989, %v3832, %v3831
        %v3834 = vrot.slane %v3483, 5
        %v3835 = vsel %vm992, %v3834, %v3833
        %v3836 = vrot.slane %v3484, 4
        %v3837 = vsel %vm995, %v3836, %v3835
        %v3838 = vrot.slane %v3485, 3
        %v3839 = vsel %vm998, %v3838, %v3837
        %v3840 = vrot.slane %v3486, 2
        %v3841 = vsel %vm1001, %v3840, %v3839
        %v3842 = vrot.slane %v3487, 1
        %v3843 = vsel %vm1004, %v3842, %v3841
        %v3844 = vrot.slane %v3489, 7
        %v3845 = vsel %vm986, %v3844, %v3488
        %v3846 = vrot.slane %v3490, 6
        %v3847 = vsel %vm989, %v3846, %v3845
        %v3848 = vrot.slane %v3491, 5
        %v3849 = vsel %vm992, %v3848, %v3847
        %v3850 = vrot.slane %v3492, 4
        %v3851 = vsel %vm995, %v3850, %v3849
        %v3852 = vrot.slane %v3493, 3
        %v3853 = vsel %vm998, %v3852, %v3851
        %v3854 = vrot.slane %v3494, 2
        %v3855 = vsel %vm1001, %v3854, %v3853
        %v3856 = vrot.slane %v3495, 1
        %v3857 = vsel %vm1004, %v3856, %v3855
        %v3858 = vrot.slane %v3497, 7
        %v3859 = vsel %vm986, %v3858, %v3496
        %v3860 = vrot.slane %v3498, 6
        %v3861 = vsel %vm989, %v3860, %v3859
        %v3862 = vrot.slane %v3499, 5
        %v3863 = vsel %vm992, %v3862, %v3861
        %v3864 = vrot.slane %v3500, 4
        %v3865 = vsel %vm995, %v3864, %v3863
        %v3866 = vrot.slane %v3501, 3
        %v3867 = vsel %vm998, %v3866, %v3865
        %v3868 = vrot.slane %v3502, 2
        %v3869 = vsel %vm1001, %v3868, %v3867
        %v3870 = vrot.slane %v3503, 1
        %v3871 = vsel %vm1004, %v3870, %v3869
        %v3872 = vrot.slane %v3505, 7
        %v3873 = vsel %vm986, %v3872, %v3504
        %v3874 = vrot.slane %v3506, 6
        %v3875 = vsel %vm989, %v3874, %v3873
        %v3876 = vrot.slane %v3507, 5
        %v3877 = vsel %vm992, %v3876, %v3875
        %v3878 = vrot.slane %v3508, 4
        %v3879 = vsel %vm995, %v3878, %v3877
        %v3880 = vrot.slane %v3509, 3
        %v3881 = vsel %vm998, %v3880, %v3879
        %v3882 = vrot.slane %v3510, 2
        %v3883 = vsel %vm1001, %v3882, %v3881
        %v3884 = vrot.slane %v3511, 1
        %v3885 = vsel %vm1004, %v3884, %v3883
        %v3886 = vrot.slane %v3513, 7
        %v3887 = vsel %vm986, %v3886, %v3512
        %v3888 = vrot.slane %v3514, 6
        %v3889 = vsel %vm989, %v3888, %v3887
        %v3890 = vrot.slane %v3515, 5
        %v3891 = vsel %vm992, %v3890, %v3889
        %v3892 = vrot.slane %v3516, 4
        %v3893 = vsel %vm995, %v3892, %v3891
        %v3894 = vrot.slane %v3517, 3
        %v3895 = vsel %vm998, %v3894, %v3893
        %v3896 = vrot.slane %v3518, 2
        %v3897 = vsel %vm1001, %v3896, %v3895
        %v3898 = vrot.slane %v3519, 1
        %v3899 = vsel %vm1004, %v3898, %v3897
        %v3900 = vrot.slane %v3521, 7
        %v3901 = vsel %vm986, %v3900, %v3520
        %v3902 = vrot.slane %v3522, 6
        %v3903 = vsel %vm989, %v3902, %v3901
        %v3904 = vrot.slane %v3523, 5
        %v3905 = vsel %vm992, %v3904, %v3903
        %v3906 = vrot.slane %v3524, 4
        %v3907 = vsel %vm995, %v3906, %v3905
        %v3908 = vrot.slane %v3525, 3
        %v3909 = vsel %vm998, %v3908, %v3907
        %v3910 = vrot.slane %v3526, 2
        %v3911 = vsel %vm1001, %v3910, %v3909
        %v3912 = vrot.slane %v3527, 1
        %v3913 = vsel %vm1004, %v3912, %v3911
        %v3914 = vrot.slane %v3529, 7
        %v3915 = vsel %vm986, %v3914, %v3528
        %v3916 = vrot.slane %v3530, 6
        %v3917 = vsel %vm989, %v3916, %v3915
        %v3918 = vrot.slane %v3531, 5
        %v3919 = vsel %vm992, %v3918, %v3917
        %v3920 = vrot.slane %v3532, 4
        %v3921 = vsel %vm995, %v3920, %v3919
        %v3922 = vrot.slane %v3533, 3
        %v3923 = vsel %vm998, %v3922, %v3921
        %v3924 = vrot.slane %v3534, 2
        %v3925 = vsel %vm1001, %v3924, %v3923
        %v3926 = vrot.slane %v3535, 1
        %v3927 = vsel %vm1004, %v3926, %v3925
        %v3928 = vrot.slane %v3537, 7
        %v3929 = vsel %vm986, %v3928, %v3536
        %v3930 = vrot.slane %v3538, 6
        %v3931 = vsel %vm989, %v3930, %v3929
        %v3932 = vrot.slane %v3539, 5
        %v3933 = vsel %vm992, %v3932, %v3931
        %v3934 = vrot.slane %v3540, 4
        %v3935 = vsel %vm995, %v3934, %v3933
        %v3936 = vrot.slane %v3541, 3
        %v3937 = vsel %vm998, %v3936, %v3935
        %v3938 = vrot.slane %v3542, 2
        %v3939 = vsel %vm1001, %v3938, %v3937
        %v3940 = vrot.slane %v3543, 1
        %v3941 = vsel %vm1004, %v3940, %v3939
        %v3942 = vrot.slane %v3545, 7
        %v3943 = vsel %vm986, %v3942, %v3544
        %v3944 = vrot.slane %v3546, 6
        %v3945 = vsel %vm989, %v3944, %v3943
        %v3946 = vrot.slane %v3547, 5
        %v3947 = vsel %vm992, %v3946, %v3945
        %v3948 = vrot.slane %v3548, 4
        %v3949 = vsel %vm995, %v3948, %v3947
        %v3950 = vrot.slane %v3549, 3
        %v3951 = vsel %vm998, %v3950, %v3949
        %v3952 = vrot.slane %v3550, 2
        %v3953 = vsel %vm1001, %v3952, %v3951
        %v3954 = vrot.slane %v3551, 1
        %v3955 = vsel %vm1004, %v3954, %v3953
        %v3956 = vrot.slane %v3553, 7
        %v3957 = vsel %vm986, %v3956, %v3552
        %v3958 = vrot.slane %v3554, 6
        %v3959 = vsel %vm989, %v3958, %v3957
        %v3960 = vrot.slane %v3555, 5
        %v3961 = vsel %vm992, %v3960, %v3959
        %v3962 = vrot.slane %v3556, 4
        %v3963 = vsel %vm995, %v3962, %v3961
        %v3964 = vrot.slane %v3557, 3
        %v3965 = vsel %vm998, %v3964, %v3963
        %v3966 = vrot.slane %v3558, 2
        %v3967 = vsel %vm1001, %v3966, %v3965
        %v3968 = vrot.slane %v3559, 1
        %v3969 = vsel %vm1004, %v3968, %v3967
        %v3970 = vrot.slane %v3561, 7
        %v3971 = vsel %vm986, %v3970, %v3560
        %v3972 = vrot.slane %v3562, 6
        %v3973 = vsel %vm989, %v3972, %v3971
        %v3974 = vrot.slane %v3563, 5
        %v3975 = vsel %vm992, %v3974, %v3973
        %v3976 = vrot.slane %v3564, 4
        %v3977 = vsel %vm995, %v3976, %v3975
        %v3978 = vrot.slane %v3565, 3
        %v3979 = vsel %vm998, %v3978, %v3977
        %v3980 = vrot.slane %v3566, 2
        %v3981 = vsel %vm1001, %v3980, %v3979
        %v3982 = vrot.slane %v3567, 1
        %v3983 = vsel %vm1004, %v3982, %v3981
        %v4000 = vmul.f32 %v3570, %v3773
        %v4001 = vmul.f32 %v3574, %v3787
        %v4002 = vmul.f32 %v3578, %v3801
        %v4003 = vmul.f32 %v3582, %v3815
        %v4004 = vmul.f32 %v3586, %v3829
        %v4005 = vmul.f32 %v3590, %v3843
        %v4006 = vmul.f32 %v3594, %v3857
        %v4007 = vmul.f32 %v3598, %v3871
        %v4008 = vmul.f32 %v3602, %v3885
        %v4009 = vmul.f32 %v3606, %v3899
        %v4010 = vmul.f32 %v3610, %v3913
        %v4011 = vmul.f32 %v3614, %v3927
        %v4012 = vmul.f32 %v3618, %v3941
        %v4013 = vmul.f32 %v3622, %v3955
        %v4014 = vmul.f32 %v3626, %v3969
        %v4015 = vmul.f32 %v3630, %v3983
        %v4016 = vadd.f32 %v3328, %v4000
        %v4017 = vadd.f32 %v3329, %v4001
        %v4018 = vadd.f32 %v3330, %v4002
        %v4019 = vadd.f32 %v3331, %v4003
        %v4020 = vadd.f32 %v3332, %v4004
        %v4021 = vadd.f32 %v3333, %v4005
        %v4022 = vadd.f32 %v3334, %v4006
        %v4023 = vadd.f32 %v3335, %v4007
        %v4024 = vadd.f32 %v3336, %v4008
        %v4025 = vadd.f32 %v3337, %v4009
        %v4026 = vadd.f32 %v3338, %v4010
        %v4027 = vadd.f32 %v3339, %v4011
        %v4028 = vadd.f32 %v3340, %v4012
        %v4029 = vadd.f32 %v3341, %v4013
        %v4030 = vadd.f32 %v3342, %v4014
        %v4031 = vadd.f32 %v3343, %v4015
        %4032 = vset.pattern.permute.xlu0 4
        %4033 = vperm.xlu0 %4032, %v633
        %v4034 = vpop.permute.xlu0 %4033
        %4036 = vset.pattern.permute.xlu0 4
        %4037 = vperm.xlu0 %4036, %v634
        %v4038 = vpop.permute.xlu0 %4037
        %4040 = vset.pattern.permute.xlu0 4
        %4041 = vperm.xlu0 %4040, %v635
        %v4042 = vpop.permute.xlu0 %4041
        %4044 = vset.pattern.permute.xlu0 4
        %4045 = vperm.xlu0 %4044, %v636
        %v4046 = vpop.permute.xlu0 %4045
        %4048 = vset.pattern.permute.xlu0 4
        %4049 = vperm.xlu0 %4048, %v637
        %v4050 = vpop.permute.xlu0 %4049
        %4052 = vset.pattern.permute.xlu0 4
        %4053 = vperm.xlu0 %4052, %v638
        %v4054 = vpop.permute.xlu0 %4053
        %4056 = vset.pattern.permute.xlu0 4
        %4057 = vperm.xlu0 %4056, %v639
        %v4058 = vpop.permute.xlu0 %4057
        %4060 = vset.pattern.permute.xlu0 4
        %4061 = vperm.xlu0 %4060, %v640
        %v4062 = vpop.permute.xlu0 %4061
        %4064 = vset.pattern.permute.xlu0 4
        %4065 = vperm.xlu0 %4064, %v641
        %v4066 = vpop.permute.xlu0 %4065
        %4068 = vset.pattern.permute.xlu0 4
        %4069 = vperm.xlu0 %4068, %v642
        %v4070 = vpop.permute.xlu0 %4069
        %4072 = vset.pattern.permute.xlu0 4
        %4073 = vperm.xlu0 %4072, %v643
        %v4074 = vpop.permute.xlu0 %4073
        %4076 = vset.pattern.permute.xlu0 4
        %4077 = vperm.xlu0 %4076, %v644
        %v4078 = vpop.permute.xlu0 %4077
        %4080 = vset.pattern.permute.xlu0 4
        %4081 = vperm.xlu0 %4080, %v645
        %v4082 = vpop.permute.xlu0 %4081
        %4084 = vset.pattern.permute.xlu0 4
        %4085 = vperm.xlu0 %4084, %v646
        %v4086 = vpop.permute.xlu0 %4085
        %4088 = vset.pattern.permute.xlu0 4
        %4089 = vperm.xlu0 %4088, %v647
        %v4090 = vpop.permute.xlu0 %4089
        %4092 = vset.pattern.permute.xlu0 4
        %4093 = vperm.xlu0 %4092, %v648
        %v4094 = vpop.permute.xlu0 %4093
        %v4096 = vmul.f32 %v4034, %v3773
        %v4097 = vmul.f32 %v4038, %v3787
        %v4098 = vmul.f32 %v4042, %v3801
        %v4099 = vmul.f32 %v4046, %v3815
        %v4100 = vmul.f32 %v4050, %v3829
        %v4101 = vmul.f32 %v4054, %v3843
        %v4102 = vmul.f32 %v4058, %v3857
        %v4103 = vmul.f32 %v4062, %v3871
        %v4104 = vmul.f32 %v4066, %v3885
        %v4105 = vmul.f32 %v4070, %v3899
        %v4106 = vmul.f32 %v4074, %v3913
        %v4107 = vmul.f32 %v4078, %v3927
        %v4108 = vmul.f32 %v4082, %v3941
        %v4109 = vmul.f32 %v4086, %v3955
        %v4110 = vmul.f32 %v4090, %v3969
        %v4111 = vmul.f32 %v4094, %v3983
        %v4112 = vadd.f32 %v3424, %v4096
        %v4113 = vadd.f32 %v3425, %v4097
        %v4114 = vadd.f32 %v3426, %v4098
        %v4115 = vadd.f32 %v3427, %v4099
        %v4116 = vadd.f32 %v3428, %v4100
        %v4117 = vadd.f32 %v3429, %v4101
        %v4118 = vadd.f32 %v3430, %v4102
        %v4119 = vadd.f32 %v3431, %v4103
        %v4120 = vadd.f32 %v3432, %v4104
        %v4121 = vadd.f32 %v3433, %v4105
        %v4122 = vadd.f32 %v3434, %v4106
        %v4123 = vadd.f32 %v3435, %v4107
        %v4124 = vadd.f32 %v3436, %v4108
        %v4125 = vadd.f32 %v3437, %v4109
        %v4126 = vadd.f32 %v3438, %v4110
        %v4127 = vadd.f32 %v3439, %v4111
        %v4128 = vld [vmem:[%s610 + $0x5] sm:$0x1]
        %v4129 = vld [vmem:[%s610 + $0xd] sm:$0x1]
        %v4130 = vld [vmem:[%s610 + $0x15] sm:$0x1]
        %v4131 = vld [vmem:[%s610 + $0x1d] sm:$0x1]
        %v4132 = vld [vmem:[%s610 + $0x25] sm:$0x1]
        %v4133 = vld [vmem:[%s610 + $0x2d] sm:$0x1]
        %v4134 = vld [vmem:[%s610 + $0x35] sm:$0x1]
        %v4135 = vld [vmem:[%s610 + $0x3d] sm:$0x1]
        %v4136 = vld [vmem:[%s610 + $0x45] sm:$0x1]
        %v4137 = vld [vmem:[%s610 + $0x4d] sm:$0x1]
        %v4138 = vld [vmem:[%s610 + $0x55] sm:$0x1]
        %v4139 = vld [vmem:[%s610 + $0x5d] sm:$0x1]
        %v4140 = vld [vmem:[%s610 + $0x65] sm:$0x1]
        %v4141 = vld [vmem:[%s610 + $0x6d] sm:$0x1]
        %v4142 = vld [vmem:[%s610 + $0x75] sm:$0x1]
        %v4143 = vld [vmem:[%s610 + $0x7d] sm:$0x1]
        %v4144 = vld [vmem:[%s610 + $0x85] sm:$0x1]
        %v4145 = vld [vmem:[%s610 + $0x8d] sm:$0x1]
        %v4146 = vld [vmem:[%s610 + $0x95] sm:$0x1]
        %v4147 = vld [vmem:[%s610 + $0x9d] sm:$0x1]
        %v4148 = vld [vmem:[%s610 + $0xa5] sm:$0x1]
        %v4149 = vld [vmem:[%s610 + $0xad] sm:$0x1]
        %v4150 = vld [vmem:[%s610 + $0xb5] sm:$0x1]
        %v4151 = vld [vmem:[%s610 + $0xbd] sm:$0x1]
        %v4152 = vld [vmem:[%s610 + $0xc5] sm:$0x1]
        %v4153 = vld [vmem:[%s610 + $0xcd] sm:$0x1]
        %v4154 = vld [vmem:[%s610 + $0xd5] sm:$0x1]
        %v4155 = vld [vmem:[%s610 + $0xdd] sm:$0x1]
        %v4156 = vld [vmem:[%s610 + $0xe5] sm:$0x1]
        %v4157 = vld [vmem:[%s610 + $0xed] sm:$0x1]
        %v4158 = vld [vmem:[%s610 + $0xf5] sm:$0x1]
        %v4159 = vld [vmem:[%s610 + $0xfd] sm:$0x1]
        %v4160 = vld [vmem:[%s610 + $0x105] sm:$0x1]
        %v4161 = vld [vmem:[%s610 + $0x10d] sm:$0x1]
        %v4162 = vld [vmem:[%s610 + $0x115] sm:$0x1]
        %v4163 = vld [vmem:[%s610 + $0x11d] sm:$0x1]
        %v4164 = vld [vmem:[%s610 + $0x125] sm:$0x1]
        %v4165 = vld [vmem:[%s610 + $0x12d] sm:$0x1]
        %v4166 = vld [vmem:[%s610 + $0x135] sm:$0x1]
        %v4167 = vld [vmem:[%s610 + $0x13d] sm:$0x1]
        %v4168 = vld [vmem:[%s610 + $0x145] sm:$0x1]
        %v4169 = vld [vmem:[%s610 + $0x14d] sm:$0x1]
        %v4170 = vld [vmem:[%s610 + $0x155] sm:$0x1]
        %v4171 = vld [vmem:[%s610 + $0x15d] sm:$0x1]
        %v4172 = vld [vmem:[%s610 + $0x165] sm:$0x1]
        %v4173 = vld [vmem:[%s610 + $0x16d] sm:$0x1]
        %v4174 = vld [vmem:[%s610 + $0x175] sm:$0x1]
        %v4175 = vld [vmem:[%s610 + $0x17d] sm:$0x1]
        %v4176 = vld [vmem:[%s610 + $0x185] sm:$0x1]
        %v4177 = vld [vmem:[%s610 + $0x18d] sm:$0x1]
        %v4178 = vld [vmem:[%s610 + $0x195] sm:$0x1]
        %v4179 = vld [vmem:[%s610 + $0x19d] sm:$0x1]
        %v4180 = vld [vmem:[%s610 + $0x1a5] sm:$0x1]
        %v4181 = vld [vmem:[%s610 + $0x1ad] sm:$0x1]
        %v4182 = vld [vmem:[%s610 + $0x1b5] sm:$0x1]
        %v4183 = vld [vmem:[%s610 + $0x1bd] sm:$0x1]
        %v4184 = vld [vmem:[%s610 + $0x1c5] sm:$0x1]
        %v4185 = vld [vmem:[%s610 + $0x1cd] sm:$0x1]
        %v4186 = vld [vmem:[%s610 + $0x1d5] sm:$0x1]
        %v4187 = vld [vmem:[%s610 + $0x1dd] sm:$0x1]
        %v4188 = vld [vmem:[%s610 + $0x1e5] sm:$0x1]
        %v4189 = vld [vmem:[%s610 + $0x1ed] sm:$0x1]
        %v4190 = vld [vmem:[%s610 + $0x1f5] sm:$0x1]
        %v4191 = vld [vmem:[%s610 + $0x1fd] sm:$0x1]
        %v4192 = vld [vmem:[%s610 + $0x205] sm:$0x1]
        %v4193 = vld [vmem:[%s610 + $0x20d] sm:$0x1]
        %v4194 = vld [vmem:[%s610 + $0x215] sm:$0x1]
        %v4195 = vld [vmem:[%s610 + $0x21d] sm:$0x1]
        %v4196 = vld [vmem:[%s610 + $0x225] sm:$0x1]
        %v4197 = vld [vmem:[%s610 + $0x22d] sm:$0x1]
        %v4198 = vld [vmem:[%s610 + $0x235] sm:$0x1]
        %v4199 = vld [vmem:[%s610 + $0x23d] sm:$0x1]
        %v4200 = vld [vmem:[%s610 + $0x245] sm:$0x1]
        %v4201 = vld [vmem:[%s610 + $0x24d] sm:$0x1]
        %v4202 = vld [vmem:[%s610 + $0x255] sm:$0x1]
        %v4203 = vld [vmem:[%s610 + $0x25d] sm:$0x1]
        %v4204 = vld [vmem:[%s610 + $0x265] sm:$0x1]
        %v4205 = vld [vmem:[%s610 + $0x26d] sm:$0x1]
        %v4206 = vld [vmem:[%s610 + $0x275] sm:$0x1]
        %v4207 = vld [vmem:[%s610 + $0x27d] sm:$0x1]
        %v4208 = vld [vmem:[%s610 + $0x285] sm:$0x1]
        %v4209 = vld [vmem:[%s610 + $0x28d] sm:$0x1]
        %v4210 = vld [vmem:[%s610 + $0x295] sm:$0x1]
        %v4211 = vld [vmem:[%s610 + $0x29d] sm:$0x1]
        %v4212 = vld [vmem:[%s610 + $0x2a5] sm:$0x1]
        %v4213 = vld [vmem:[%s610 + $0x2ad] sm:$0x1]
        %v4214 = vld [vmem:[%s610 + $0x2b5] sm:$0x1]
        %v4215 = vld [vmem:[%s610 + $0x2bd] sm:$0x1]
        %v4216 = vld [vmem:[%s610 + $0x2c5] sm:$0x1]
        %v4217 = vld [vmem:[%s610 + $0x2cd] sm:$0x1]
        %v4218 = vld [vmem:[%s610 + $0x2d5] sm:$0x1]
        %v4219 = vld [vmem:[%s610 + $0x2dd] sm:$0x1]
        %v4220 = vld [vmem:[%s610 + $0x2e5] sm:$0x1]
        %v4221 = vld [vmem:[%s610 + $0x2ed] sm:$0x1]
        %v4222 = vld [vmem:[%s610 + $0x2f5] sm:$0x1]
        %v4223 = vld [vmem:[%s610 + $0x2fd] sm:$0x1]
        %v4224 = vld [vmem:[%s610 + $0x305] sm:$0x1]
        %v4225 = vld [vmem:[%s610 + $0x30d] sm:$0x1]
        %v4226 = vld [vmem:[%s610 + $0x315] sm:$0x1]
        %v4227 = vld [vmem:[%s610 + $0x31d] sm:$0x1]
        %v4228 = vld [vmem:[%s610 + $0x325] sm:$0x1]
        %v4229 = vld [vmem:[%s610 + $0x32d] sm:$0x1]
        %v4230 = vld [vmem:[%s610 + $0x335] sm:$0x1]
        %v4231 = vld [vmem:[%s610 + $0x33d] sm:$0x1]
        %v4232 = vld [vmem:[%s610 + $0x345] sm:$0x1]
        %v4233 = vld [vmem:[%s610 + $0x34d] sm:$0x1]
        %v4234 = vld [vmem:[%s610 + $0x355] sm:$0x1]
        %v4235 = vld [vmem:[%s610 + $0x35d] sm:$0x1]
        %v4236 = vld [vmem:[%s610 + $0x365] sm:$0x1]
        %v4237 = vld [vmem:[%s610 + $0x36d] sm:$0x1]
        %v4238 = vld [vmem:[%s610 + $0x375] sm:$0x1]
        %v4239 = vld [vmem:[%s610 + $0x37d] sm:$0x1]
        %v4240 = vld [vmem:[%s610 + $0x385] sm:$0x1]
        %v4241 = vld [vmem:[%s610 + $0x38d] sm:$0x1]
        %v4242 = vld [vmem:[%s610 + $0x395] sm:$0x1]
        %v4243 = vld [vmem:[%s610 + $0x39d] sm:$0x1]
        %v4244 = vld [vmem:[%s610 + $0x3a5] sm:$0x1]
        %v4245 = vld [vmem:[%s610 + $0x3ad] sm:$0x1]
        %v4246 = vld [vmem:[%s610 + $0x3b5] sm:$0x1]
        %v4247 = vld [vmem:[%s610 + $0x3bd] sm:$0x1]
        %v4248 = vld [vmem:[%s610 + $0x3c5] sm:$0x1]
        %v4249 = vld [vmem:[%s610 + $0x3cd] sm:$0x1]
        %v4250 = vld [vmem:[%s610 + $0x3d5] sm:$0x1]
        %v4251 = vld [vmem:[%s610 + $0x3dd] sm:$0x1]
        %v4252 = vld [vmem:[%s610 + $0x3e5] sm:$0x1]
        %v4253 = vld [vmem:[%s610 + $0x3ed] sm:$0x1]
        %v4254 = vld [vmem:[%s610 + $0x3f5] sm:$0x1]
        %v4255 = vld [vmem:[%s610 + $0x3fd] sm:$0x1]
        %4256 = vset.pattern.permute.xlu0 5
        %4257 = vperm.xlu0 %4256, %v616
        %v4258 = vpop.permute.xlu0 %4257
        %4260 = vset.pattern.permute.xlu0 5
        %4261 = vperm.xlu0 %4260, %v617
        %v4262 = vpop.permute.xlu0 %4261
        %4264 = vset.pattern.permute.xlu0 5
        %4265 = vperm.xlu0 %4264, %v618
        %v4266 = vpop.permute.xlu0 %4265
        %4268 = vset.pattern.permute.xlu0 5
        %4269 = vperm.xlu0 %4268, %v619
        %v4270 = vpop.permute.xlu0 %4269
        %4272 = vset.pattern.permute.xlu0 5
        %4273 = vperm.xlu0 %4272, %v620
        %v4274 = vpop.permute.xlu0 %4273
        %4276 = vset.pattern.permute.xlu0 5
        %4277 = vperm.xlu0 %4276, %v621
        %v4278 = vpop.permute.xlu0 %4277
        %4280 = vset.pattern.permute.xlu0 5
        %4281 = vperm.xlu0 %4280, %v622
        %v4282 = vpop.permute.xlu0 %4281
        %4284 = vset.pattern.permute.xlu0 5
        %4285 = vperm.xlu0 %4284, %v623
        %v4286 = vpop.permute.xlu0 %4285
        %4288 = vset.pattern.permute.xlu0 5
        %4289 = vperm.xlu0 %4288, %v624
        %v4290 = vpop.permute.xlu0 %4289
        %4292 = vset.pattern.permute.xlu0 5
        %4293 = vperm.xlu0 %4292, %v625
        %v4294 = vpop.permute.xlu0 %4293
        %4296 = vset.pattern.permute.xlu0 5
        %4297 = vperm.xlu0 %4296, %v626
        %v4298 = vpop.permute.xlu0 %4297
        %4300 = vset.pattern.permute.xlu0 5
        %4301 = vperm.xlu0 %4300, %v627
        %v4302 = vpop.permute.xlu0 %4301
        %4304 = vset.pattern.permute.xlu0 5
        %4305 = vperm.xlu0 %4304, %v628
        %v4306 = vpop.permute.xlu0 %4305
        %4308 = vset.pattern.permute.xlu0 5
        %4309 = vperm.xlu0 %4308, %v629
        %v4310 = vpop.permute.xlu0 %4309
        %4312 = vset.pattern.permute.xlu0 5
        %4313 = vperm.xlu0 %4312, %v630
        %v4314 = vpop.permute.xlu0 %4313
        %4316 = vset.pattern.permute.xlu0 5
        %4317 = vperm.xlu0 %4316, %v631
        %v4318 = vpop.permute.xlu0 %4317
        %v4448 = vrot.slane %v4129, 7
        %v4449 = vsel %vm986, %v4448, %v4128
        %v4450 = vrot.slane %v4130, 6
        %v4451 = vsel %vm989, %v4450, %v4449
        %v4452 = vrot.slane %v4131, 5
        %v4453 = vsel %vm992, %v4452, %v4451
        %v4454 = vrot.slane %v4132, 4
        %v4455 = vsel %vm995, %v4454, %v4453
        %v4456 = vrot.slane %v4133, 3
        %v4457 = vsel %vm998, %v4456, %v4455
        %v4458 = vrot.slane %v4134, 2
        %v4459 = vsel %vm1001, %v4458, %v4457
        %v4460 = vrot.slane %v4135, 1
        %v4461 = vsel %vm1004, %v4460, %v4459
        %v4462 = vrot.slane %v4137, 7
        %v4463 = vsel %vm986, %v4462, %v4136
        %v4464 = vrot.slane %v4138, 6
        %v4465 = vsel %vm989, %v4464, %v4463
        %v4466 = vrot.slane %v4139, 5
        %v4467 = vsel %vm992, %v4466, %v4465
        %v4468 = vrot.slane %v4140, 4
        %v4469 = vsel %vm995, %v4468, %v4467
        %v4470 = vrot.slane %v4141, 3
        %v4471 = vsel %vm998, %v4470, %v4469
        %v4472 = vrot.slane %v4142, 2
        %v4473 = vsel %vm1001, %v4472, %v4471
        %v4474 = vrot.slane %v4143, 1
        %v4475 = vsel %vm1004, %v4474, %v4473
        %v4476 = vrot.slane %v4145, 7
        %v4477 = vsel %vm986, %v4476, %v4144
        %v4478 = vrot.slane %v4146, 6
        %v4479 = vsel %vm989, %v4478, %v4477
        %v4480 = vrot.slane %v4147, 5
        %v4481 = vsel %vm992, %v4480, %v4479
        %v4482 = vrot.slane %v4148, 4
        %v4483 = vsel %vm995, %v4482, %v4481
        %v4484 = vrot.slane %v4149, 3
        %v4485 = vsel %vm998, %v4484, %v4483
        %v4486 = vrot.slane %v4150, 2
        %v4487 = vsel %vm1001, %v4486, %v4485
        %v4488 = vrot.slane %v4151, 1
        %v4489 = vsel %vm1004, %v4488, %v4487
        %v4490 = vrot.slane %v4153, 7
        %v4491 = vsel %vm986, %v4490, %v4152
        %v4492 = vrot.slane %v4154, 6
        %v4493 = vsel %vm989, %v4492, %v4491
        %v4494 = vrot.slane %v4155, 5
        %v4495 = vsel %vm992, %v4494, %v4493
        %v4496 = vrot.slane %v4156, 4
        %v4497 = vsel %vm995, %v4496, %v4495
        %v4498 = vrot.slane %v4157, 3
        %v4499 = vsel %vm998, %v4498, %v4497
        %v4500 = vrot.slane %v4158, 2
        %v4501 = vsel %vm1001, %v4500, %v4499
        %v4502 = vrot.slane %v4159, 1
        %v4503 = vsel %vm1004, %v4502, %v4501
        %v4504 = vrot.slane %v4161, 7
        %v4505 = vsel %vm986, %v4504, %v4160
        %v4506 = vrot.slane %v4162, 6
        %v4507 = vsel %vm989, %v4506, %v4505
        %v4508 = vrot.slane %v4163, 5
        %v4509 = vsel %vm992, %v4508, %v4507
        %v4510 = vrot.slane %v4164, 4
        %v4511 = vsel %vm995, %v4510, %v4509
        %v4512 = vrot.slane %v4165, 3
        %v4513 = vsel %vm998, %v4512, %v4511
        %v4514 = vrot.slane %v4166, 2
        %v4515 = vsel %vm1001, %v4514, %v4513
        %v4516 = vrot.slane %v4167, 1
        %v4517 = vsel %vm1004, %v4516, %v4515
        %v4518 = vrot.slane %v4169, 7
        %v4519 = vsel %vm986, %v4518, %v4168
        %v4520 = vrot.slane %v4170, 6
        %v4521 = vsel %vm989, %v4520, %v4519
        %v4522 = vrot.slane %v4171, 5
        %v4523 = vsel %vm992, %v4522, %v4521
        %v4524 = vrot.slane %v4172, 4
        %v4525 = vsel %vm995, %v4524, %v4523
        %v4526 = vrot.slane %v4173, 3
        %v4527 = vsel %vm998, %v4526, %v4525
        %v4528 = vrot.slane %v4174, 2
        %v4529 = vsel %vm1001, %v4528, %v4527
        %v4530 = vrot.slane %v4175, 1
        %v4531 = vsel %vm1004, %v4530, %v4529
        %v4532 = vrot.slane %v4177, 7
        %v4533 = vsel %vm986, %v4532, %v4176
        %v4534 = vrot.slane %v4178, 6
        %v4535 = vsel %vm989, %v4534, %v4533
        %v4536 = vrot.slane %v4179, 5
        %v4537 = vsel %vm992, %v4536, %v4535
        %v4538 = vrot.slane %v4180, 4
        %v4539 = vsel %vm995, %v4538, %v4537
        %v4540 = vrot.slane %v4181, 3
        %v4541 = vsel %vm998, %v4540, %v4539
        %v4542 = vrot.slane %v4182, 2
        %v4543 = vsel %vm1001, %v4542, %v4541
        %v4544 = vrot.slane %v4183, 1
        %v4545 = vsel %vm1004, %v4544, %v4543
        %v4546 = vrot.slane %v4185, 7
        %v4547 = vsel %vm986, %v4546, %v4184
        %v4548 = vrot.slane %v4186, 6
        %v4549 = vsel %vm989, %v4548, %v4547
        %v4550 = vrot.slane %v4187, 5
        %v4551 = vsel %vm992, %v4550, %v4549
        %v4552 = vrot.slane %v4188, 4
        %v4553 = vsel %vm995, %v4552, %v4551
        %v4554 = vrot.slane %v4189, 3
        %v4555 = vsel %vm998, %v4554, %v4553
        %v4556 = vrot.slane %v4190, 2
        %v4557 = vsel %vm1001, %v4556, %v4555
        %v4558 = vrot.slane %v4191, 1
        %v4559 = vsel %vm1004, %v4558, %v4557
        %v4560 = vrot.slane %v4193, 7
        %v4561 = vsel %vm986, %v4560, %v4192
        %v4562 = vrot.slane %v4194, 6
        %v4563 = vsel %vm989, %v4562, %v4561
        %v4564 = vrot.slane %v4195, 5
        %v4565 = vsel %vm992, %v4564, %v4563
        %v4566 = vrot.slane %v4196, 4
        %v4567 = vsel %vm995, %v4566, %v4565
        %v4568 = vrot.slane %v4197, 3
        %v4569 = vsel %vm998, %v4568, %v4567
        %v4570 = vrot.slane %v4198, 2
        %v4571 = vsel %vm1001, %v4570, %v4569
        %v4572 = vrot.slane %v4199, 1
        %v4573 = vsel %vm1004, %v4572, %v4571
        %v4574 = vrot.slane %v4201, 7
        %v4575 = vsel %vm986, %v4574, %v4200
        %v4576 = vrot.slane %v4202, 6
        %v4577 = vsel %vm989, %v4576, %v4575
        %v4578 = vrot.slane %v4203, 5
        %v4579 = vsel %vm992, %v4578, %v4577
        %v4580 = vrot.slane %v4204, 4
        %v4581 = vsel %vm995, %v4580, %v4579
        %v4582 = vrot.slane %v4205, 3
        %v4583 = vsel %vm998, %v4582, %v4581
        %v4584 = vrot.slane %v4206, 2
        %v4585 = vsel %vm1001, %v4584, %v4583
        %v4586 = vrot.slane %v4207, 1
        %v4587 = vsel %vm1004, %v4586, %v4585
        %v4588 = vrot.slane %v4209, 7
        %v4589 = vsel %vm986, %v4588, %v4208
        %v4590 = vrot.slane %v4210, 6
        %v4591 = vsel %vm989, %v4590, %v4589
        %v4592 = vrot.slane %v4211, 5
        %v4593 = vsel %vm992, %v4592, %v4591
        %v4594 = vrot.slane %v4212, 4
        %v4595 = vsel %vm995, %v4594, %v4593
        %v4596 = vrot.slane %v4213, 3
        %v4597 = vsel %vm998, %v4596, %v4595
        %v4598 = vrot.slane %v4214, 2
        %v4599 = vsel %vm1001, %v4598, %v4597
        %v4600 = vrot.slane %v4215, 1
        %v4601 = vsel %vm1004, %v4600, %v4599
        %v4602 = vrot.slane %v4217, 7
        %v4603 = vsel %vm986, %v4602, %v4216
        %v4604 = vrot.slane %v4218, 6
        %v4605 = vsel %vm989, %v4604, %v4603
        %v4606 = vrot.slane %v4219, 5
        %v4607 = vsel %vm992, %v4606, %v4605
        %v4608 = vrot.slane %v4220, 4
        %v4609 = vsel %vm995, %v4608, %v4607
        %v4610 = vrot.slane %v4221, 3
        %v4611 = vsel %vm998, %v4610, %v4609
        %v4612 = vrot.slane %v4222, 2
        %v4613 = vsel %vm1001, %v4612, %v4611
        %v4614 = vrot.slane %v4223, 1
        %v4615 = vsel %vm1004, %v4614, %v4613
        %v4616 = vrot.slane %v4225, 7
        %v4617 = vsel %vm986, %v4616, %v4224
        %v4618 = vrot.slane %v4226, 6
        %v4619 = vsel %vm989, %v4618, %v4617
        %v4620 = vrot.slane %v4227, 5
        %v4621 = vsel %vm992, %v4620, %v4619
        %v4622 = vrot.slane %v4228, 4
        %v4623 = vsel %vm995, %v4622, %v4621
        %v4624 = vrot.slane %v4229, 3
        %v4625 = vsel %vm998, %v4624, %v4623
        %v4626 = vrot.slane %v4230, 2
        %v4627 = vsel %vm1001, %v4626, %v4625
        %v4628 = vrot.slane %v4231, 1
        %v4629 = vsel %vm1004, %v4628, %v4627
        %v4630 = vrot.slane %v4233, 7
        %v4631 = vsel %vm986, %v4630, %v4232
        %v4632 = vrot.slane %v4234, 6
        %v4633 = vsel %vm989, %v4632, %v4631
        %v4634 = vrot.slane %v4235, 5
        %v4635 = vsel %vm992, %v4634, %v4633
        %v4636 = vrot.slane %v4236, 4
        %v4637 = vsel %vm995, %v4636, %v4635
        %v4638 = vrot.slane %v4237, 3
        %v4639 = vsel %vm998, %v4638, %v4637
        %v4640 = vrot.slane %v4238, 2
        %v4641 = vsel %vm1001, %v4640, %v4639
        %v4642 = vrot.slane %v4239, 1
        %v4643 = vsel %vm1004, %v4642, %v4641
        %v4644 = vrot.slane %v4241, 7
        %v4645 = vsel %vm986, %v4644, %v4240
        %v4646 = vrot.slane %v4242, 6
        %v4647 = vsel %vm989, %v4646, %v4645
        %v4648 = vrot.slane %v4243, 5
        %v4649 = vsel %vm992, %v4648, %v4647
        %v4650 = vrot.slane %v4244, 4
        %v4651 = vsel %vm995, %v4650, %v4649
        %v4652 = vrot.slane %v4245, 3
        %v4653 = vsel %vm998, %v4652, %v4651
        %v4654 = vrot.slane %v4246, 2
        %v4655 = vsel %vm1001, %v4654, %v4653
        %v4656 = vrot.slane %v4247, 1
        %v4657 = vsel %vm1004, %v4656, %v4655
        %v4658 = vrot.slane %v4249, 7
        %v4659 = vsel %vm986, %v4658, %v4248
        %v4660 = vrot.slane %v4250, 6
        %v4661 = vsel %vm989, %v4660, %v4659
        %v4662 = vrot.slane %v4251, 5
        %v4663 = vsel %vm992, %v4662, %v4661
        %v4664 = vrot.slane %v4252, 4
        %v4665 = vsel %vm995, %v4664, %v4663
        %v4666 = vrot.slane %v4253, 3
        %v4667 = vsel %vm998, %v4666, %v4665
        %v4668 = vrot.slane %v4254, 2
        %v4669 = vsel %vm1001, %v4668, %v4667
        %v4670 = vrot.slane %v4255, 1
        %v4671 = vsel %vm1004, %v4670, %v4669
        %v4688 = vmul.f32 %v4258, %v4461
        %v4689 = vmul.f32 %v4262, %v4475
        %v4690 = vmul.f32 %v4266, %v4489
        %v4691 = vmul.f32 %v4270, %v4503
        %v4692 = vmul.f32 %v4274, %v4517
        %v4693 = vmul.f32 %v4278, %v4531
        %v4694 = vmul.f32 %v4282, %v4545
        %v4695 = vmul.f32 %v4286, %v4559
        %v4696 = vmul.f32 %v4290, %v4573
        %v4697 = vmul.f32 %v4294, %v4587
        %v4698 = vmul.f32 %v4298, %v4601
        %v4699 = vmul.f32 %v4302, %v4615
        %v4700 = vmul.f32 %v4306, %v4629
        %v4701 = vmul.f32 %v4310, %v4643
        %v4702 = vmul.f32 %v4314, %v4657
        %v4703 = vmul.f32 %v4318, %v4671
        %v4704 = vadd.f32 %v4016, %v4688
        %v4705 = vadd.f32 %v4017, %v4689
        %v4706 = vadd.f32 %v4018, %v4690
        %v4707 = vadd.f32 %v4019, %v4691
        %v4708 = vadd.f32 %v4020, %v4692
        %v4709 = vadd.f32 %v4021, %v4693
        %v4710 = vadd.f32 %v4022, %v4694
        %v4711 = vadd.f32 %v4023, %v4695
        %v4712 = vadd.f32 %v4024, %v4696
        %v4713 = vadd.f32 %v4025, %v4697
        %v4714 = vadd.f32 %v4026, %v4698
        %v4715 = vadd.f32 %v4027, %v4699
        %v4716 = vadd.f32 %v4028, %v4700
        %v4717 = vadd.f32 %v4029, %v4701
        %v4718 = vadd.f32 %v4030, %v4702
        %v4719 = vadd.f32 %v4031, %v4703
        %4720 = vset.pattern.permute.xlu0 5
        %4721 = vperm.xlu0 %4720, %v633
        %v4722 = vpop.permute.xlu0 %4721
        %4724 = vset.pattern.permute.xlu0 5
        %4725 = vperm.xlu0 %4724, %v634
        %v4726 = vpop.permute.xlu0 %4725
        %4728 = vset.pattern.permute.xlu0 5
        %4729 = vperm.xlu0 %4728, %v635
        %v4730 = vpop.permute.xlu0 %4729
        %4732 = vset.pattern.permute.xlu0 5
        %4733 = vperm.xlu0 %4732, %v636
        %v4734 = vpop.permute.xlu0 %4733
        %4736 = vset.pattern.permute.xlu0 5
        %4737 = vperm.xlu0 %4736, %v637
        %v4738 = vpop.permute.xlu0 %4737
        %4740 = vset.pattern.permute.xlu0 5
        %4741 = vperm.xlu0 %4740, %v638
        %v4742 = vpop.permute.xlu0 %4741
        %4744 = vset.pattern.permute.xlu0 5
        %4745 = vperm.xlu0 %4744, %v639
        %v4746 = vpop.permute.xlu0 %4745
        %4748 = vset.pattern.permute.xlu0 5
        %4749 = vperm.xlu0 %4748, %v640
        %v4750 = vpop.permute.xlu0 %4749
        %4752 = vset.pattern.permute.xlu0 5
        %4753 = vperm.xlu0 %4752, %v641
        %v4754 = vpop.permute.xlu0 %4753
        %4756 = vset.pattern.permute.xlu0 5
        %4757 = vperm.xlu0 %4756, %v642
        %v4758 = vpop.permute.xlu0 %4757
        %4760 = vset.pattern.permute.xlu0 5
        %4761 = vperm.xlu0 %4760, %v643
        %v4762 = vpop.permute.xlu0 %4761
        %4764 = vset.pattern.permute.xlu0 5
        %4765 = vperm.xlu0 %4764, %v644
        %v4766 = vpop.permute.xlu0 %4765
        %4768 = vset.pattern.permute.xlu0 5
        %4769 = vperm.xlu0 %4768, %v645
        %v4770 = vpop.permute.xlu0 %4769
        %4772 = vset.pattern.permute.xlu0 5
        %4773 = vperm.xlu0 %4772, %v646
        %v4774 = vpop.permute.xlu0 %4773
        %4776 = vset.pattern.permute.xlu0 5
        %4777 = vperm.xlu0 %4776, %v647
        %v4778 = vpop.permute.xlu0 %4777
        %4780 = vset.pattern.permute.xlu0 5
        %4781 = vperm.xlu0 %4780, %v648
        %v4782 = vpop.permute.xlu0 %4781
        %v4784 = vmul.f32 %v4722, %v4461
        %v4785 = vmul.f32 %v4726, %v4475
        %v4786 = vmul.f32 %v4730, %v4489
        %v4787 = vmul.f32 %v4734, %v4503
        %v4788 = vmul.f32 %v4738, %v4517
        %v4789 = vmul.f32 %v4742, %v4531
        %v4790 = vmul.f32 %v4746, %v4545
        %v4791 = vmul.f32 %v4750, %v4559
        %v4792 = vmul.f32 %v4754, %v4573
        %v4793 = vmul.f32 %v4758, %v4587
        %v4794 = vmul.f32 %v4762, %v4601
        %v4795 = vmul.f32 %v4766, %v4615
        %v4796 = vmul.f32 %v4770, %v4629
        %v4797 = vmul.f32 %v4774, %v4643
        %v4798 = vmul.f32 %v4778, %v4657
        %v4799 = vmul.f32 %v4782, %v4671
        %v4800 = vadd.f32 %v4112, %v4784
        %v4801 = vadd.f32 %v4113, %v4785
        %v4802 = vadd.f32 %v4114, %v4786
        %v4803 = vadd.f32 %v4115, %v4787
        %v4804 = vadd.f32 %v4116, %v4788
        %v4805 = vadd.f32 %v4117, %v4789
        %v4806 = vadd.f32 %v4118, %v4790
        %v4807 = vadd.f32 %v4119, %v4791
        %v4808 = vadd.f32 %v4120, %v4792
        %v4809 = vadd.f32 %v4121, %v4793
        %v4810 = vadd.f32 %v4122, %v4794
        %v4811 = vadd.f32 %v4123, %v4795
        %v4812 = vadd.f32 %v4124, %v4796
        %v4813 = vadd.f32 %v4125, %v4797
        %v4814 = vadd.f32 %v4126, %v4798
        %v4815 = vadd.f32 %v4127, %v4799
        %v4816 = vld [vmem:[%s610 + $0x6] sm:$0x1]
        %v4817 = vld [vmem:[%s610 + $0xe] sm:$0x1]
        %v4818 = vld [vmem:[%s610 + $0x16] sm:$0x1]
        %v4819 = vld [vmem:[%s610 + $0x1e] sm:$0x1]
        %v4820 = vld [vmem:[%s610 + $0x26] sm:$0x1]
        %v4821 = vld [vmem:[%s610 + $0x2e] sm:$0x1]
        %v4822 = vld [vmem:[%s610 + $0x36] sm:$0x1]
        %v4823 = vld [vmem:[%s610 + $0x3e] sm:$0x1]
        %v4824 = vld [vmem:[%s610 + $0x46] sm:$0x1]
        %v4825 = vld [vmem:[%s610 + $0x4e] sm:$0x1]
        %v4826 = vld [vmem:[%s610 + $0x56] sm:$0x1]
        %v4827 = vld [vmem:[%s610 + $0x5e] sm:$0x1]
        %v4828 = vld [vmem:[%s610 + $0x66] sm:$0x1]
        %v4829 = vld [vmem:[%s610 + $0x6e] sm:$0x1]
        %v4830 = vld [vmem:[%s610 + $0x76] sm:$0x1]
        %v4831 = vld [vmem:[%s610 + $0x7e] sm:$0x1]
        %v4832 = vld [vmem:[%s610 + $0x86] sm:$0x1]
        %v4833 = vld [vmem:[%s610 + $0x8e] sm:$0x1]
        %v4834 = vld [vmem:[%s610 + $0x96] sm:$0x1]
        %v4835 = vld [vmem:[%s610 + $0x9e] sm:$0x1]
        %v4836 = vld [vmem:[%s610 + $0xa6] sm:$0x1]
        %v4837 = vld [vmem:[%s610 + $0xae] sm:$0x1]
        %v4838 = vld [vmem:[%s610 + $0xb6] sm:$0x1]
        %v4839 = vld [vmem:[%s610 + $0xbe] sm:$0x1]
        %v4840 = vld [vmem:[%s610 + $0xc6] sm:$0x1]
        %v4841 = vld [vmem:[%s610 + $0xce] sm:$0x1]
        %v4842 = vld [vmem:[%s610 + $0xd6] sm:$0x1]
        %v4843 = vld [vmem:[%s610 + $0xde] sm:$0x1]
        %v4844 = vld [vmem:[%s610 + $0xe6] sm:$0x1]
        %v4845 = vld [vmem:[%s610 + $0xee] sm:$0x1]
        %v4846 = vld [vmem:[%s610 + $0xf6] sm:$0x1]
        %v4847 = vld [vmem:[%s610 + $0xfe] sm:$0x1]
        %v4848 = vld [vmem:[%s610 + $0x106] sm:$0x1]
        %v4849 = vld [vmem:[%s610 + $0x10e] sm:$0x1]
        %v4850 = vld [vmem:[%s610 + $0x116] sm:$0x1]
        %v4851 = vld [vmem:[%s610 + $0x11e] sm:$0x1]
        %v4852 = vld [vmem:[%s610 + $0x126] sm:$0x1]
        %v4853 = vld [vmem:[%s610 + $0x12e] sm:$0x1]
        %v4854 = vld [vmem:[%s610 + $0x136] sm:$0x1]
        %v4855 = vld [vmem:[%s610 + $0x13e] sm:$0x1]
        %v4856 = vld [vmem:[%s610 + $0x146] sm:$0x1]
        %v4857 = vld [vmem:[%s610 + $0x14e] sm:$0x1]
        %v4858 = vld [vmem:[%s610 + $0x156] sm:$0x1]
        %v4859 = vld [vmem:[%s610 + $0x15e] sm:$0x1]
        %v4860 = vld [vmem:[%s610 + $0x166] sm:$0x1]
        %v4861 = vld [vmem:[%s610 + $0x16e] sm:$0x1]
        %v4862 = vld [vmem:[%s610 + $0x176] sm:$0x1]
        %v4863 = vld [vmem:[%s610 + $0x17e] sm:$0x1]
        %v4864 = vld [vmem:[%s610 + $0x186] sm:$0x1]
        %v4865 = vld [vmem:[%s610 + $0x18e] sm:$0x1]
        %v4866 = vld [vmem:[%s610 + $0x196] sm:$0x1]
        %v4867 = vld [vmem:[%s610 + $0x19e] sm:$0x1]
        %v4868 = vld [vmem:[%s610 + $0x1a6] sm:$0x1]
        %v4869 = vld [vmem:[%s610 + $0x1ae] sm:$0x1]
        %v4870 = vld [vmem:[%s610 + $0x1b6] sm:$0x1]
        %v4871 = vld [vmem:[%s610 + $0x1be] sm:$0x1]
        %v4872 = vld [vmem:[%s610 + $0x1c6] sm:$0x1]
        %v4873 = vld [vmem:[%s610 + $0x1ce] sm:$0x1]
        %v4874 = vld [vmem:[%s610 + $0x1d6] sm:$0x1]
        %v4875 = vld [vmem:[%s610 + $0x1de] sm:$0x1]
        %v4876 = vld [vmem:[%s610 + $0x1e6] sm:$0x1]
        %v4877 = vld [vmem:[%s610 + $0x1ee] sm:$0x1]
        %v4878 = vld [vmem:[%s610 + $0x1f6] sm:$0x1]
        %v4879 = vld [vmem:[%s610 + $0x1fe] sm:$0x1]
        %v4880 = vld [vmem:[%s610 + $0x206] sm:$0x1]
        %v4881 = vld [vmem:[%s610 + $0x20e] sm:$0x1]
        %v4882 = vld [vmem:[%s610 + $0x216] sm:$0x1]
        %v4883 = vld [vmem:[%s610 + $0x21e] sm:$0x1]
        %v4884 = vld [vmem:[%s610 + $0x226] sm:$0x1]
        %v4885 = vld [vmem:[%s610 + $0x22e] sm:$0x1]
        %v4886 = vld [vmem:[%s610 + $0x236] sm:$0x1]
        %v4887 = vld [vmem:[%s610 + $0x23e] sm:$0x1]
        %v4888 = vld [vmem:[%s610 + $0x246] sm:$0x1]
        %v4889 = vld [vmem:[%s610 + $0x24e] sm:$0x1]
        %v4890 = vld [vmem:[%s610 + $0x256] sm:$0x1]
        %v4891 = vld [vmem:[%s610 + $0x25e] sm:$0x1]
        %v4892 = vld [vmem:[%s610 + $0x266] sm:$0x1]
        %v4893 = vld [vmem:[%s610 + $0x26e] sm:$0x1]
        %v4894 = vld [vmem:[%s610 + $0x276] sm:$0x1]
        %v4895 = vld [vmem:[%s610 + $0x27e] sm:$0x1]
        %v4896 = vld [vmem:[%s610 + $0x286] sm:$0x1]
        %v4897 = vld [vmem:[%s610 + $0x28e] sm:$0x1]
        %v4898 = vld [vmem:[%s610 + $0x296] sm:$0x1]
        %v4899 = vld [vmem:[%s610 + $0x29e] sm:$0x1]
        %v4900 = vld [vmem:[%s610 + $0x2a6] sm:$0x1]
        %v4901 = vld [vmem:[%s610 + $0x2ae] sm:$0x1]
        %v4902 = vld [vmem:[%s610 + $0x2b6] sm:$0x1]
        %v4903 = vld [vmem:[%s610 + $0x2be] sm:$0x1]
        %v4904 = vld [vmem:[%s610 + $0x2c6] sm:$0x1]
        %v4905 = vld [vmem:[%s610 + $0x2ce] sm:$0x1]
        %v4906 = vld [vmem:[%s610 + $0x2d6] sm:$0x1]
        %v4907 = vld [vmem:[%s610 + $0x2de] sm:$0x1]
        %v4908 = vld [vmem:[%s610 + $0x2e6] sm:$0x1]
        %v4909 = vld [vmem:[%s610 + $0x2ee] sm:$0x1]
        %v4910 = vld [vmem:[%s610 + $0x2f6] sm:$0x1]
        %v4911 = vld [vmem:[%s610 + $0x2fe] sm:$0x1]
        %v4912 = vld [vmem:[%s610 + $0x306] sm:$0x1]
        %v4913 = vld [vmem:[%s610 + $0x30e] sm:$0x1]
        %v4914 = vld [vmem:[%s610 + $0x316] sm:$0x1]
        %v4915 = vld [vmem:[%s610 + $0x31e] sm:$0x1]
        %v4916 = vld [vmem:[%s610 + $0x326] sm:$0x1]
        %v4917 = vld [vmem:[%s610 + $0x32e] sm:$0x1]
        %v4918 = vld [vmem:[%s610 + $0x336] sm:$0x1]
        %v4919 = vld [vmem:[%s610 + $0x33e] sm:$0x1]
        %v4920 = vld [vmem:[%s610 + $0x346] sm:$0x1]
        %v4921 = vld [vmem:[%s610 + $0x34e] sm:$0x1]
        %v4922 = vld [vmem:[%s610 + $0x356] sm:$0x1]
        %v4923 = vld [vmem:[%s610 + $0x35e] sm:$0x1]
        %v4924 = vld [vmem:[%s610 + $0x366] sm:$0x1]
        %v4925 = vld [vmem:[%s610 + $0x36e] sm:$0x1]
        %v4926 = vld [vmem:[%s610 + $0x376] sm:$0x1]
        %v4927 = vld [vmem:[%s610 + $0x37e] sm:$0x1]
        %v4928 = vld [vmem:[%s610 + $0x386] sm:$0x1]
        %v4929 = vld [vmem:[%s610 + $0x38e] sm:$0x1]
        %v4930 = vld [vmem:[%s610 + $0x396] sm:$0x1]
        %v4931 = vld [vmem:[%s610 + $0x39e] sm:$0x1]
        %v4932 = vld [vmem:[%s610 + $0x3a6] sm:$0x1]
        %v4933 = vld [vmem:[%s610 + $0x3ae] sm:$0x1]
        %v4934 = vld [vmem:[%s610 + $0x3b6] sm:$0x1]
        %v4935 = vld [vmem:[%s610 + $0x3be] sm:$0x1]
        %v4936 = vld [vmem:[%s610 + $0x3c6] sm:$0x1]
        %v4937 = vld [vmem:[%s610 + $0x3ce] sm:$0x1]
        %v4938 = vld [vmem:[%s610 + $0x3d6] sm:$0x1]
        %v4939 = vld [vmem:[%s610 + $0x3de] sm:$0x1]
        %v4940 = vld [vmem:[%s610 + $0x3e6] sm:$0x1]
        %v4941 = vld [vmem:[%s610 + $0x3ee] sm:$0x1]
        %v4942 = vld [vmem:[%s610 + $0x3f6] sm:$0x1]
        %v4943 = vld [vmem:[%s610 + $0x3fe] sm:$0x1]
        %4944 = vset.pattern.permute.xlu0 6
        %4945 = vperm.xlu0 %4944, %v616
        %v4946 = vpop.permute.xlu0 %4945
        %4948 = vset.pattern.permute.xlu0 6
        %4949 = vperm.xlu0 %4948, %v617
        %v4950 = vpop.permute.xlu0 %4949
        %4952 = vset.pattern.permute.xlu0 6
        %4953 = vperm.xlu0 %4952, %v618
        %v4954 = vpop.permute.xlu0 %4953
        %4956 = vset.pattern.permute.xlu0 6
        %4957 = vperm.xlu0 %4956, %v619
        %v4958 = vpop.permute.xlu0 %4957
        %4960 = vset.pattern.permute.xlu0 6
        %4961 = vperm.xlu0 %4960, %v620
        %v4962 = vpop.permute.xlu0 %4961
        %4964 = vset.pattern.permute.xlu0 6
        %4965 = vperm.xlu0 %4964, %v621
        %v4966 = vpop.permute.xlu0 %4965
        %4968 = vset.pattern.permute.xlu0 6
        %4969 = vperm.xlu0 %4968, %v622
        %v4970 = vpop.permute.xlu0 %4969
        %4972 = vset.pattern.permute.xlu0 6
        %4973 = vperm.xlu0 %4972, %v623
        %v4974 = vpop.permute.xlu0 %4973
        %4976 = vset.pattern.permute.xlu0 6
        %4977 = vperm.xlu0 %4976, %v624
        %v4978 = vpop.permute.xlu0 %4977
        %4980 = vset.pattern.permute.xlu0 6
        %4981 = vperm.xlu0 %4980, %v625
        %v4982 = vpop.permute.xlu0 %4981
        %4984 = vset.pattern.permute.xlu0 6
        %4985 = vperm.xlu0 %4984, %v626
        %v4986 = vpop.permute.xlu0 %4985
        %4988 = vset.pattern.permute.xlu0 6
        %4989 = vperm.xlu0 %4988, %v627
        %v4990 = vpop.permute.xlu0 %4989
        %4992 = vset.pattern.permute.xlu0 6
        %4993 = vperm.xlu0 %4992, %v628
        %v4994 = vpop.permute.xlu0 %4993
        %4996 = vset.pattern.permute.xlu0 6
        %4997 = vperm.xlu0 %4996, %v629
        %v4998 = vpop.permute.xlu0 %4997
        %5000 = vset.pattern.permute.xlu0 6
        %5001 = vperm.xlu0 %5000, %v630
        %v5002 = vpop.permute.xlu0 %5001
        %5004 = vset.pattern.permute.xlu0 6
        %5005 = vperm.xlu0 %5004, %v631
        %v5006 = vpop.permute.xlu0 %5005
        %v5136 = vrot.slane %v4817, 7
        %v5137 = vsel %vm986, %v5136, %v4816
        %v5138 = vrot.slane %v4818, 6
        %v5139 = vsel %vm989, %v5138, %v5137
        %v5140 = vrot.slane %v4819, 5
        %v5141 = vsel %vm992, %v5140, %v5139
        %v5142 = vrot.slane %v4820, 4
        %v5143 = vsel %vm995, %v5142, %v5141
        %v5144 = vrot.slane %v4821, 3
        %v5145 = vsel %vm998, %v5144, %v5143
        %v5146 = vrot.slane %v4822, 2
        %v5147 = vsel %vm1001, %v5146, %v5145
        %v5148 = vrot.slane %v4823, 1
        %v5149 = vsel %vm1004, %v5148, %v5147
        %v5150 = vrot.slane %v4825, 7
        %v5151 = vsel %vm986, %v5150, %v4824
        %v5152 = vrot.slane %v4826, 6
        %v5153 = vsel %vm989, %v5152, %v5151
        %v5154 = vrot.slane %v4827, 5
        %v5155 = vsel %vm992, %v5154, %v5153
        %v5156 = vrot.slane %v4828, 4
        %v5157 = vsel %vm995, %v5156, %v5155
        %v5158 = vrot.slane %v4829, 3
        %v5159 = vsel %vm998, %v5158, %v5157
        %v5160 = vrot.slane %v4830, 2
        %v5161 = vsel %vm1001, %v5160, %v5159
        %v5162 = vrot.slane %v4831, 1
        %v5163 = vsel %vm1004, %v5162, %v5161
        %v5164 = vrot.slane %v4833, 7
        %v5165 = vsel %vm986, %v5164, %v4832
        %v5166 = vrot.slane %v4834, 6
        %v5167 = vsel %vm989, %v5166, %v5165
        %v5168 = vrot.slane %v4835, 5
        %v5169 = vsel %vm992, %v5168, %v5167
        %v5170 = vrot.slane %v4836, 4
        %v5171 = vsel %vm995, %v5170, %v5169
        %v5172 = vrot.slane %v4837, 3
        %v5173 = vsel %vm998, %v5172, %v5171
        %v5174 = vrot.slane %v4838, 2
        %v5175 = vsel %vm1001, %v5174, %v5173
        %v5176 = vrot.slane %v4839, 1
        %v5177 = vsel %vm1004, %v5176, %v5175
        %v5178 = vrot.slane %v4841, 7
        %v5179 = vsel %vm986, %v5178, %v4840
        %v5180 = vrot.slane %v4842, 6
        %v5181 = vsel %vm989, %v5180, %v5179
        %v5182 = vrot.slane %v4843, 5
        %v5183 = vsel %vm992, %v5182, %v5181
        %v5184 = vrot.slane %v4844, 4
        %v5185 = vsel %vm995, %v5184, %v5183
        %v5186 = vrot.slane %v4845, 3
        %v5187 = vsel %vm998, %v5186, %v5185
        %v5188 = vrot.slane %v4846, 2
        %v5189 = vsel %vm1001, %v5188, %v5187
        %v5190 = vrot.slane %v4847, 1
        %v5191 = vsel %vm1004, %v5190, %v5189
        %v5192 = vrot.slane %v4849, 7
        %v5193 = vsel %vm986, %v5192, %v4848
        %v5194 = vrot.slane %v4850, 6
        %v5195 = vsel %vm989, %v5194, %v5193
        %v5196 = vrot.slane %v4851, 5
        %v5197 = vsel %vm992, %v5196, %v5195
        %v5198 = vrot.slane %v4852, 4
        %v5199 = vsel %vm995, %v5198, %v5197
        %v5200 = vrot.slane %v4853, 3
        %v5201 = vsel %vm998, %v5200, %v5199
        %v5202 = vrot.slane %v4854, 2
        %v5203 = vsel %vm1001, %v5202, %v5201
        %v5204 = vrot.slane %v4855, 1
        %v5205 = vsel %vm1004, %v5204, %v5203
        %v5206 = vrot.slane %v4857, 7
        %v5207 = vsel %vm986, %v5206, %v4856
        %v5208 = vrot.slane %v4858, 6
        %v5209 = vsel %vm989, %v5208, %v5207
        %v5210 = vrot.slane %v4859, 5
        %v5211 = vsel %vm992, %v5210, %v5209
        %v5212 = vrot.slane %v4860, 4
        %v5213 = vsel %vm995, %v5212, %v5211
        %v5214 = vrot.slane %v4861, 3
        %v5215 = vsel %vm998, %v5214, %v5213
        %v5216 = vrot.slane %v4862, 2
        %v5217 = vsel %vm1001, %v5216, %v5215
        %v5218 = vrot.slane %v4863, 1
        %v5219 = vsel %vm1004, %v5218, %v5217
        %v5220 = vrot.slane %v4865, 7
        %v5221 = vsel %vm986, %v5220, %v4864
        %v5222 = vrot.slane %v4866, 6
        %v5223 = vsel %vm989, %v5222, %v5221
        %v5224 = vrot.slane %v4867, 5
        %v5225 = vsel %vm992, %v5224, %v5223
        %v5226 = vrot.slane %v4868, 4
        %v5227 = vsel %vm995, %v5226, %v5225
        %v5228 = vrot.slane %v4869, 3
        %v5229 = vsel %vm998, %v5228, %v5227
        %v5230 = vrot.slane %v4870, 2
        %v5231 = vsel %vm1001, %v5230, %v5229
        %v5232 = vrot.slane %v4871, 1
        %v5233 = vsel %vm1004, %v5232, %v5231
        %v5234 = vrot.slane %v4873, 7
        %v5235 = vsel %vm986, %v5234, %v4872
        %v5236 = vrot.slane %v4874, 6
        %v5237 = vsel %vm989, %v5236, %v5235
        %v5238 = vrot.slane %v4875, 5
        %v5239 = vsel %vm992, %v5238, %v5237
        %v5240 = vrot.slane %v4876, 4
        %v5241 = vsel %vm995, %v5240, %v5239
        %v5242 = vrot.slane %v4877, 3
        %v5243 = vsel %vm998, %v5242, %v5241
        %v5244 = vrot.slane %v4878, 2
        %v5245 = vsel %vm1001, %v5244, %v5243
        %v5246 = vrot.slane %v4879, 1
        %v5247 = vsel %vm1004, %v5246, %v5245
        %v5248 = vrot.slane %v4881, 7
        %v5249 = vsel %vm986, %v5248, %v4880
        %v5250 = vrot.slane %v4882, 6
        %v5251 = vsel %vm989, %v5250, %v5249
        %v5252 = vrot.slane %v4883, 5
        %v5253 = vsel %vm992, %v5252, %v5251
        %v5254 = vrot.slane %v4884, 4
        %v5255 = vsel %vm995, %v5254, %v5253
        %v5256 = vrot.slane %v4885, 3
        %v5257 = vsel %vm998, %v5256, %v5255
        %v5258 = vrot.slane %v4886, 2
        %v5259 = vsel %vm1001, %v5258, %v5257
        %v5260 = vrot.slane %v4887, 1
        %v5261 = vsel %vm1004, %v5260, %v5259
        %v5262 = vrot.slane %v4889, 7
        %v5263 = vsel %vm986, %v5262, %v4888
        %v5264 = vrot.slane %v4890, 6
        %v5265 = vsel %vm989, %v5264, %v5263
        %v5266 = vrot.slane %v4891, 5
        %v5267 = vsel %vm992, %v5266, %v5265
        %v5268 = vrot.slane %v4892, 4
        %v5269 = vsel %vm995, %v5268, %v5267
        %v5270 = vrot.slane %v4893, 3
        %v5271 = vsel %vm998, %v5270, %v5269
        %v5272 = vrot.slane %v4894, 2
        %v5273 = vsel %vm1001, %v5272, %v5271
        %v5274 = vrot.slane %v4895, 1
        %v5275 = vsel %vm1004, %v5274, %v5273
        %v5276 = vrot.slane %v4897, 7
        %v5277 = vsel %vm986, %v5276, %v4896
        %v5278 = vrot.slane %v4898, 6
        %v5279 = vsel %vm989, %v5278, %v5277
        %v5280 = vrot.slane %v4899, 5
        %v5281 = vsel %vm992, %v5280, %v5279
        %v5282 = vrot.slane %v4900, 4
        %v5283 = vsel %vm995, %v5282, %v5281
        %v5284 = vrot.slane %v4901, 3
        %v5285 = vsel %vm998, %v5284, %v5283
        %v5286 = vrot.slane %v4902, 2
        %v5287 = vsel %vm1001, %v5286, %v5285
        %v5288 = vrot.slane %v4903, 1
        %v5289 = vsel %vm1004, %v5288, %v5287
        %v5290 = vrot.slane %v4905, 7
        %v5291 = vsel %vm986, %v5290, %v4904
        %v5292 = vrot.slane %v4906, 6
        %v5293 = vsel %vm989, %v5292, %v5291
        %v5294 = vrot.slane %v4907, 5
        %v5295 = vsel %vm992, %v5294, %v5293
        %v5296 = vrot.slane %v4908, 4
        %v5297 = vsel %vm995, %v5296, %v5295
        %v5298 = vrot.slane %v4909, 3
        %v5299 = vsel %vm998, %v5298, %v5297
        %v5300 = vrot.slane %v4910, 2
        %v5301 = vsel %vm1001, %v5300, %v5299
        %v5302 = vrot.slane %v4911, 1
        %v5303 = vsel %vm1004, %v5302, %v5301
        %v5304 = vrot.slane %v4913, 7
        %v5305 = vsel %vm986, %v5304, %v4912
        %v5306 = vrot.slane %v4914, 6
        %v5307 = vsel %vm989, %v5306, %v5305
        %v5308 = vrot.slane %v4915, 5
        %v5309 = vsel %vm992, %v5308, %v5307
        %v5310 = vrot.slane %v4916, 4
        %v5311 = vsel %vm995, %v5310, %v5309
        %v5312 = vrot.slane %v4917, 3
        %v5313 = vsel %vm998, %v5312, %v5311
        %v5314 = vrot.slane %v4918, 2
        %v5315 = vsel %vm1001, %v5314, %v5313
        %v5316 = vrot.slane %v4919, 1
        %v5317 = vsel %vm1004, %v5316, %v5315
        %v5318 = vrot.slane %v4921, 7
        %v5319 = vsel %vm986, %v5318, %v4920
        %v5320 = vrot.slane %v4922, 6
        %v5321 = vsel %vm989, %v5320, %v5319
        %v5322 = vrot.slane %v4923, 5
        %v5323 = vsel %vm992, %v5322, %v5321
        %v5324 = vrot.slane %v4924, 4
        %v5325 = vsel %vm995, %v5324, %v5323
        %v5326 = vrot.slane %v4925, 3
        %v5327 = vsel %vm998, %v5326, %v5325
        %v5328 = vrot.slane %v4926, 2
        %v5329 = vsel %vm1001, %v5328, %v5327
        %v5330 = vrot.slane %v4927, 1
        %v5331 = vsel %vm1004, %v5330, %v5329
        %v5332 = vrot.slane %v4929, 7
        %v5333 = vsel %vm986, %v5332, %v4928
        %v5334 = vrot.slane %v4930, 6
        %v5335 = vsel %vm989, %v5334, %v5333
        %v5336 = vrot.slane %v4931, 5
        %v5337 = vsel %vm992, %v5336, %v5335
        %v5338 = vrot.slane %v4932, 4
        %v5339 = vsel %vm995, %v5338, %v5337
        %v5340 = vrot.slane %v4933, 3
        %v5341 = vsel %vm998, %v5340, %v5339
        %v5342 = vrot.slane %v4934, 2
        %v5343 = vsel %vm1001, %v5342, %v5341
        %v5344 = vrot.slane %v4935, 1
        %v5345 = vsel %vm1004, %v5344, %v5343
        %v5346 = vrot.slane %v4937, 7
        %v5347 = vsel %vm986, %v5346, %v4936
        %v5348 = vrot.slane %v4938, 6
        %v5349 = vsel %vm989, %v5348, %v5347
        %v5350 = vrot.slane %v4939, 5
        %v5351 = vsel %vm992, %v5350, %v5349
        %v5352 = vrot.slane %v4940, 4
        %v5353 = vsel %vm995, %v5352, %v5351
        %v5354 = vrot.slane %v4941, 3
        %v5355 = vsel %vm998, %v5354, %v5353
        %v5356 = vrot.slane %v4942, 2
        %v5357 = vsel %vm1001, %v5356, %v5355
        %v5358 = vrot.slane %v4943, 1
        %v5359 = vsel %vm1004, %v5358, %v5357
        %v5376 = vmul.f32 %v4946, %v5149
        %v5377 = vmul.f32 %v4950, %v5163
        %v5378 = vmul.f32 %v4954, %v5177
        %v5379 = vmul.f32 %v4958, %v5191
        %v5380 = vmul.f32 %v4962, %v5205
        %v5381 = vmul.f32 %v4966, %v5219
        %v5382 = vmul.f32 %v4970, %v5233
        %v5383 = vmul.f32 %v4974, %v5247
        %v5384 = vmul.f32 %v4978, %v5261
        %v5385 = vmul.f32 %v4982, %v5275
        %v5386 = vmul.f32 %v4986, %v5289
        %v5387 = vmul.f32 %v4990, %v5303
        %v5388 = vmul.f32 %v4994, %v5317
        %v5389 = vmul.f32 %v4998, %v5331
        %v5390 = vmul.f32 %v5002, %v5345
        %v5391 = vmul.f32 %v5006, %v5359
        %v5392 = vadd.f32 %v4704, %v5376
        %v5393 = vadd.f32 %v4705, %v5377
        %v5394 = vadd.f32 %v4706, %v5378
        %v5395 = vadd.f32 %v4707, %v5379
        %v5396 = vadd.f32 %v4708, %v5380
        %v5397 = vadd.f32 %v4709, %v5381
        %v5398 = vadd.f32 %v4710, %v5382
        %v5399 = vadd.f32 %v4711, %v5383
        %v5400 = vadd.f32 %v4712, %v5384
        %v5401 = vadd.f32 %v4713, %v5385
        %v5402 = vadd.f32 %v4714, %v5386
        %v5403 = vadd.f32 %v4715, %v5387
        %v5404 = vadd.f32 %v4716, %v5388
        %v5405 = vadd.f32 %v4717, %v5389
        %v5406 = vadd.f32 %v4718, %v5390
        %v5407 = vadd.f32 %v4719, %v5391
        %5408 = vset.pattern.permute.xlu0 6
        %5409 = vperm.xlu0 %5408, %v633
        %v5410 = vpop.permute.xlu0 %5409
        %5412 = vset.pattern.permute.xlu0 6
        %5413 = vperm.xlu0 %5412, %v634
        %v5414 = vpop.permute.xlu0 %5413
        %5416 = vset.pattern.permute.xlu0 6
        %5417 = vperm.xlu0 %5416, %v635
        %v5418 = vpop.permute.xlu0 %5417
        %5420 = vset.pattern.permute.xlu0 6
        %5421 = vperm.xlu0 %5420, %v636
        %v5422 = vpop.permute.xlu0 %5421
        %5424 = vset.pattern.permute.xlu0 6
        %5425 = vperm.xlu0 %5424, %v637
        %v5426 = vpop.permute.xlu0 %5425
        %5428 = vset.pattern.permute.xlu0 6
        %5429 = vperm.xlu0 %5428, %v638
        %v5430 = vpop.permute.xlu0 %5429
        %5432 = vset.pattern.permute.xlu0 6
        %5433 = vperm.xlu0 %5432, %v639
        %v5434 = vpop.permute.xlu0 %5433
        %5436 = vset.pattern.permute.xlu0 6
        %5437 = vperm.xlu0 %5436, %v640
        %v5438 = vpop.permute.xlu0 %5437
        %5440 = vset.pattern.permute.xlu0 6
        %5441 = vperm.xlu0 %5440, %v641
        %v5442 = vpop.permute.xlu0 %5441
        %5444 = vset.pattern.permute.xlu0 6
        %5445 = vperm.xlu0 %5444, %v642
        %v5446 = vpop.permute.xlu0 %5445
        %5448 = vset.pattern.permute.xlu0 6
        %5449 = vperm.xlu0 %5448, %v643
        %v5450 = vpop.permute.xlu0 %5449
        %5452 = vset.pattern.permute.xlu0 6
        %5453 = vperm.xlu0 %5452, %v644
        %v5454 = vpop.permute.xlu0 %5453
        %5456 = vset.pattern.permute.xlu0 6
        %5457 = vperm.xlu0 %5456, %v645
        %v5458 = vpop.permute.xlu0 %5457
        %5460 = vset.pattern.permute.xlu0 6
        %5461 = vperm.xlu0 %5460, %v646
        %v5462 = vpop.permute.xlu0 %5461
        %5464 = vset.pattern.permute.xlu0 6
        %5465 = vperm.xlu0 %5464, %v647
        %v5466 = vpop.permute.xlu0 %5465
        %5468 = vset.pattern.permute.xlu0 6
        %5469 = vperm.xlu0 %5468, %v648
        %v5470 = vpop.permute.xlu0 %5469
        %v5472 = vmul.f32 %v5410, %v5149
        %v5473 = vmul.f32 %v5414, %v5163
        %v5474 = vmul.f32 %v5418, %v5177
        %v5475 = vmul.f32 %v5422, %v5191
        %v5476 = vmul.f32 %v5426, %v5205
        %v5477 = vmul.f32 %v5430, %v5219
        %v5478 = vmul.f32 %v5434, %v5233
        %v5479 = vmul.f32 %v5438, %v5247
        %v5480 = vmul.f32 %v5442, %v5261
        %v5481 = vmul.f32 %v5446, %v5275
        %v5482 = vmul.f32 %v5450, %v5289
        %v5483 = vmul.f32 %v5454, %v5303
        %v5484 = vmul.f32 %v5458, %v5317
        %v5485 = vmul.f32 %v5462, %v5331
        %v5486 = vmul.f32 %v5466, %v5345
        %v5487 = vmul.f32 %v5470, %v5359
        %v5488 = vadd.f32 %v4800, %v5472
        %v5489 = vadd.f32 %v4801, %v5473
        %v5490 = vadd.f32 %v4802, %v5474
        %v5491 = vadd.f32 %v4803, %v5475
        %v5492 = vadd.f32 %v4804, %v5476
        %v5493 = vadd.f32 %v4805, %v5477
        %v5494 = vadd.f32 %v4806, %v5478
        %v5495 = vadd.f32 %v4807, %v5479
        %v5496 = vadd.f32 %v4808, %v5480
        %v5497 = vadd.f32 %v4809, %v5481
        %v5498 = vadd.f32 %v4810, %v5482
        %v5499 = vadd.f32 %v4811, %v5483
        %v5500 = vadd.f32 %v4812, %v5484
        %v5501 = vadd.f32 %v4813, %v5485
        %v5502 = vadd.f32 %v4814, %v5486
        %v5503 = vadd.f32 %v4815, %v5487
        %v5504 = vld [vmem:[%s610 + $0x7] sm:$0x1]
        %v5505 = vld [vmem:[%s610 + $0xf] sm:$0x1]
        %v5506 = vld [vmem:[%s610 + $0x17] sm:$0x1]
        %v5507 = vld [vmem:[%s610 + $0x1f] sm:$0x1]
        %v5508 = vld [vmem:[%s610 + $0x27] sm:$0x1]
        %v5509 = vld [vmem:[%s610 + $0x2f] sm:$0x1]
        %v5510 = vld [vmem:[%s610 + $0x37] sm:$0x1]
        %v5511 = vld [vmem:[%s610 + $0x3f] sm:$0x1]
        %v5512 = vld [vmem:[%s610 + $0x47] sm:$0x1]
        %v5513 = vld [vmem:[%s610 + $0x4f] sm:$0x1]
        %v5514 = vld [vmem:[%s610 + $0x57] sm:$0x1]
        %v5515 = vld [vmem:[%s610 + $0x5f] sm:$0x1]
        %v5516 = vld [vmem:[%s610 + $0x67] sm:$0x1]
        %v5517 = vld [vmem:[%s610 + $0x6f] sm:$0x1]
        %v5518 = vld [vmem:[%s610 + $0x77] sm:$0x1]
        %v5519 = vld [vmem:[%s610 + $0x7f] sm:$0x1]
        %v5520 = vld [vmem:[%s610 + $0x87] sm:$0x1]
        %v5521 = vld [vmem:[%s610 + $0x8f] sm:$0x1]
        %v5522 = vld [vmem:[%s610 + $0x97] sm:$0x1]
        %v5523 = vld [vmem:[%s610 + $0x9f] sm:$0x1]
        %v5524 = vld [vmem:[%s610 + $0xa7] sm:$0x1]
        %v5525 = vld [vmem:[%s610 + $0xaf] sm:$0x1]
        %v5526 = vld [vmem:[%s610 + $0xb7] sm:$0x1]
        %v5527 = vld [vmem:[%s610 + $0xbf] sm:$0x1]
        %v5528 = vld [vmem:[%s610 + $0xc7] sm:$0x1]
        %v5529 = vld [vmem:[%s610 + $0xcf] sm:$0x1]
        %v5530 = vld [vmem:[%s610 + $0xd7] sm:$0x1]
        %v5531 = vld [vmem:[%s610 + $0xdf] sm:$0x1]
        %v5532 = vld [vmem:[%s610 + $0xe7] sm:$0x1]
        %v5533 = vld [vmem:[%s610 + $0xef] sm:$0x1]
        %v5534 = vld [vmem:[%s610 + $0xf7] sm:$0x1]
        %v5535 = vld [vmem:[%s610 + $0xff] sm:$0x1]
        %v5536 = vld [vmem:[%s610 + $0x107] sm:$0x1]
        %v5537 = vld [vmem:[%s610 + $0x10f] sm:$0x1]
        %v5538 = vld [vmem:[%s610 + $0x117] sm:$0x1]
        %v5539 = vld [vmem:[%s610 + $0x11f] sm:$0x1]
        %v5540 = vld [vmem:[%s610 + $0x127] sm:$0x1]
        %v5541 = vld [vmem:[%s610 + $0x12f] sm:$0x1]
        %v5542 = vld [vmem:[%s610 + $0x137] sm:$0x1]
        %v5543 = vld [vmem:[%s610 + $0x13f] sm:$0x1]
        %v5544 = vld [vmem:[%s610 + $0x147] sm:$0x1]
        %v5545 = vld [vmem:[%s610 + $0x14f] sm:$0x1]
        %v5546 = vld [vmem:[%s610 + $0x157] sm:$0x1]
        %v5547 = vld [vmem:[%s610 + $0x15f] sm:$0x1]
        %v5548 = vld [vmem:[%s610 + $0x167] sm:$0x1]
        %v5549 = vld [vmem:[%s610 + $0x16f] sm:$0x1]
        %v5550 = vld [vmem:[%s610 + $0x177] sm:$0x1]
        %v5551 = vld [vmem:[%s610 + $0x17f] sm:$0x1]
        %v5552 = vld [vmem:[%s610 + $0x187] sm:$0x1]
        %v5553 = vld [vmem:[%s610 + $0x18f] sm:$0x1]
        %v5554 = vld [vmem:[%s610 + $0x197] sm:$0x1]
        %v5555 = vld [vmem:[%s610 + $0x19f] sm:$0x1]
        %v5556 = vld [vmem:[%s610 + $0x1a7] sm:$0x1]
        %v5557 = vld [vmem:[%s610 + $0x1af] sm:$0x1]
        %v5558 = vld [vmem:[%s610 + $0x1b7] sm:$0x1]
        %v5559 = vld [vmem:[%s610 + $0x1bf] sm:$0x1]
        %v5560 = vld [vmem:[%s610 + $0x1c7] sm:$0x1]
        %v5561 = vld [vmem:[%s610 + $0x1cf] sm:$0x1]
        %v5562 = vld [vmem:[%s610 + $0x1d7] sm:$0x1]
        %v5563 = vld [vmem:[%s610 + $0x1df] sm:$0x1]
        %v5564 = vld [vmem:[%s610 + $0x1e7] sm:$0x1]
        %v5565 = vld [vmem:[%s610 + $0x1ef] sm:$0x1]
        %v5566 = vld [vmem:[%s610 + $0x1f7] sm:$0x1]
        %v5567 = vld [vmem:[%s610 + $0x1ff] sm:$0x1]
        %v5568 = vld [vmem:[%s610 + $0x207] sm:$0x1]
        %v5569 = vld [vmem:[%s610 + $0x20f] sm:$0x1]
        %v5570 = vld [vmem:[%s610 + $0x217] sm:$0x1]
        %v5571 = vld [vmem:[%s610 + $0x21f] sm:$0x1]
        %v5572 = vld [vmem:[%s610 + $0x227] sm:$0x1]
        %v5573 = vld [vmem:[%s610 + $0x22f] sm:$0x1]
        %v5574 = vld [vmem:[%s610 + $0x237] sm:$0x1]
        %v5575 = vld [vmem:[%s610 + $0x23f] sm:$0x1]
        %v5576 = vld [vmem:[%s610 + $0x247] sm:$0x1]
        %v5577 = vld [vmem:[%s610 + $0x24f] sm:$0x1]
        %v5578 = vld [vmem:[%s610 + $0x257] sm:$0x1]
        %v5579 = vld [vmem:[%s610 + $0x25f] sm:$0x1]
        %v5580 = vld [vmem:[%s610 + $0x267] sm:$0x1]
        %v5581 = vld [vmem:[%s610 + $0x26f] sm:$0x1]
        %v5582 = vld [vmem:[%s610 + $0x277] sm:$0x1]
        %v5583 = vld [vmem:[%s610 + $0x27f] sm:$0x1]
        %v5584 = vld [vmem:[%s610 + $0x287] sm:$0x1]
        %v5585 = vld [vmem:[%s610 + $0x28f] sm:$0x1]
        %v5586 = vld [vmem:[%s610 + $0x297] sm:$0x1]
        %v5587 = vld [vmem:[%s610 + $0x29f] sm:$0x1]
        %v5588 = vld [vmem:[%s610 + $0x2a7] sm:$0x1]
        %v5589 = vld [vmem:[%s610 + $0x2af] sm:$0x1]
        %v5590 = vld [vmem:[%s610 + $0x2b7] sm:$0x1]
        %v5591 = vld [vmem:[%s610 + $0x2bf] sm:$0x1]
        %v5592 = vld [vmem:[%s610 + $0x2c7] sm:$0x1]
        %v5593 = vld [vmem:[%s610 + $0x2cf] sm:$0x1]
        %v5594 = vld [vmem:[%s610 + $0x2d7] sm:$0x1]
        %v5595 = vld [vmem:[%s610 + $0x2df] sm:$0x1]
        %v5596 = vld [vmem:[%s610 + $0x2e7] sm:$0x1]
        %v5597 = vld [vmem:[%s610 + $0x2ef] sm:$0x1]
        %v5598 = vld [vmem:[%s610 + $0x2f7] sm:$0x1]
        %v5599 = vld [vmem:[%s610 + $0x2ff] sm:$0x1]
        %v5600 = vld [vmem:[%s610 + $0x307] sm:$0x1]
        %v5601 = vld [vmem:[%s610 + $0x30f] sm:$0x1]
        %v5602 = vld [vmem:[%s610 + $0x317] sm:$0x1]
        %v5603 = vld [vmem:[%s610 + $0x31f] sm:$0x1]
        %v5604 = vld [vmem:[%s610 + $0x327] sm:$0x1]
        %v5605 = vld [vmem:[%s610 + $0x32f] sm:$0x1]
        %v5606 = vld [vmem:[%s610 + $0x337] sm:$0x1]
        %v5607 = vld [vmem:[%s610 + $0x33f] sm:$0x1]
        %v5608 = vld [vmem:[%s610 + $0x347] sm:$0x1]
        %v5609 = vld [vmem:[%s610 + $0x34f] sm:$0x1]
        %v5610 = vld [vmem:[%s610 + $0x357] sm:$0x1]
        %v5611 = vld [vmem:[%s610 + $0x35f] sm:$0x1]
        %v5612 = vld [vmem:[%s610 + $0x367] sm:$0x1]
        %v5613 = vld [vmem:[%s610 + $0x36f] sm:$0x1]
        %v5614 = vld [vmem:[%s610 + $0x377] sm:$0x1]
        %v5615 = vld [vmem:[%s610 + $0x37f] sm:$0x1]
        %v5616 = vld [vmem:[%s610 + $0x387] sm:$0x1]
        %v5617 = vld [vmem:[%s610 + $0x38f] sm:$0x1]
        %v5618 = vld [vmem:[%s610 + $0x397] sm:$0x1]
        %v5619 = vld [vmem:[%s610 + $0x39f] sm:$0x1]
        %v5620 = vld [vmem:[%s610 + $0x3a7] sm:$0x1]
        %v5621 = vld [vmem:[%s610 + $0x3af] sm:$0x1]
        %v5622 = vld [vmem:[%s610 + $0x3b7] sm:$0x1]
        %v5623 = vld [vmem:[%s610 + $0x3bf] sm:$0x1]
        %v5624 = vld [vmem:[%s610 + $0x3c7] sm:$0x1]
        %v5625 = vld [vmem:[%s610 + $0x3cf] sm:$0x1]
        %v5626 = vld [vmem:[%s610 + $0x3d7] sm:$0x1]
        %v5627 = vld [vmem:[%s610 + $0x3df] sm:$0x1]
        %v5628 = vld [vmem:[%s610 + $0x3e7] sm:$0x1]
        %v5629 = vld [vmem:[%s610 + $0x3ef] sm:$0x1]
        %v5630 = vld [vmem:[%s610 + $0x3f7] sm:$0x1]
        %v5631 = vld [vmem:[%s610 + $0x3ff] sm:$0x1]
        %5632 = vset.pattern.permute.xlu0 7
        %5633 = vperm.xlu0 %5632, %v616
        %v5634 = vpop.permute.xlu0 %5633
        %5636 = vset.pattern.permute.xlu0 7
        %5637 = vperm.xlu0 %5636, %v617
        %v5638 = vpop.permute.xlu0 %5637
        %5640 = vset.pattern.permute.xlu0 7
        %5641 = vperm.xlu0 %5640, %v618
        %v5642 = vpop.permute.xlu0 %5641
        %5644 = vset.pattern.permute.xlu0 7
        %5645 = vperm.xlu0 %5644, %v619
        %v5646 = vpop.permute.xlu0 %5645
        %5648 = vset.pattern.permute.xlu0 7
        %5649 = vperm.xlu0 %5648, %v620
        %v5650 = vpop.permute.xlu0 %5649
        %5652 = vset.pattern.permute.xlu0 7
        %5653 = vperm.xlu0 %5652, %v621
        %v5654 = vpop.permute.xlu0 %5653
        %5656 = vset.pattern.permute.xlu0 7
        %5657 = vperm.xlu0 %5656, %v622
        %v5658 = vpop.permute.xlu0 %5657
        %5660 = vset.pattern.permute.xlu0 7
        %5661 = vperm.xlu0 %5660, %v623
        %v5662 = vpop.permute.xlu0 %5661
        %5664 = vset.pattern.permute.xlu0 7
        %5665 = vperm.xlu0 %5664, %v624
        %v5666 = vpop.permute.xlu0 %5665
        %5668 = vset.pattern.permute.xlu0 7
        %5669 = vperm.xlu0 %5668, %v625
        %v5670 = vpop.permute.xlu0 %5669
        %5672 = vset.pattern.permute.xlu0 7
        %5673 = vperm.xlu0 %5672, %v626
        %v5674 = vpop.permute.xlu0 %5673
        %5676 = vset.pattern.permute.xlu0 7
        %5677 = vperm.xlu0 %5676, %v627
        %v5678 = vpop.permute.xlu0 %5677
        %5680 = vset.pattern.permute.xlu0 7
        %5681 = vperm.xlu0 %5680, %v628
        %v5682 = vpop.permute.xlu0 %5681
        %5684 = vset.pattern.permute.xlu0 7
        %5685 = vperm.xlu0 %5684, %v629
        %v5686 = vpop.permute.xlu0 %5685
        %5688 = vset.pattern.permute.xlu0 7
        %5689 = vperm.xlu0 %5688, %v630
        %v5690 = vpop.permute.xlu0 %5689
        %5692 = vset.pattern.permute.xlu0 7
        %5693 = vperm.xlu0 %5692, %v631
        %v5694 = vpop.permute.xlu0 %5693
        %v5824 = vrot.slane %v5505, 7
        %v5825 = vsel %vm986, %v5824, %v5504
        %v5826 = vrot.slane %v5506, 6
        %v5827 = vsel %vm989, %v5826, %v5825
        %v5828 = vrot.slane %v5507, 5
        %v5829 = vsel %vm992, %v5828, %v5827
        %v5830 = vrot.slane %v5508, 4
        %v5831 = vsel %vm995, %v5830, %v5829
        %v5832 = vrot.slane %v5509, 3
        %v5833 = vsel %vm998, %v5832, %v5831
        %v5834 = vrot.slane %v5510, 2
        %v5835 = vsel %vm1001, %v5834, %v5833
        %v5836 = vrot.slane %v5511, 1
        %v5837 = vsel %vm1004, %v5836, %v5835
        %v5838 = vrot.slane %v5513, 7
        %v5839 = vsel %vm986, %v5838, %v5512
        %v5840 = vrot.slane %v5514, 6
        %v5841 = vsel %vm989, %v5840, %v5839
        %v5842 = vrot.slane %v5515, 5
        %v5843 = vsel %vm992, %v5842, %v5841
        %v5844 = vrot.slane %v5516, 4
        %v5845 = vsel %vm995, %v5844, %v5843
        %v5846 = vrot.slane %v5517, 3
        %v5847 = vsel %vm998, %v5846, %v5845
        %v5848 = vrot.slane %v5518, 2
        %v5849 = vsel %vm1001, %v5848, %v5847
        %v5850 = vrot.slane %v5519, 1
        %v5851 = vsel %vm1004, %v5850, %v5849
        %v5852 = vrot.slane %v5521, 7
        %v5853 = vsel %vm986, %v5852, %v5520
        %v5854 = vrot.slane %v5522, 6
        %v5855 = vsel %vm989, %v5854, %v5853
        %v5856 = vrot.slane %v5523, 5
        %v5857 = vsel %vm992, %v5856, %v5855
        %v5858 = vrot.slane %v5524, 4
        %v5859 = vsel %vm995, %v5858, %v5857
        %v5860 = vrot.slane %v5525, 3
        %v5861 = vsel %vm998, %v5860, %v5859
        %v5862 = vrot.slane %v5526, 2
        %v5863 = vsel %vm1001, %v5862, %v5861
        %v5864 = vrot.slane %v5527, 1
        %v5865 = vsel %vm1004, %v5864, %v5863
        %v5866 = vrot.slane %v5529, 7
        %v5867 = vsel %vm986, %v5866, %v5528
        %v5868 = vrot.slane %v5530, 6
        %v5869 = vsel %vm989, %v5868, %v5867
        %v5870 = vrot.slane %v5531, 5
        %v5871 = vsel %vm992, %v5870, %v5869
        %v5872 = vrot.slane %v5532, 4
        %v5873 = vsel %vm995, %v5872, %v5871
        %v5874 = vrot.slane %v5533, 3
        %v5875 = vsel %vm998, %v5874, %v5873
        %v5876 = vrot.slane %v5534, 2
        %v5877 = vsel %vm1001, %v5876, %v5875
        %v5878 = vrot.slane %v5535, 1
        %v5879 = vsel %vm1004, %v5878, %v5877
        %v5880 = vrot.slane %v5537, 7
        %v5881 = vsel %vm986, %v5880, %v5536
        %v5882 = vrot.slane %v5538, 6
        %v5883 = vsel %vm989, %v5882, %v5881
        %v5884 = vrot.slane %v5539, 5
        %v5885 = vsel %vm992, %v5884, %v5883
        %v5886 = vrot.slane %v5540, 4
        %v5887 = vsel %vm995, %v5886, %v5885
        %v5888 = vrot.slane %v5541, 3
        %v5889 = vsel %vm998, %v5888, %v5887
        %v5890 = vrot.slane %v5542, 2
        %v5891 = vsel %vm1001, %v5890, %v5889
        %v5892 = vrot.slane %v5543, 1
        %v5893 = vsel %vm1004, %v5892, %v5891
        %v5894 = vrot.slane %v5545, 7
        %v5895 = vsel %vm986, %v5894, %v5544
        %v5896 = vrot.slane %v5546, 6
        %v5897 = vsel %vm989, %v5896, %v5895
        %v5898 = vrot.slane %v5547, 5
        %v5899 = vsel %vm992, %v5898, %v5897
        %v5900 = vrot.slane %v5548, 4
        %v5901 = vsel %vm995, %v5900, %v5899
        %v5902 = vrot.slane %v5549, 3
        %v5903 = vsel %vm998, %v5902, %v5901
        %v5904 = vrot.slane %v5550, 2
        %v5905 = vsel %vm1001, %v5904, %v5903
        %v5906 = vrot.slane %v5551, 1
        %v5907 = vsel %vm1004, %v5906, %v5905
        %v5908 = vrot.slane %v5553, 7
        %v5909 = vsel %vm986, %v5908, %v5552
        %v5910 = vrot.slane %v5554, 6
        %v5911 = vsel %vm989, %v5910, %v5909
        %v5912 = vrot.slane %v5555, 5
        %v5913 = vsel %vm992, %v5912, %v5911
        %v5914 = vrot.slane %v5556, 4
        %v5915 = vsel %vm995, %v5914, %v5913
        %v5916 = vrot.slane %v5557, 3
        %v5917 = vsel %vm998, %v5916, %v5915
        %v5918 = vrot.slane %v5558, 2
        %v5919 = vsel %vm1001, %v5918, %v5917
        %v5920 = vrot.slane %v5559, 1
        %v5921 = vsel %vm1004, %v5920, %v5919
        %v5922 = vrot.slane %v5561, 7
        %v5923 = vsel %vm986, %v5922, %v5560
        %v5924 = vrot.slane %v5562, 6
        %v5925 = vsel %vm989, %v5924, %v5923
        %v5926 = vrot.slane %v5563, 5
        %v5927 = vsel %vm992, %v5926, %v5925
        %v5928 = vrot.slane %v5564, 4
        %v5929 = vsel %vm995, %v5928, %v5927
        %v5930 = vrot.slane %v5565, 3
        %v5931 = vsel %vm998, %v5930, %v5929
        %v5932 = vrot.slane %v5566, 2
        %v5933 = vsel %vm1001, %v5932, %v5931
        %v5934 = vrot.slane %v5567, 1
        %v5935 = vsel %vm1004, %v5934, %v5933
        %v5936 = vrot.slane %v5569, 7
        %v5937 = vsel %vm986, %v5936, %v5568
        %v5938 = vrot.slane %v5570, 6
        %v5939 = vsel %vm989, %v5938, %v5937
        %v5940 = vrot.slane %v5571, 5
        %v5941 = vsel %vm992, %v5940, %v5939
        %v5942 = vrot.slane %v5572, 4
        %v5943 = vsel %vm995, %v5942, %v5941
        %v5944 = vrot.slane %v5573, 3
        %v5945 = vsel %vm998, %v5944, %v5943
        %v5946 = vrot.slane %v5574, 2
        %v5947 = vsel %vm1001, %v5946, %v5945
        %v5948 = vrot.slane %v5575, 1
        %v5949 = vsel %vm1004, %v5948, %v5947
        %v5950 = vrot.slane %v5577, 7
        %v5951 = vsel %vm986, %v5950, %v5576
        %v5952 = vrot.slane %v5578, 6
        %v5953 = vsel %vm989, %v5952, %v5951
        %v5954 = vrot.slane %v5579, 5
        %v5955 = vsel %vm992, %v5954, %v5953
        %v5956 = vrot.slane %v5580, 4
        %v5957 = vsel %vm995, %v5956, %v5955
        %v5958 = vrot.slane %v5581, 3
        %v5959 = vsel %vm998, %v5958, %v5957
        %v5960 = vrot.slane %v5582, 2
        %v5961 = vsel %vm1001, %v5960, %v5959
        %v5962 = vrot.slane %v5583, 1
        %v5963 = vsel %vm1004, %v5962, %v5961
        %v5964 = vrot.slane %v5585, 7
        %v5965 = vsel %vm986, %v5964, %v5584
        %v5966 = vrot.slane %v5586, 6
        %v5967 = vsel %vm989, %v5966, %v5965
        %v5968 = vrot.slane %v5587, 5
        %v5969 = vsel %vm992, %v5968, %v5967
        %v5970 = vrot.slane %v5588, 4
        %v5971 = vsel %vm995, %v5970, %v5969
        %v5972 = vrot.slane %v5589, 3
        %v5973 = vsel %vm998, %v5972, %v5971
        %v5974 = vrot.slane %v5590, 2
        %v5975 = vsel %vm1001, %v5974, %v5973
        %v5976 = vrot.slane %v5591, 1
        %v5977 = vsel %vm1004, %v5976, %v5975
        %v5978 = vrot.slane %v5593, 7
        %v5979 = vsel %vm986, %v5978, %v5592
        %v5980 = vrot.slane %v5594, 6
        %v5981 = vsel %vm989, %v5980, %v5979
        %v5982 = vrot.slane %v5595, 5
        %v5983 = vsel %vm992, %v5982, %v5981
        %v5984 = vrot.slane %v5596, 4
        %v5985 = vsel %vm995, %v5984, %v5983
        %v5986 = vrot.slane %v5597, 3
        %v5987 = vsel %vm998, %v5986, %v5985
        %v5988 = vrot.slane %v5598, 2
        %v5989 = vsel %vm1001, %v5988, %v5987
        %v5990 = vrot.slane %v5599, 1
        %v5991 = vsel %vm1004, %v5990, %v5989
        %v5992 = vrot.slane %v5601, 7
        %v5993 = vsel %vm986, %v5992, %v5600
        %v5994 = vrot.slane %v5602, 6
        %v5995 = vsel %vm989, %v5994, %v5993
        %v5996 = vrot.slane %v5603, 5
        %v5997 = vsel %vm992, %v5996, %v5995
        %v5998 = vrot.slane %v5604, 4
        %v5999 = vsel %vm995, %v5998, %v5997
        %v6000 = vrot.slane %v5605, 3
        %v6001 = vsel %vm998, %v6000, %v5999
        %v6002 = vrot.slane %v5606, 2
        %v6003 = vsel %vm1001, %v6002, %v6001
        %v6004 = vrot.slane %v5607, 1
        %v6005 = vsel %vm1004, %v6004, %v6003
        %v6006 = vrot.slane %v5609, 7
        %v6007 = vsel %vm986, %v6006, %v5608
        %v6008 = vrot.slane %v5610, 6
        %v6009 = vsel %vm989, %v6008, %v6007
        %v6010 = vrot.slane %v5611, 5
        %v6011 = vsel %vm992, %v6010, %v6009
        %v6012 = vrot.slane %v5612, 4
        %v6013 = vsel %vm995, %v6012, %v6011
        %v6014 = vrot.slane %v5613, 3
        %v6015 = vsel %vm998, %v6014, %v6013
        %v6016 = vrot.slane %v5614, 2
        %v6017 = vsel %vm1001, %v6016, %v6015
        %v6018 = vrot.slane %v5615, 1
        %v6019 = vsel %vm1004, %v6018, %v6017
        %v6020 = vrot.slane %v5617, 7
        %v6021 = vsel %vm986, %v6020, %v5616
        %v6022 = vrot.slane %v5618, 6
        %v6023 = vsel %vm989, %v6022, %v6021
        %v6024 = vrot.slane %v5619, 5
        %v6025 = vsel %vm992, %v6024, %v6023
        %v6026 = vrot.slane %v5620, 4
        %v6027 = vsel %vm995, %v6026, %v6025
        %v6028 = vrot.slane %v5621, 3
        %v6029 = vsel %vm998, %v6028, %v6027
        %v6030 = vrot.slane %v5622, 2
        %v6031 = vsel %vm1001, %v6030, %v6029
        %v6032 = vrot.slane %v5623, 1
        %v6033 = vsel %vm1004, %v6032, %v6031
        %v6034 = vrot.slane %v5625, 7
        %v6035 = vsel %vm986, %v6034, %v5624
        %v6036 = vrot.slane %v5626, 6
        %v6037 = vsel %vm989, %v6036, %v6035
        %v6038 = vrot.slane %v5627, 5
        %v6039 = vsel %vm992, %v6038, %v6037
        %v6040 = vrot.slane %v5628, 4
        %v6041 = vsel %vm995, %v6040, %v6039
        %v6042 = vrot.slane %v5629, 3
        %v6043 = vsel %vm998, %v6042, %v6041
        %v6044 = vrot.slane %v5630, 2
        %v6045 = vsel %vm1001, %v6044, %v6043
        %v6046 = vrot.slane %v5631, 1
        %v6047 = vsel %vm1004, %v6046, %v6045
        %v6064 = vmul.f32 %v5634, %v5837
        %v6065 = vmul.f32 %v5638, %v5851
        %v6066 = vmul.f32 %v5642, %v5865
        %v6067 = vmul.f32 %v5646, %v5879
        %v6068 = vmul.f32 %v5650, %v5893
        %v6069 = vmul.f32 %v5654, %v5907
        %v6070 = vmul.f32 %v5658, %v5921
        %v6071 = vmul.f32 %v5662, %v5935
        %v6072 = vmul.f32 %v5666, %v5949
        %v6073 = vmul.f32 %v5670, %v5963
        %v6074 = vmul.f32 %v5674, %v5977
        %v6075 = vmul.f32 %v5678, %v5991
        %v6076 = vmul.f32 %v5682, %v6005
        %v6077 = vmul.f32 %v5686, %v6019
        %v6078 = vmul.f32 %v5690, %v6033
        %v6079 = vmul.f32 %v5694, %v6047
        %v6080 = vadd.f32 %v5392, %v6064
        %v6081 = vadd.f32 %v5393, %v6065
        %v6082 = vadd.f32 %v5394, %v6066
        %v6083 = vadd.f32 %v5395, %v6067
        %v6084 = vadd.f32 %v5396, %v6068
        %v6085 = vadd.f32 %v5397, %v6069
        %v6086 = vadd.f32 %v5398, %v6070
        %v6087 = vadd.f32 %v5399, %v6071
        %v6088 = vadd.f32 %v5400, %v6072
        %v6089 = vadd.f32 %v5401, %v6073
        %v6090 = vadd.f32 %v5402, %v6074
        %v6091 = vadd.f32 %v5403, %v6075
        %v6092 = vadd.f32 %v5404, %v6076
        %v6093 = vadd.f32 %v5405, %v6077
        %v6094 = vadd.f32 %v5406, %v6078
        %v6095 = vadd.f32 %v5407, %v6079
        %6096 = vset.pattern.permute.xlu0 7
        %6097 = vperm.xlu0 %6096, %v633
        %v6098 = vpop.permute.xlu0 %6097
        %6100 = vset.pattern.permute.xlu0 7
        %6101 = vperm.xlu0 %6100, %v634
        %v6102 = vpop.permute.xlu0 %6101
        %6104 = vset.pattern.permute.xlu0 7
        %6105 = vperm.xlu0 %6104, %v635
        %v6106 = vpop.permute.xlu0 %6105
        %6108 = vset.pattern.permute.xlu0 7
        %6109 = vperm.xlu0 %6108, %v636
        %v6110 = vpop.permute.xlu0 %6109
        %6112 = vset.pattern.permute.xlu0 7
        %6113 = vperm.xlu0 %6112, %v637
        %v6114 = vpop.permute.xlu0 %6113
        %6116 = vset.pattern.permute.xlu0 7
        %6117 = vperm.xlu0 %6116, %v638
        %v6118 = vpop.permute.xlu0 %6117
        %6120 = vset.pattern.permute.xlu0 7
        %6121 = vperm.xlu0 %6120, %v639
        %v6122 = vpop.permute.xlu0 %6121
        %6124 = vset.pattern.permute.xlu0 7
        %6125 = vperm.xlu0 %6124, %v640
        %v6126 = vpop.permute.xlu0 %6125
        %6128 = vset.pattern.permute.xlu0 7
        %6129 = vperm.xlu0 %6128, %v641
        %v6130 = vpop.permute.xlu0 %6129
        %6132 = vset.pattern.permute.xlu0 7
        %6133 = vperm.xlu0 %6132, %v642
        %v6134 = vpop.permute.xlu0 %6133
        %6136 = vset.pattern.permute.xlu0 7
        %6137 = vperm.xlu0 %6136, %v643
        %v6138 = vpop.permute.xlu0 %6137
        %6140 = vset.pattern.permute.xlu0 7
        %6141 = vperm.xlu0 %6140, %v644
        %v6142 = vpop.permute.xlu0 %6141
        %6144 = vset.pattern.permute.xlu0 7
        %6145 = vperm.xlu0 %6144, %v645
        %v6146 = vpop.permute.xlu0 %6145
        %6148 = vset.pattern.permute.xlu0 7
        %6149 = vperm.xlu0 %6148, %v646
        %v6150 = vpop.permute.xlu0 %6149
        %6152 = vset.pattern.permute.xlu0 7
        %6153 = vperm.xlu0 %6152, %v647
        %v6154 = vpop.permute.xlu0 %6153
        %6156 = vset.pattern.permute.xlu0 7
        %6157 = vperm.xlu0 %6156, %v648
        %v6158 = vpop.permute.xlu0 %6157
        %v6160 = vmul.f32 %v6098, %v5837
        %v6161 = vmul.f32 %v6102, %v5851
        %v6162 = vmul.f32 %v6106, %v5865
        %v6163 = vmul.f32 %v6110, %v5879
        %v6164 = vmul.f32 %v6114, %v5893
        %v6165 = vmul.f32 %v6118, %v5907
        %v6166 = vmul.f32 %v6122, %v5921
        %v6167 = vmul.f32 %v6126, %v5935
        %v6168 = vmul.f32 %v6130, %v5949
        %v6169 = vmul.f32 %v6134, %v5963
        %v6170 = vmul.f32 %v6138, %v5977
        %v6171 = vmul.f32 %v6142, %v5991
        %v6172 = vmul.f32 %v6146, %v6005
        %v6173 = vmul.f32 %v6150, %v6019
        %v6174 = vmul.f32 %v6154, %v6033
        %v6175 = vmul.f32 %v6158, %v6047
        %v6176 = vadd.f32 %v5488, %v6160
        %v6177 = vadd.f32 %v5489, %v6161
        %v6178 = vadd.f32 %v5490, %v6162
        %v6179 = vadd.f32 %v5491, %v6163
        %v6180 = vadd.f32 %v5492, %v6164
        %v6181 = vadd.f32 %v5493, %v6165
        %v6182 = vadd.f32 %v5494, %v6166
        %v6183 = vadd.f32 %v5495, %v6167
        %v6184 = vadd.f32 %v5496, %v6168
        %v6185 = vadd.f32 %v5497, %v6169
        %v6186 = vadd.f32 %v5498, %v6170
        %v6187 = vadd.f32 %v5499, %v6171
        %v6188 = vadd.f32 %v5500, %v6172
        %v6189 = vadd.f32 %v5501, %v6173
        %v6190 = vadd.f32 %v5502, %v6174
        %v6191 = vadd.f32 %v5503, %v6175
        %v6192 = vmul.f32 %v6080, %v6176
        %v6193 = vmul.f32 %v6081, %v6177
        %v6194 = vmul.f32 %v6082, %v6178
        %v6195 = vmul.f32 %v6083, %v6179
        %v6196 = vmul.f32 %v6084, %v6180
        %v6197 = vmul.f32 %v6085, %v6181
        %v6198 = vmul.f32 %v6086, %v6182
        %v6199 = vmul.f32 %v6087, %v6183
        %v6200 = vmul.f32 %v6088, %v6184
        %v6201 = vmul.f32 %v6089, %v6185
        %v6202 = vmul.f32 %v6090, %v6186
        %v6203 = vmul.f32 %v6091, %v6187
        %v6204 = vmul.f32 %v6092, %v6188
        %v6205 = vmul.f32 %v6093, %v6189
        %v6206 = vmul.f32 %v6094, %v6190
        %v6207 = vmul.f32 %v6095, %v6191
        %vm6208 = vcmask 261120
        %v6209 = vsel %vm6208, %v6192, 0.0
        %6210 = vadd.xlane.f32.xlu0 %v6209
        %v6211 = vpop.xlane.xlu0 %6210
        %v6212 = vsel %vm6208, %v6193, 0.0
        %6213 = vadd.xlane.f32.xlu0 %v6212
        %v6214 = vpop.xlane.xlu0 %6213
        %v6215 = vsel %vm6208, %v6194, 0.0
        %6216 = vadd.xlane.f32.xlu0 %v6215
        %v6217 = vpop.xlane.xlu0 %6216
        %v6218 = vsel %vm6208, %v6195, 0.0
        %6219 = vadd.xlane.f32.xlu0 %v6218
        %v6220 = vpop.xlane.xlu0 %6219
        %v6221 = vsel %vm6208, %v6196, 0.0
        %6222 = vadd.xlane.f32.xlu0 %v6221
        %v6223 = vpop.xlane.xlu0 %6222
        %v6224 = vsel %vm6208, %v6197, 0.0
        %6225 = vadd.xlane.f32.xlu0 %v6224
        %v6226 = vpop.xlane.xlu0 %6225
        %v6227 = vsel %vm6208, %v6198, 0.0
        %6228 = vadd.xlane.f32.xlu0 %v6227
        %v6229 = vpop.xlane.xlu0 %6228
        %v6230 = vsel %vm6208, %v6199, 0.0
        %6231 = vadd.xlane.f32.xlu0 %v6230
        %v6232 = vpop.xlane.xlu0 %6231
        %v6233 = vsel %vm6208, %v6200, 0.0
        %6234 = vadd.xlane.f32.xlu0 %v6233
        %v6235 = vpop.xlane.xlu0 %6234
        %v6236 = vsel %vm6208, %v6201, 0.0
        %6237 = vadd.xlane.f32.xlu0 %v6236
        %v6238 = vpop.xlane.xlu0 %6237
        %v6239 = vsel %vm6208, %v6202, 0.0
        %6240 = vadd.xlane.f32.xlu0 %v6239
        %v6241 = vpop.xlane.xlu0 %6240
        %v6242 = vsel %vm6208, %v6203, 0.0
        %6243 = vadd.xlane.f32.xlu0 %v6242
        %v6244 = vpop.xlane.xlu0 %6243
        %v6245 = vsel %vm6208, %v6204, 0.0
        %6246 = vadd.xlane.f32.xlu0 %v6245
        %v6247 = vpop.xlane.xlu0 %6246
        %v6248 = vsel %vm6208, %v6205, 0.0
        %6249 = vadd.xlane.f32.xlu0 %v6248
        %v6250 = vpop.xlane.xlu0 %6249
        %v6251 = vsel %vm6208, %v6206, 0.0
        %6252 = vadd.xlane.f32.xlu0 %v6251
        %v6253 = vpop.xlane.xlu0 %6252
        %v6254 = vsel %vm6208, %v6207, 0.0
        %6255 = vadd.xlane.f32.xlu0 %v6254
        %v6256 = vpop.xlane.xlu0 %6255
        %v6257 = vmul.f32 %v6080, %v6080
        %v6258 = vmul.f32 %v6081, %v6081
        %v6259 = vmul.f32 %v6082, %v6082
        %v6260 = vmul.f32 %v6083, %v6083
        %v6261 = vmul.f32 %v6084, %v6084
        %v6262 = vmul.f32 %v6085, %v6085
        %v6263 = vmul.f32 %v6086, %v6086
        %v6264 = vmul.f32 %v6087, %v6087
        %v6265 = vmul.f32 %v6088, %v6088
        %v6266 = vmul.f32 %v6089, %v6089
        %v6267 = vmul.f32 %v6090, %v6090
        %v6268 = vmul.f32 %v6091, %v6091
        %v6269 = vmul.f32 %v6092, %v6092
        %v6270 = vmul.f32 %v6093, %v6093
        %v6271 = vmul.f32 %v6094, %v6094
        %v6272 = vmul.f32 %v6095, %v6095
        %v6273 = vsel %vm6208, %v6257, 0.0
        %6274 = vadd.xlane.f32.xlu0 %v6273
        %v6275 = vpop.xlane.xlu0 %6274
        %v6276 = vsel %vm6208, %v6258, 0.0
        %6277 = vadd.xlane.f32.xlu0 %v6276
        %v6278 = vpop.xlane.xlu0 %6277
        %v6279 = vsel %vm6208, %v6259, 0.0
        %6280 = vadd.xlane.f32.xlu0 %v6279
        %v6281 = vpop.xlane.xlu0 %6280
        %v6282 = vsel %vm6208, %v6260, 0.0
        %6283 = vadd.xlane.f32.xlu0 %v6282
        %v6284 = vpop.xlane.xlu0 %6283
        %v6285 = vsel %vm6208, %v6261, 0.0
        %6286 = vadd.xlane.f32.xlu0 %v6285
        %v6287 = vpop.xlane.xlu0 %6286
        %v6288 = vsel %vm6208, %v6262, 0.0
        %6289 = vadd.xlane.f32.xlu0 %v6288
        %v6290 = vpop.xlane.xlu0 %6289
        %v6291 = vsel %vm6208, %v6263, 0.0
        %6292 = vadd.xlane.f32.xlu0 %v6291
        %v6293 = vpop.xlane.xlu0 %6292
        %v6294 = vsel %vm6208, %v6264, 0.0
        %6295 = vadd.xlane.f32.xlu0 %v6294
        %v6296 = vpop.xlane.xlu0 %6295
        %v6297 = vsel %vm6208, %v6265, 0.0
        %6298 = vadd.xlane.f32.xlu0 %v6297
        %v6299 = vpop.xlane.xlu0 %6298
        %v6300 = vsel %vm6208, %v6266, 0.0
        %6301 = vadd.xlane.f32.xlu0 %v6300
        %v6302 = vpop.xlane.xlu0 %6301
        %v6303 = vsel %vm6208, %v6267, 0.0
        %6304 = vadd.xlane.f32.xlu0 %v6303
        %v6305 = vpop.xlane.xlu0 %6304
        %v6306 = vsel %vm6208, %v6268, 0.0
        %6307 = vadd.xlane.f32.xlu0 %v6306
        %v6308 = vpop.xlane.xlu0 %6307
        %v6309 = vsel %vm6208, %v6269, 0.0
        %6310 = vadd.xlane.f32.xlu0 %v6309
        %v6311 = vpop.xlane.xlu0 %6310
        %v6312 = vsel %vm6208, %v6270, 0.0
        %6313 = vadd.xlane.f32.xlu0 %v6312
        %v6314 = vpop.xlane.xlu0 %6313
        %v6315 = vsel %vm6208, %v6271, 0.0
        %6316 = vadd.xlane.f32.xlu0 %v6315
        %v6317 = vpop.xlane.xlu0 %6316
        %v6318 = vsel %vm6208, %v6272, 0.0
        %6319 = vadd.xlane.f32.xlu0 %v6318
        %v6320 = vpop.xlane.xlu0 %6319
        %v6321 = vmul.f32 %v6176, %v6176
        %v6322 = vmul.f32 %v6177, %v6177
        %v6323 = vmul.f32 %v6178, %v6178
        %v6324 = vmul.f32 %v6179, %v6179
        %v6325 = vmul.f32 %v6180, %v6180
        %v6326 = vmul.f32 %v6181, %v6181
        %v6327 = vmul.f32 %v6182, %v6182
        %v6328 = vmul.f32 %v6183, %v6183
        %v6329 = vmul.f32 %v6184, %v6184
        %v6330 = vmul.f32 %v6185, %v6185
        %v6331 = vmul.f32 %v6186, %v6186
        %v6332 = vmul.f32 %v6187, %v6187
        %v6333 = vmul.f32 %v6188, %v6188
        %v6334 = vmul.f32 %v6189, %v6189
        %v6335 = vmul.f32 %v6190, %v6190
        %v6336 = vmul.f32 %v6191, %v6191
        %v6337 = vsel %vm6208, %v6321, 0.0
        %6338 = vadd.xlane.f32.xlu0 %v6337
        %v6339 = vpop.xlane.xlu0 %6338
        %v6340 = vsel %vm6208, %v6322, 0.0
        %6341 = vadd.xlane.f32.xlu0 %v6340
        %v6342 = vpop.xlane.xlu0 %6341
        %v6343 = vsel %vm6208, %v6323, 0.0
        %6344 = vadd.xlane.f32.xlu0 %v6343
        %v6345 = vpop.xlane.xlu0 %6344
        %v6346 = vsel %vm6208, %v6324, 0.0
        %6347 = vadd.xlane.f32.xlu0 %v6346
        %v6348 = vpop.xlane.xlu0 %6347
        %v6349 = vsel %vm6208, %v6325, 0.0
        %6350 = vadd.xlane.f32.xlu0 %v6349
        %v6351 = vpop.xlane.xlu0 %6350
        %v6352 = vsel %vm6208, %v6326, 0.0
        %6353 = vadd.xlane.f32.xlu0 %v6352
        %v6354 = vpop.xlane.xlu0 %6353
        %v6355 = vsel %vm6208, %v6327, 0.0
        %6356 = vadd.xlane.f32.xlu0 %v6355
        %v6357 = vpop.xlane.xlu0 %6356
        %v6358 = vsel %vm6208, %v6328, 0.0
        %6359 = vadd.xlane.f32.xlu0 %v6358
        %v6360 = vpop.xlane.xlu0 %6359
        %v6361 = vsel %vm6208, %v6329, 0.0
        %6362 = vadd.xlane.f32.xlu0 %v6361
        %v6363 = vpop.xlane.xlu0 %6362
        %v6364 = vsel %vm6208, %v6330, 0.0
        %6365 = vadd.xlane.f32.xlu0 %v6364
        %v6366 = vpop.xlane.xlu0 %6365
        %v6367 = vsel %vm6208, %v6331, 0.0
        %6368 = vadd.xlane.f32.xlu0 %v6367
        %v6369 = vpop.xlane.xlu0 %6368
        %v6370 = vsel %vm6208, %v6332, 0.0
        %6371 = vadd.xlane.f32.xlu0 %v6370
        %v6372 = vpop.xlane.xlu0 %6371
        %v6373 = vsel %vm6208, %v6333, 0.0
        %6374 = vadd.xlane.f32.xlu0 %v6373
        %v6375 = vpop.xlane.xlu0 %6374
        %v6376 = vsel %vm6208, %v6334, 0.0
        %6377 = vadd.xlane.f32.xlu0 %v6376
        %v6378 = vpop.xlane.xlu0 %6377
        %v6379 = vsel %vm6208, %v6335, 0.0
        %6380 = vadd.xlane.f32.xlu0 %v6379
        %v6381 = vpop.xlane.xlu0 %6380
        %v6382 = vsel %vm6208, %v6336, 0.0
        %6383 = vadd.xlane.f32.xlu0 %v6382
        %v6384 = vpop.xlane.xlu0 %6383
        %v6385 = vmax.f32 %v6275, 1e-16
        %v6386 = vmax.f32 %v6278, 1e-16
        %v6387 = vmax.f32 %v6281, 1e-16
        %v6388 = vmax.f32 %v6284, 1e-16
        %v6389 = vmax.f32 %v6287, 1e-16
        %v6390 = vmax.f32 %v6290, 1e-16
        %v6391 = vmax.f32 %v6293, 1e-16
        %v6392 = vmax.f32 %v6296, 1e-16
        %v6393 = vmax.f32 %v6299, 1e-16
        %v6394 = vmax.f32 %v6302, 1e-16
        %v6395 = vmax.f32 %v6305, 1e-16
        %v6396 = vmax.f32 %v6308, 1e-16
        %v6397 = vmax.f32 %v6311, 1e-16
        %v6398 = vmax.f32 %v6314, 1e-16
        %v6399 = vmax.f32 %v6317, 1e-16
        %v6400 = vmax.f32 %v6320, 1e-16
        %v6401 = vrsqrt.pop %v6385
        %v6402 = vrsqrt.pop %v6386
        %v6403 = vrsqrt.pop %v6387
        %v6404 = vrsqrt.pop %v6388
        %v6405 = vrsqrt.pop %v6389
        %v6406 = vrsqrt.pop %v6390
        %v6407 = vrsqrt.pop %v6391
        %v6408 = vrsqrt.pop %v6392
        %v6409 = vrsqrt.pop %v6393
        %v6410 = vrsqrt.pop %v6394
        %v6411 = vrsqrt.pop %v6395
        %v6412 = vrsqrt.pop %v6396
        %v6413 = vrsqrt.pop %v6397
        %v6414 = vrsqrt.pop %v6398
        %v6415 = vrsqrt.pop %v6399
        %v6416 = vrsqrt.pop %v6400
        %v6417 = vmul.f32 %v6211, %v6401
        %v6418 = vmul.f32 %v6214, %v6402
        %v6419 = vmul.f32 %v6217, %v6403
        %v6420 = vmul.f32 %v6220, %v6404
        %v6421 = vmul.f32 %v6223, %v6405
        %v6422 = vmul.f32 %v6226, %v6406
        %v6423 = vmul.f32 %v6229, %v6407
        %v6424 = vmul.f32 %v6232, %v6408
        %v6425 = vmul.f32 %v6235, %v6409
        %v6426 = vmul.f32 %v6238, %v6410
        %v6427 = vmul.f32 %v6241, %v6411
        %v6428 = vmul.f32 %v6244, %v6412
        %v6429 = vmul.f32 %v6247, %v6413
        %v6430 = vmul.f32 %v6250, %v6414
        %v6431 = vmul.f32 %v6253, %v6415
        %v6432 = vmul.f32 %v6256, %v6416
        %v6433 = vmax.f32 %v6339, 1e-16
        %v6434 = vmax.f32 %v6342, 1e-16
        %v6435 = vmax.f32 %v6345, 1e-16
        %v6436 = vmax.f32 %v6348, 1e-16
        %v6437 = vmax.f32 %v6351, 1e-16
        %v6438 = vmax.f32 %v6354, 1e-16
        %v6439 = vmax.f32 %v6357, 1e-16
        %v6440 = vmax.f32 %v6360, 1e-16
        %v6441 = vmax.f32 %v6363, 1e-16
        %v6442 = vmax.f32 %v6366, 1e-16
        %v6443 = vmax.f32 %v6369, 1e-16
        %v6444 = vmax.f32 %v6372, 1e-16
        %v6445 = vmax.f32 %v6375, 1e-16
        %v6446 = vmax.f32 %v6378, 1e-16
        %v6447 = vmax.f32 %v6381, 1e-16
        %v6448 = vmax.f32 %v6384, 1e-16
        %v6449 = vrsqrt.pop %v6433
        %v6450 = vrsqrt.pop %v6434
        %v6451 = vrsqrt.pop %v6435
        %v6452 = vrsqrt.pop %v6436
        %v6453 = vrsqrt.pop %v6437
        %v6454 = vrsqrt.pop %v6438
        %v6455 = vrsqrt.pop %v6439
        %v6456 = vrsqrt.pop %v6440
        %v6457 = vrsqrt.pop %v6441
        %v6458 = vrsqrt.pop %v6442
        %v6459 = vrsqrt.pop %v6443
        %v6460 = vrsqrt.pop %v6444
        %v6461 = vrsqrt.pop %v6445
        %v6462 = vrsqrt.pop %v6446
        %v6463 = vrsqrt.pop %v6447
        %v6464 = vrsqrt.pop %v6448
        %v6465 = vmul.f32 %v6417, %v6449
        %v6466 = vmul.f32 %v6418, %v6450
        %v6467 = vmul.f32 %v6419, %v6451
        %v6468 = vmul.f32 %v6420, %v6452
        %v6469 = vmul.f32 %v6421, %v6453
        %v6470 = vmul.f32 %v6422, %v6454
        %v6471 = vmul.f32 %v6423, %v6455
        %v6472 = vmul.f32 %v6424, %v6456
        %v6473 = vmul.f32 %v6425, %v6457
        %v6474 = vmul.f32 %v6426, %v6458
        %v6475 = vmul.f32 %v6427, %v6459
        %v6476 = vmul.f32 %v6428, %v6460
        %v6477 = vmul.f32 %v6429, %v6461
        %v6478 = vmul.f32 %v6430, %v6462
        %v6479 = vmul.f32 %v6431, %v6463
        %v6480 = vmul.f32 %v6432, %v6464
        %v6481 = vld [vmem:[%s2] sm:$0xff]
        %v6482 = vld [vmem:[%s2 + $0x8] sm:$0xff]
        %v6483 = vld [vmem:[%s2 + $0x10] sm:$0xff]
        %v6484 = vld [vmem:[%s2 + $0x18] sm:$0xff]
        %v6485 = vld [vmem:[%s3] sm:$0x1]
        %v6487 = vlaneseq
        %v6488 = vshrl.u32 %v6487, 7
        %v6489 = vsub.s32 0, %v6488
        %v6490 = vrot.slane %v6485, %v6489
        %v6492 = vmul.f32 %v6465, %v6490
        %v6493 = vmul.f32 %v6466, %v6490
        %v6494 = vmul.f32 %v6467, %v6490
        %v6495 = vmul.f32 %v6468, %v6490
        %v6496 = vmul.f32 %v6469, %v6490
        %v6497 = vmul.f32 %v6470, %v6490
        %v6498 = vmul.f32 %v6471, %v6490
        %v6499 = vmul.f32 %v6472, %v6490
        %v6500 = vmul.f32 %v6473, %v6490
        %v6501 = vmul.f32 %v6474, %v6490
        %v6502 = vmul.f32 %v6475, %v6490
        %v6503 = vmul.f32 %v6476, %v6490
        %v6504 = vmul.f32 %v6477, %v6490
        %v6505 = vmul.f32 %v6478, %v6490
        %v6506 = vmul.f32 %v6479, %v6490
        %v6507 = vmul.f32 %v6480, %v6490
        %v6509 = vsel %vm6208, %v6192, 0
        %v6512 = vsel %vm6208, %v6193, 0
        %v6515 = vsel %vm6208, %v6194, 0
        %v6518 = vsel %vm6208, %v6195, 0
        %v6521 = vsel %vm6208, %v6196, 0
        %v6524 = vsel %vm6208, %v6197, 0
        %v6527 = vsel %vm6208, %v6198, 0
        %v6530 = vsel %vm6208, %v6199, 0
        %v6533 = vsel %vm6208, %v6200, 0
        %v6536 = vsel %vm6208, %v6201, 0
        %v6539 = vsel %vm6208, %v6202, 0
        %v6542 = vsel %vm6208, %v6203, 0
        %v6545 = vsel %vm6208, %v6204, 0
        %v6548 = vsel %vm6208, %v6205, 0
        %v6551 = vsel %vm6208, %v6206, 0
        %v6554 = vsel %vm6208, %v6207, 0
        %6556 = vmatprep.subr.mxu0 0.0
        %6557 = vmatpush1.msra.mxu0 %v6481
        %6558 = vmatprep.subr.mxu0 0.0
        %6559 = vmatpush1.msra.mxu0 %v6482
        %6560 = vmatprep.subr.mxu0 0.0
        %6561 = vmatpush1.msra.mxu0 %v6483
        %6562 = vmatprep.subr.mxu0 0.0
        %6563 = vmatpush1.msra.mxu0 %v6484
        %6564 = vmatprep.subr.mxu0 0.0
        %6565 = vmatpush1.msra.mxu0 0.0
        %6566 = vmatprep.subr.mxu0 0.0
        %6567 = vmatpush1.msra.mxu0 0.0
        %6568 = vmatprep.subr.mxu0 0.0
        %6569 = vmatpush1.msra.mxu0 0.0
        %6570 = vmatprep.subr.mxu0 0.0
        %6571 = vmatpush1.msra.mxu0 0.0
        %6572 = vmatprep.subr.mxu0 0.0
        %6573 = vmatpush1.msra.mxu0 0.0
        %6574 = vmatprep.subr.mxu0 0.0
        %6575 = vmatpush1.msra.mxu0 0.0
        %6576 = vmatprep.subr.mxu0 0.0
        %6577 = vmatpush1.msra.mxu0 0.0
        %6578 = vmatprep.subr.mxu0 0.0
        %6579 = vmatpush1.msra.mxu0 0.0
        %6580 = vmatprep.subr.mxu0 0.0
        %6581 = vmatpush1.msra.mxu0 0.0
        %6582 = vmatprep.subr.mxu0 0.0
        %6583 = vmatpush1.msra.mxu0 0.0
        %6584 = vmatprep.subr.mxu0 0.0
        %6585 = vmatpush1.msra.mxu0 0.0
        %6586 = vmatprep.subr.mxu0 0.0
        %6587 = vmatpush1.msra.mxu0 0.0
        %6588 = vmatprep.subr.mxu0 0.0
        %6589 = vmatpush1.msra.mxu0 0.0
        %6590 = vmatprep.subr.mxu0 0.0
        %6591 = vmatpush1.msra.mxu0 0.0
        %6592 = vmatprep.subr.mxu0 0.0
        %6593 = vmatpush1.msra.mxu0 0.0
        %6594 = vmatprep.subr.mxu0 0.0
        %6595 = vmatpush1.msra.mxu0 0.0
        %6596 = vmatprep.subr.mxu0 0.0
        %6597 = vmatpush1.msra.mxu0 0.0
        %6598 = vmatprep.subr.mxu0 0.0
        %6599 = vmatpush1.msra.mxu0 0.0
        %6600 = vmatprep.subr.mxu0 0.0
        %6601 = vmatpush1.msra.mxu0 0.0
        %6602 = vmatprep.subr.mxu0 0.0
        %6603 = vmatpush1.msra.mxu0 0.0
        %6604 = vmatprep.subr.mxu0 0.0
        %6605 = vmatpush1.msra.mxu0 0.0
        %6606 = vmatprep.subr.mxu0 0.0
        %6607 = vmatpush1.msra.mxu0 0.0
        %6608 = vmatprep.subr.mxu0 0.0
        %6609 = vmatpush1.msra.mxu0 0.0
        %6610 = vmatprep.subr.mxu0 0.0
        %6611 = vmatpush1.msra.mxu0 0.0
        %6612 = vmatprep.subr.mxu0 0.0
        %6613 = vmatpush1.msra.mxu0 0.0
        %6614 = vmatprep.subr.mxu0 0.0
        %6615 = vmatpush1.msra.mxu0 0.0
        %6616 = vmatprep.subr.mxu0 0.0
        %6617 = vmatpush1.msra.mxu0 0.0
        %6618 = vmatprep.subr.mxu0 0.0
        %6619 = vmatpush1.msra.mxu0 0.0
        %6620 = vmatprep.mubr.f32.mxu0 0.0
        %6621 = vmatmul.mubr.f32.gmra.mrb[0].mxu0 %v6509
        %v6622 = vpop.f32.mrb[0].mxu0
        %v6623 = vadd.f32 %v6492, %v6622
        %v6624 = vpop.f32.mrb[0].mxu0
        %6625 = vmatprep.mubr.f32.mxu0 0.0
        %6626 = vmatmul.mubr.f32.gmra.mrb[0].mxu0 %v6512
        %v6627 = vpop.f32.mrb[0].mxu0
        %v6628 = vadd.f32 %v6493, %v6627
        %v6629 = vpop.f32.mrb[0].mxu0
        %6630 = vmatprep.mubr.f32.mxu0 0.0
        %6631 = vmatmul.mubr.f32.gmra.mrb[0].mxu0 %v6515
        %v6632 = vpop.f32.mrb[0].mxu0
        %v6633 = vadd.f32 %v6494, %v6632
        %v6634 = vpop.f32.mrb[0].mxu0
        %6635 = vmatprep.mubr.f32.mxu0 0.0
        %6636 = vmatmul.mubr.f32.gmra.mrb[0].mxu0 %v6518
        %v6637 = vpop.f32.mrb[0].mxu0
        %v6638 = vadd.f32 %v6495, %v6637
        %v6639 = vpop.f32.mrb[0].mxu0
        %6640 = vmatprep.mubr.f32.mxu0 0.0
        %6641 = vmatmul.mubr.f32.gmra.mrb[0].mxu0 %v6521
        %v6642 = vpop.f32.mrb[0].mxu0
        %v6643 = vadd.f32 %v6496, %v6642
        %v6644 = vpop.f32.mrb[0].mxu0
        %6645 = vmatprep.mubr.f32.mxu0 0.0
        %6646 = vmatmul.mubr.f32.gmra.mrb[0].mxu0 %v6524
        %v6647 = vpop.f32.mrb[0].mxu0
        %v6648 = vadd.f32 %v6497, %v6647
        %v6649 = vpop.f32.mrb[0].mxu0
        %6650 = vmatprep.mubr.f32.mxu0 0.0
        %6651 = vmatmul.mubr.f32.gmra.mrb[0].mxu0 %v6527
        %v6652 = vpop.f32.mrb[0].mxu0
        %v6653 = vadd.f32 %v6498, %v6652
        %v6654 = vpop.f32.mrb[0].mxu0
        %6655 = vmatprep.mubr.f32.mxu0 0.0
        %6656 = vmatmul.mubr.f32.gmra.mrb[0].mxu0 %v6530
        %v6657 = vpop.f32.mrb[0].mxu0
        %v6658 = vadd.f32 %v6499, %v6657
        %v6659 = vpop.f32.mrb[0].mxu0
        %6660 = vmatprep.mubr.f32.mxu0 0.0
        %6661 = vmatmul.mubr.f32.gmra.mrb[0].mxu0 %v6533
        %v6662 = vpop.f32.mrb[0].mxu0
        %v6663 = vadd.f32 %v6500, %v6662
        %v6664 = vpop.f32.mrb[0].mxu0
        %6665 = vmatprep.mubr.f32.mxu0 0.0
        %6666 = vmatmul.mubr.f32.gmra.mrb[0].mxu0 %v6536
        %v6667 = vpop.f32.mrb[0].mxu0
        %v6668 = vadd.f32 %v6501, %v6667
        %v6669 = vpop.f32.mrb[0].mxu0
        %6670 = vmatprep.mubr.f32.mxu0 0.0
        %6671 = vmatmul.mubr.f32.gmra.mrb[0].mxu0 %v6539
        %v6672 = vpop.f32.mrb[0].mxu0
        %v6673 = vadd.f32 %v6502, %v6672
        %v6674 = vpop.f32.mrb[0].mxu0
        %6675 = vmatprep.mubr.f32.mxu0 0.0
        %6676 = vmatmul.mubr.f32.gmra.mrb[0].mxu0 %v6542
        %v6677 = vpop.f32.mrb[0].mxu0
        %v6678 = vadd.f32 %v6503, %v6677
        %v6679 = vpop.f32.mrb[0].mxu0
        %6680 = vmatprep.mubr.f32.mxu0 0.0
        %6681 = vmatmul.mubr.f32.gmra.mrb[0].mxu0 %v6545
        %v6682 = vpop.f32.mrb[0].mxu0
        %v6683 = vadd.f32 %v6504, %v6682
        %v6684 = vpop.f32.mrb[0].mxu0
        %6685 = vmatprep.mubr.f32.mxu0 0.0
        %6686 = vmatmul.mubr.f32.gmra.mrb[0].mxu0 %v6548
        %v6687 = vpop.f32.mrb[0].mxu0
        %v6688 = vadd.f32 %v6505, %v6687
        %v6689 = vpop.f32.mrb[0].mxu0
        %6690 = vmatprep.mubr.f32.mxu0 0.0
        %6691 = vmatmul.mubr.f32.gmra.mrb[0].mxu0 %v6551
        %v6692 = vpop.f32.mrb[0].mxu0
        %v6693 = vadd.f32 %v6506, %v6692
        %v6694 = vpop.f32.mrb[0].mxu0
        %6695 = vmatprep.mubr.f32.mxu0 0.0
        %6696 = vmatmul.mubr.f32.gmra.mrb[0].mxu0 %v6554
        %v6697 = vpop.f32.mrb[0].mxu0
        %v6698 = vadd.f32 %v6507, %v6697
        %v6699 = vpop.f32.mrb[0].mxu0
        %6700 = vdwg.mxu0
        %v6701 = vld [vmem:[%s4] sm:$0x1]
        %v6703 = vlaneseq
        %v6704 = vshrl.u32 %v6703, 7
        %v6705 = vsub.s32 0, %v6704
        %v6706 = vrot.slane %v6701, %v6705
        %v6708 = vadd.f32 %v6623, %v6706
        %v6709 = vadd.f32 %v6628, %v6706
        %v6710 = vadd.f32 %v6633, %v6706
        %v6711 = vadd.f32 %v6638, %v6706
        %v6712 = vadd.f32 %v6643, %v6706
        %v6713 = vadd.f32 %v6648, %v6706
        %v6714 = vadd.f32 %v6653, %v6706
        %v6715 = vadd.f32 %v6658, %v6706
        %v6716 = vadd.f32 %v6663, %v6706
        %v6717 = vadd.f32 %v6668, %v6706
        %v6718 = vadd.f32 %v6673, %v6706
        %v6719 = vadd.f32 %v6678, %v6706
        %v6720 = vadd.f32 %v6683, %v6706
        %v6721 = vadd.f32 %v6688, %v6706
        %v6722 = vadd.f32 %v6693, %v6706
        %v6723 = vadd.f32 %v6698, %v6706
        %v6724 = vmax.f32 %v6708, 0.0
        %v6725 = vmax.f32 %v6709, 0.0
        %v6726 = vmax.f32 %v6710, 0.0
        %v6727 = vmax.f32 %v6711, 0.0
        %v6728 = vmax.f32 %v6712, 0.0
        %v6729 = vmax.f32 %v6713, 0.0
        %v6730 = vmax.f32 %v6714, 0.0
        %v6731 = vmax.f32 %v6715, 0.0
        %v6732 = vmax.f32 %v6716, 0.0
        %v6733 = vmax.f32 %v6717, 0.0
        %v6734 = vmax.f32 %v6718, 0.0
        %v6735 = vmax.f32 %v6719, 0.0
        %v6736 = vmax.f32 %v6720, 0.0
        %v6737 = vmax.f32 %v6721, 0.0
        %v6738 = vmax.f32 %v6722, 0.0
        %v6739 = vmax.f32 %v6723, 0.0
        %v6740 = vld [vmem:[%s5] sm:$0xff]
        %v6741 = vld [vmem:[%s5 + $0x8] sm:$0xff]
        %v6742 = vld [vmem:[%s5 + $0x10] sm:$0xff]
        %v6743 = vld [vmem:[%s5 + $0x18] sm:$0xff]
        %v6744 = vld [vmem:[%s5 + $0x20] sm:$0xff]
        %v6745 = vld [vmem:[%s5 + $0x28] sm:$0xff]
        %v6746 = vld [vmem:[%s5 + $0x30] sm:$0x3]
        %v6747 = vld [vmem:[%s6] sm:$0x1]
        %v6749 = vlaneseq
        %v6750 = vshrl.u32 %v6749, 7
        %v6751 = vsub.s32 0, %v6750
        %v6752 = vrot.slane %v6747, %v6751
        %vm6754 = vcmask 408576
        %v6756 = vsel %vm6754, %v6724, 0
        %v6759 = vsel %vm6754, %v6725, 0
        %v6762 = vsel %vm6754, %v6726, 0
        %v6765 = vsel %vm6754, %v6727, 0
        %v6768 = vsel %vm6754, %v6728, 0
        %v6771 = vsel %vm6754, %v6729, 0
        %v6774 = vsel %vm6754, %v6730, 0
        %v6777 = vsel %vm6754, %v6731, 0
        %v6780 = vsel %vm6754, %v6732, 0
        %v6783 = vsel %vm6754, %v6733, 0
        %v6786 = vsel %vm6754, %v6734, 0
        %v6789 = vsel %vm6754, %v6735, 0
        %v6792 = vsel %vm6754, %v6736, 0
        %v6795 = vsel %vm6754, %v6737, 0
        %v6798 = vsel %vm6754, %v6738, 0
        %v6801 = vsel %vm6754, %v6739, 0
        %vm6803 = vcmask 1041408
        %v6805 = vsel %vm6803, %v6746, 0
        %6807 = vmatprep.subr.mxu0 0.0
        %6808 = vmatpush1.msra.mxu0 %v6740
        %6809 = vmatprep.subr.mxu0 0.0
        %6810 = vmatpush1.msra.mxu0 %v6741
        %6811 = vmatprep.subr.mxu0 0.0
        %6812 = vmatpush1.msra.mxu0 %v6742
        %6813 = vmatprep.subr.mxu0 0.0
        %6814 = vmatpush1.msra.mxu0 %v6743
        %6815 = vmatprep.subr.mxu0 0.0
        %6816 = vmatpush1.msra.mxu0 %v6744
        %6817 = vmatprep.subr.mxu0 0.0
        %6818 = vmatpush1.msra.mxu0 %v6745
        %6819 = vmatprep.subr.mxu0 0.0
        %6820 = vmatpush1.msra.mxu0 %v6805
        %6821 = vmatprep.subr.mxu0 0.0
        %6822 = vmatpush1.msra.mxu0 0.0
        %6823 = vmatprep.subr.mxu0 0.0
        %6824 = vmatpush1.msra.mxu0 0.0
        %6825 = vmatprep.subr.mxu0 0.0
        %6826 = vmatpush1.msra.mxu0 0.0
        %6827 = vmatprep.subr.mxu0 0.0
        %6828 = vmatpush1.msra.mxu0 0.0
        %6829 = vmatprep.subr.mxu0 0.0
        %6830 = vmatpush1.msra.mxu0 0.0
        %6831 = vmatprep.subr.mxu0 0.0
        %6832 = vmatpush1.msra.mxu0 0.0
        %6833 = vmatprep.subr.mxu0 0.0
        %6834 = vmatpush1.msra.mxu0 0.0
        %6835 = vmatprep.subr.mxu0 0.0
        %6836 = vmatpush1.msra.mxu0 0.0
        %6837 = vmatprep.subr.mxu0 0.0
        %6838 = vmatpush1.msra.mxu0 0.0
        %6839 = vmatprep.subr.mxu0 0.0
        %6840 = vmatpush1.msra.mxu0 0.0
        %6841 = vmatprep.subr.mxu0 0.0
        %6842 = vmatpush1.msra.mxu0 0.0
        %6843 = vmatprep.subr.mxu0 0.0
        %6844 = vmatpush1.msra.mxu0 0.0
        %6845 = vmatprep.subr.mxu0 0.0
        %6846 = vmatpush1.msra.mxu0 0.0
        %6847 = vmatprep.subr.mxu0 0.0
        %6848 = vmatpush1.msra.mxu0 0.0
        %6849 = vmatprep.subr.mxu0 0.0
        %6850 = vmatpush1.msra.mxu0 0.0
        %6851 = vmatprep.subr.mxu0 0.0
        %6852 = vmatpush1.msra.mxu0 0.0
        %6853 = vmatprep.subr.mxu0 0.0
        %6854 = vmatpush1.msra.mxu0 0.0
        %6855 = vmatprep.subr.mxu0 0.0
        %6856 = vmatpush1.msra.mxu0 0.0
        %6857 = vmatprep.subr.mxu0 0.0
        %6858 = vmatpush1.msra.mxu0 0.0
        %6859 = vmatprep.subr.mxu0 0.0
        %6860 = vmatpush1.msra.mxu0 0.0
        %6861 = vmatprep.subr.mxu0 0.0
        %6862 = vmatpush1.msra.mxu0 0.0
        %6863 = vmatprep.subr.mxu0 0.0
        %6864 = vmatpush1.msra.mxu0 0.0
        %6865 = vmatprep.subr.mxu0 0.0
        %6866 = vmatpush1.msra.mxu0 0.0
        %6867 = vmatprep.subr.mxu0 0.0
        %6868 = vmatpush1.msra.mxu0 0.0
        %6869 = vmatprep.subr.mxu0 0.0
        %6870 = vmatpush1.msra.mxu0 0.0
        %6871 = vmatprep.mubr.f32.mxu0 0.0
        %6872 = vmatmul.mubr.f32.gmra.mrb[0].mxu0 %v6756
        %v6873 = vpop.f32.mrb[0].mxu0
        %v6874 = vadd.f32 %v6752, %v6873
        %v6875 = vpop.f32.mrb[0].mxu0
        %6876 = vmatprep.mubr.f32.mxu0 0.0
        %6877 = vmatmul.mubr.f32.gmra.mrb[0].mxu0 %v6759
        %v6878 = vpop.f32.mrb[0].mxu0
        %v6879 = vadd.f32 %v6752, %v6878
        %v6880 = vpop.f32.mrb[0].mxu0
        %6881 = vmatprep.mubr.f32.mxu0 0.0
        %6882 = vmatmul.mubr.f32.gmra.mrb[0].mxu0 %v6762
        %v6883 = vpop.f32.mrb[0].mxu0
        %v6884 = vadd.f32 %v6752, %v6883
        %v6885 = vpop.f32.mrb[0].mxu0
        %6886 = vmatprep.mubr.f32.mxu0 0.0
        %6887 = vmatmul.mubr.f32.gmra.mrb[0].mxu0 %v6765
        %v6888 = vpop.f32.mrb[0].mxu0
        %v6889 = vadd.f32 %v6752, %v6888
        %v6890 = vpop.f32.mrb[0].mxu0
        %6891 = vmatprep.mubr.f32.mxu0 0.0
        %6892 = vmatmul.mubr.f32.gmra.mrb[0].mxu0 %v6768
        %v6893 = vpop.f32.mrb[0].mxu0
        %v6894 = vadd.f32 %v6752, %v6893
        %v6895 = vpop.f32.mrb[0].mxu0
        %6896 = vmatprep.mubr.f32.mxu0 0.0
        %6897 = vmatmul.mubr.f32.gmra.mrb[0].mxu0 %v6771
        %v6898 = vpop.f32.mrb[0].mxu0
        %v6899 = vadd.f32 %v6752, %v6898
        %v6900 = vpop.f32.mrb[0].mxu0
        %6901 = vmatprep.mubr.f32.mxu0 0.0
        %6902 = vmatmul.mubr.f32.gmra.mrb[0].mxu0 %v6774
        %v6903 = vpop.f32.mrb[0].mxu0
        %v6904 = vadd.f32 %v6752, %v6903
        %v6905 = vpop.f32.mrb[0].mxu0
        %6906 = vmatprep.mubr.f32.mxu0 0.0
        %6907 = vmatmul.mubr.f32.gmra.mrb[0].mxu0 %v6777
        %v6908 = vpop.f32.mrb[0].mxu0
        %v6909 = vadd.f32 %v6752, %v6908
        %v6910 = vpop.f32.mrb[0].mxu0
        %6911 = vmatprep.mubr.f32.mxu0 0.0
        %6912 = vmatmul.mubr.f32.gmra.mrb[0].mxu0 %v6780
        %v6913 = vpop.f32.mrb[0].mxu0
        %v6914 = vadd.f32 %v6752, %v6913
        %v6915 = vpop.f32.mrb[0].mxu0
        %6916 = vmatprep.mubr.f32.mxu0 0.0
        %6917 = vmatmul.mubr.f32.gmra.mrb[0].mxu0 %v6783
        %v6918 = vpop.f32.mrb[0].mxu0
        %v6919 = vadd.f32 %v6752, %v6918
        %v6920 = vpop.f32.mrb[0].mxu0
        %6921 = vmatprep.mubr.f32.mxu0 0.0
        %6922 = vmatmul.mubr.f32.gmra.mrb[0].mxu0 %v6786
        %v6923 = vpop.f32.mrb[0].mxu0
        %v6924 = vadd.f32 %v6752, %v6923
        %v6925 = vpop.f32.mrb[0].mxu0
        %6926 = vmatprep.mubr.f32.mxu0 0.0
        %6927 = vmatmul.mubr.f32.gmra.mrb[0].mxu0 %v6789
        %v6928 = vpop.f32.mrb[0].mxu0
        %v6929 = vadd.f32 %v6752, %v6928
        %v6930 = vpop.f32.mrb[0].mxu0
        %6931 = vmatprep.mubr.f32.mxu0 0.0
        %6932 = vmatmul.mubr.f32.gmra.mrb[0].mxu0 %v6792
        %v6933 = vpop.f32.mrb[0].mxu0
        %v6934 = vadd.f32 %v6752, %v6933
        %v6935 = vpop.f32.mrb[0].mxu0
        %6936 = vmatprep.mubr.f32.mxu0 0.0
        %6937 = vmatmul.mubr.f32.gmra.mrb[0].mxu0 %v6795
        %v6938 = vpop.f32.mrb[0].mxu0
        %v6939 = vadd.f32 %v6752, %v6938
        %v6940 = vpop.f32.mrb[0].mxu0
        %6941 = vmatprep.mubr.f32.mxu0 0.0
        %6942 = vmatmul.mubr.f32.gmra.mrb[0].mxu0 %v6798
        %v6943 = vpop.f32.mrb[0].mxu0
        %v6944 = vadd.f32 %v6752, %v6943
        %v6945 = vpop.f32.mrb[0].mxu0
        %6946 = vmatprep.mubr.f32.mxu0 0.0
        %6947 = vmatmul.mubr.f32.gmra.mrb[0].mxu0 %v6801
        %v6948 = vpop.f32.mrb[0].mxu0
        %v6949 = vadd.f32 %v6752, %v6948
        %v6950 = vpop.f32.mrb[0].mxu0
        %6951 = vdwg.mxu0
        %v6952 = vmax.f32 %v6874, 0.0
        %v6953 = vmax.f32 %v6879, 0.0
        %v6954 = vmax.f32 %v6884, 0.0
        %v6955 = vmax.f32 %v6889, 0.0
        %v6956 = vmax.f32 %v6894, 0.0
        %v6957 = vmax.f32 %v6899, 0.0
        %v6958 = vmax.f32 %v6904, 0.0
        %v6959 = vmax.f32 %v6909, 0.0
        %v6960 = vmax.f32 %v6914, 0.0
        %v6961 = vmax.f32 %v6919, 0.0
        %v6962 = vmax.f32 %v6924, 0.0
        %v6963 = vmax.f32 %v6929, 0.0
        %v6964 = vmax.f32 %v6934, 0.0
        %v6965 = vmax.f32 %v6939, 0.0
        %v6966 = vmax.f32 %v6944, 0.0
        %v6967 = vmax.f32 %v6949, 0.0
        %v6968 = vld [vmem:[%s7] sm:$0x1]
        %v6969 = vld [vmem:[#allocation2] sm:$0x1]
        %6971 = vset.pattern.permute.xlu0 0
        %6972 = vperm.xlu0 %6971, %v6969
        %v6973 = vpop.permute.xlu0 %6972
        %v6975 = vlaneseq
        %v6976 = vshrl.u32 %v6975, 7
        %v6977 = vsub.s32 0, %v6976
        %v6978 = vrot.slane %v6973, %v6977
        %vm6979 = vcmask 203776
        %v6981 = vsel %vm6979, %v6968, 0
        %v6984 = vsel %vm6979, %v6952, 0
        %v6987 = vsel %vm6979, %v6953, 0
        %v6990 = vsel %vm6979, %v6954, 0
        %v6993 = vsel %vm6979, %v6955, 0
        %v6996 = vsel %vm6979, %v6956, 0
        %v6999 = vsel %vm6979, %v6957, 0
        %v7002 = vsel %vm6979, %v6958, 0
        %v7005 = vsel %vm6979, %v6959, 0
        %v7008 = vsel %vm6979, %v6960, 0
        %v7011 = vsel %vm6979, %v6961, 0
        %v7014 = vsel %vm6979, %v6962, 0
        %v7017 = vsel %vm6979, %v6963, 0
        %v7020 = vsel %vm6979, %v6964, 0
        %v7023 = vsel %vm6979, %v6965, 0
        %v7026 = vsel %vm6979, %v6966, 0
        %v7029 = vsel %vm6979, %v6967, 0
        %7031 = vmatprep.subr.mxu0 0.0
        %7032 = vmatpush1.xpose.msra.mxu0 %v6984
        %7033 = vmatprep.subr.mxu0 0.0
        %7034 = vmatpush1.xpose.msra.mxu0 %v6987
        %7035 = vmatprep.subr.mxu0 0.0
        %7036 = vmatpush1.xpose.msra.mxu0 %v6990
        %7037 = vmatprep.subr.mxu0 0.0
        %7038 = vmatpush1.xpose.msra.mxu0 %v6993
        %7039 = vmatprep.subr.mxu0 0.0
        %7040 = vmatpush1.xpose.msra.mxu0 %v6996
        %7041 = vmatprep.subr.mxu0 0.0
        %7042 = vmatpush1.xpose.msra.mxu0 %v6999
        %7043 = vmatprep.subr.mxu0 0.0
        %7044 = vmatpush1.xpose.msra.mxu0 %v7002
        %7045 = vmatprep.subr.mxu0 0.0
        %7046 = vmatpush1.xpose.msra.mxu0 %v7005
        %7047 = vmatprep.subr.mxu0 0.0
        %7048 = vmatpush1.xpose.msra.mxu0 %v7008
        %7049 = vmatprep.subr.mxu0 0.0
        %7050 = vmatpush1.xpose.msra.mxu0 %v7011
        %7051 = vmatprep.subr.mxu0 0.0
        %7052 = vmatpush1.xpose.msra.mxu0 %v7014
        %7053 = vmatprep.subr.mxu0 0.0
        %7054 = vmatpush1.xpose.msra.mxu0 %v7017
        %7055 = vmatprep.subr.mxu0 0.0
        %7056 = vmatpush1.xpose.msra.mxu0 %v7020
        %7057 = vmatprep.subr.mxu0 0.0
        %7058 = vmatpush1.xpose.msra.mxu0 %v7023
        %7059 = vmatprep.subr.mxu0 0.0
        %7060 = vmatpush1.xpose.msra.mxu0 %v7026
        %7061 = vmatprep.subr.mxu0 0.0
        %7062 = vmatpush1.xpose.msra.mxu0 %v7029
        %7063 = vmatprep.subr.mxu0 0.0
        %7064 = vmatpush1.xpose.msra.mxu0 0.0
        %7065 = vmatprep.subr.mxu0 0.0
        %7066 = vmatpush1.xpose.msra.mxu0 0.0
        %7067 = vmatprep.subr.mxu0 0.0
        %7068 = vmatpush1.xpose.msra.mxu0 0.0
        %7069 = vmatprep.subr.mxu0 0.0
        %7070 = vmatpush1.xpose.msra.mxu0 0.0
        %7071 = vmatprep.subr.mxu0 0.0
        %7072 = vmatpush1.xpose.msra.mxu0 0.0
        %7073 = vmatprep.subr.mxu0 0.0
        %7074 = vmatpush1.xpose.msra.mxu0 0.0
        %7075 = vmatprep.subr.mxu0 0.0
        %7076 = vmatpush1.xpose.msra.mxu0 0.0
        %7077 = vmatprep.subr.mxu0 0.0
        %7078 = vmatpush1.xpose.msra.mxu0 0.0
        %7079 = vmatprep.subr.mxu0 0.0
        %7080 = vmatpush1.xpose.msra.mxu0 0.0
        %7081 = vmatprep.subr.mxu0 0.0
        %7082 = vmatpush1.xpose.msra.mxu0 0.0
        %7083 = vmatprep.subr.mxu0 0.0
        %7084 = vmatpush1.xpose.msra.mxu0 0.0
        %7085 = vmatprep.subr.mxu0 0.0
        %7086 = vmatpush1.xpose.msra.mxu0 0.0
        %7087 = vmatprep.subr.mxu0 0.0
        %7088 = vmatpush1.xpose.msra.mxu0 0.0
        %7089 = vmatprep.subr.mxu0 0.0
        %7090 = vmatpush1.xpose.msra.mxu0 0.0
        %7091 = vmatprep.subr.mxu0 0.0
        %7092 = vmatpush1.xpose.msra.mxu0 0.0
        %7093 = vmatprep.subr.mxu0 0.0
        %7094 = vmatpush1.xpose.msra.mxu0 0.0
        %7095 = vmatprep.mubr.f32.mxu0 0.0
        %7096 = vmatmul.mubr.f32.gmra.mrb[0].mxu0 %v6981
        %v7097 = vpop.f32.mrb[0].mxu0
        %v7098 = vadd.f32 %v6978, %v7097
        %v7099 = vpop.f32.mrb[0].mxu0
        %7100 = vdwg.mxu0
        %7101 = vst [vmem:[%s596] sm:$0x1] %v7098
        %s7102 = sand.u32 %s232, 1
        %s7103 = scalar_lea.sflag [#allocation5], %s7102
        %s7104 = sand.u32 %s232, 1
        %s7105 = scalar_lea.vmem [#allocation4], %s7104
        // Predicated region
        $region109: #{tpu_custom_call.1} parent=103 // pred_check
          %p7106 = pneg %p242
        $region110: #{tpu_custom_call.1} parent=103 // pred_check_branch
          %7108 = sbr.rel (%p7106) target = $region112
        $region111: #{tpu_custom_call.1} parent=103 // pred_region
          %s7110 = ssub.s32 16, 16
          %7111 = vsyncadd %s7103, %s7110
          %s7112 = smul.addr %s25, 16
          %s7113 = scalar_lea.hbm %s9, %s7112
          %s7115 = sshll.u32 %s7105, 4
          %s7116 = int_to_ptr.vmem [resolvable:$true] %s7115
          %7118 = dma.vmem_to_hbm [thread:$0]  %s7116, 16, %s7113, %s7103
        $region112: #{tpu_custom_call.1} parent=103 // pred_fallthru
          _
      $region104: #{tpu_custom_call.1} parent=5 // pred_fallthru
        _
      %p7119 = scmp.le.s32.totalorder 2, %s20
      // Predicated region
      $region113: #{tpu_custom_call.1} parent=5 // pred_check
        %p7120 = pneg %p7119
      $region114: #{tpu_custom_call.1} parent=5 // pred_check_branch
        %7122 = sbr.rel (%p7120) target = $region116
      $region115: #{tpu_custom_call.1} parent=5 // pred_region
        %s7123 = ssub.s32 %s20, 2
        // Predicated region
        $region117: #{tpu_custom_call.1} parent=115 // pred_check
          %p7124 = pneg %p248
        $region118: #{tpu_custom_call.1} parent=115 // pred_check_branch
          %7126 = sbr.rel (%p7124) target = $region120
        $region119: #{tpu_custom_call.1} parent=115 // pred_region
          %s7127 = sand.u32 %s233, 1
          %s7128 = scalar_lea.sflag [#allocation5], %s7127
          %s7129 = sand.u32 %s233, 1
          %s7130 = scalar_lea.vmem [#allocation4], %s7129
          %7131 = dma.done %s7128, 16
        $region120: #{tpu_custom_call.1} parent=115 // pred_fallthru
          _
      $region116: #{tpu_custom_call.1} parent=5 // pred_fallthru
        _
    $region6: #{tpu_custom_call.1} parent=1 // loop_footer
      %s24 = sadd.s32 1, %s20
    $region7: #{tpu_custom_call.1} parent=1 // loop_footer_branch
      %19 = sbr.rel target = $region3
    $region8: #{tpu_custom_call.1} parent=1 // loop_exit
      _
    %7132 = vsyncpa [#allocation5], 1
    %s7133 = scalar_lea.sflag [#allocation5], 1
    %7134 = vsyncpa %s7133, 1

</llo_original>
